<compile_context>
chip_gen: v7x
topology: tpu7x:2x2x1
jax: 0.10.0
libtpu: 0.0.40
codegen_flags: <defaults>
</compile_context>

<pallas_src>
import functools

import jax
import jax.numpy as jnp
from jax.experimental import pallas as pl
from jax.experimental.pallas import tpu as pltpu

LANE = 128
_VMEM_LIMIT = 32 * 1024 * 1024  # fits the 16/32 MiB default scoped VMEM on all gens


def _pad_to(n, m=LANE):
    return ((n + m - 1) // m) * m


# ------------------------------------------------------------------ kernels --

def _fused_matmul_kernel(*refs, relu_mid, relu_out, has_res):
    """acc = A@B (K-tiled);  y = acc*s1+t1 ; [relu] ; y*s2+t2 ; [+res] ; [relu]."""
    if has_res:
        a_ref, b_ref, s1_ref, t1_ref, s2_ref, t2_ref, res_ref, o_ref, acc_ref = refs
    else:
        a_ref, b_ref, s1_ref, t1_ref, s2_ref, t2_ref, o_ref, acc_ref = refs
        res_ref = None
    k = pl.program_id(2)

    @pl.when(k == 0)
    def _():
        acc_ref[...] = jnp.zeros_like(acc_ref)

    acc_ref[...] += jnp.dot(a_ref[...], b_ref[...],
                            preferred_element_type=jnp.float32)

    @pl.when(k == pl.num_programs(2) - 1)
    def _():
        y = acc_ref[...] * s1_ref[...] + t1_ref[...]
        if relu_mid:
            y = jnp.maximum(y, 0.0)
        y = y * s2_ref[...] + t2_ref[...]
        if res_ref is not None:
            y = y + res_ref[...].astype(jnp.float32)
        if relu_out:
            y = jnp.maximum(y, 0.0)
        o_ref[...] = y.astype(o_ref.dtype)


def fused_matmul(a, b, *, scale1=None, shift1=None, relu_mid=False,
                 scale2=None, shift2=None, residual=None, relu_out=False,
                 out_dtype=jnp.bfloat16, tm=256, tn=128, tk=128):
    """(M,K)@(K,N) with fused BN/bias/ReLU/residual epilogue, M/N/K tiled."""
    M, K = a.shape
    Kb, N = b.shape
    assert K == Kb, (K, Kb)

    def pick(t, d):
        t = min(t, d)
        return t if d % t == 0 else d

    tm, tn, tk = pick(tm, M), pick(tn, N), pick(tk, K)
    nm, nn, nk = M // tm, N // tn, K // tk

    def vec(v, fill):
        if v is None:
            return jnp.full((1, N), fill, jnp.float32)
        return jnp.asarray(v, jnp.float32).reshape(1, N)

    s1, t1 = vec(scale1, 1.0), vec(shift1, 0.0)
    s2, t2 = vec(scale2, 1.0), vec(shift2, 0.0)

    args = [a.astype(jnp.bfloat16), b.astype(jnp.bfloat16), s1, t1, s2, t2]
    in_specs = [
        pl.BlockSpec((tm, tk), lambda i, j, k: (i, k)),
        pl.BlockSpec((tk, tn), lambda i, j, k: (k, j)),
        pl.BlockSpec((1, tn), lambda i, j, k: (0, j)),
        pl.BlockSpec((1, tn), lambda i, j, k: (0, j)),
        pl.BlockSpec((1, tn), lambda i, j, k: (0, j)),
        pl.BlockSpec((1, tn), lambda i, j, k: (0, j)),
    ]
    has_res = residual is not None
    if has_res:
        args.append(residual.astype(jnp.bfloat16))
        in_specs.append(pl.BlockSpec((tm, tn), lambda i, j, k: (i, j)))

    kernel = functools.partial(_fused_matmul_kernel, relu_mid=relu_mid,
                               relu_out=relu_out, has_res=has_res)
    return pl.pallas_call(
        kernel,
        out_shape=jax.ShapeDtypeStruct((M, N), out_dtype),
        grid=(nm, nn, nk),
        in_specs=in_specs,
        out_specs=pl.BlockSpec((tm, tn), lambda i, j, k: (i, j)),
        scratch_shapes=[pltpu.VMEM((tm, tn), jnp.float32)],
        compiler_params=pltpu.CompilerParams(
            dimension_semantics=("parallel", "parallel", "arbitrary"),
            vmem_limit_bytes=_VMEM_LIMIT),
    )(*args)


def _agg_matmul_kernel(a_ref, x_ref, w_ref, b_ref, s_ref, t_ref, o_ref, *, relu_mid):
    """y = A @ (X @ W) + b ; [relu] ; y*s + t   (fused GCN layer / pool+classify)."""
    xw = jnp.dot(x_ref[...], w_ref[...], preferred_element_type=jnp.float32)
    y = jnp.dot(a_ref[...], xw, preferred_element_type=jnp.float32)
    y = y + b_ref[...]
    if relu_mid:
        y = jnp.maximum(y, 0.0)
    y = y * s_ref[...] + t_ref[...]
    o_ref[...] = y.astype(o_ref.dtype)


def fused_agg_matmul(a, x, w, *, bias=None, scale=None, shift=None,
                     relu_mid=False, out_dtype=jnp.bfloat16, tn=128):
    """A:(R,Nn) f32  X:(Nn,F)  W:(F,C)  ->  (R,C), tiled over the output features."""
    R, Nn = a.shape
    Nx, F = x.shape
    Fw, C = w.shape
    assert Nn == Nx and F == Fw
    tn = min(tn, C)
    if C % tn:
        tn = C

    def vec(v, fill):
        if v is None:
            return jnp.full((1, C), fill, jnp.float32)
        return jnp.asarray(v, jnp.float32).reshape(1, C)

    b, s, t = vec(bias, 0.0), vec(scale, 1.0), vec(shift, 0.0)
    return pl.pallas_call(
        functools.partial(_agg_matmul_kernel, relu_mid=relu_mid),
        out_shape=jax.ShapeDtypeStruct((R, C), out_dtype),
        grid=(C // tn,),
        in_specs=[
            pl.BlockSpec((R, Nn), lambda j: (0, 0)),
            pl.BlockSpec((Nn, F), lambda j: (0, 0)),
            pl.BlockSpec((F, tn), lambda j: (0, j)),
            pl.BlockSpec((1, tn), lambda j: (0, j)),
            pl.BlockSpec((1, tn), lambda j: (0, j)),
            pl.BlockSpec((1, tn), lambda j: (0, j)),
        ],
        out_specs=pl.BlockSpec((R, tn), lambda j: (0, j)),
        compiler_params=pltpu.CompilerParams(
            dimension_semantics=("parallel",),
            vmem_limit_bytes=_VMEM_LIMIT),
    )(jnp.asarray(a, jnp.float32), x.astype(jnp.bfloat16),
      w.astype(jnp.bfloat16), b, s, t)


def _gap_kernel(x_ref, o_ref, *, n_images, hw):
    """Global average pool over HW for each image (in-kernel reduction)."""
    inv = 1.0 / hw
    for i in range(n_images):                       # static unrolled, hw-aligned slices
        blk = x_ref[i * hw:(i + 1) * hw, :].astype(jnp.float32)
        o_ref[i:i + 1, :] = (jnp.sum(blk, axis=0, keepdims=True) * inv).astype(o_ref.dtype)


def global_avg_pool(h, n_images, hw, tf=128):
    M, F = h.shape
    assert M == n_images * hw
    tf = min(tf, F)
    if F % tf:
        tf = F
    return pl.pallas_call(
        functools.partial(_gap_kernel, n_images=n_images, hw=hw),
        out_shape=jax.ShapeDtypeStruct((n_images, F), h.dtype),
        grid=(F // tf,),
        in_specs=[pl.BlockSpec((M, tf), lambda j: (0, j))],
        out_specs=pl.BlockSpec((n_images, tf), lambda j: (0, j)),
        compiler_params=pltpu.CompilerParams(
            dimension_semantics=("parallel",),
            vmem_limit_bytes=_VMEM_LIMIT),
    )(h)


# --------------------------------------------------------------------- glue --

def im2col_3x3(x_nhwc, k_pad):
    """(N,H,W,C) -> (N*H*W, k_pad) patches for a 3x3 / stride 1 / pad 1 conv.

    Column ordering is tap-major: col = tap*C + c (matches conv weight layout).
    """
    N, H, W, C = x_nhwc.shape
    xp = jnp.pad(x_nhwc, ((0, 0), (1, 1), (1, 1), (0, 0)))
    taps = [xp[:, i:i + H, j:j + W, :] for i in range(3) for j in range(3)]
    cols = jnp.stack(taps, axis=3).reshape(N * H * W, 9 * C)
    if k_pad > 9 * C:
        cols = jnp.pad(cols, ((0, 0), (0, k_pad - 9 * C)))
    return cols


def build_norm_adj(edge_index, num_nodes):
    """GCN normalized adjacency D^{-1/2} (A + I) D^{-1/2} (dense, f32)."""
    A = jnp.zeros((num_nodes, num_nodes), jnp.float32)
    A = A.at[edge_index[0], edge_index[1]].set(1.0)
    A = A + jnp.eye(num_nodes, dtype=jnp.float32)
    deg = A.sum(axis=1)
    dinv = 1.0 / jnp.sqrt(deg)
    return A * dinv[:, None] * dinv[None, :]


# ------------------------------------------------------------ model pieces --

def resnet_features(x_nchw, p):
    """Simplified ResNet feature extractor (classify head = Identity)."""
    N, C, H, W = x_nchw.shape
    x = jnp.transpose(x_nchw, (0, 2, 3, 1)).astype(jnp.bfloat16)     # NHWC, bf16
    mid_p = p["w1"].shape[1]

    # stem: 3x3 conv + folded BN + ReLU  (single fused, tiled matmul)
    cols = im2col_3x3(x, k_pad=p["w_stem"].shape[0])
    h = fused_matmul(cols, p["w_stem"],
                     scale1=p["s_stem"], shift1=p["t_stem"], relu_out=True)

    # bottleneck residual block: 1x1 -> 3x3 -> 1x1, BN folded, residual fused
    idn = h
    y = fused_matmul(h, p["w1"], scale1=p["s1"], shift1=p["t1"], relu_out=True)
    cols2 = im2col_3x3(y.reshape(N, H, W, mid_p), k_pad=p["w2"].shape[0])
    y = fused_matmul(cols2, p["w2"], scale1=p["s2"], shift1=p["t2"], relu_out=True)
    h = fused_matmul(y, p["w3"], scale1=p["s3"], shift1=p["t3"],
                     residual=idn, relu_out=True)

    # global average pool -> (N, feat_pad)
    return global_avg_pool(h, N, H * W)


def gcn_layer(x, a_hat, w, b, s, t):
    """GCNConv -> ReLU -> BatchNorm(eval) -> Dropout(eval=identity), one kernel."""
    return fused_agg_matmul(a_hat, x, w, bias=b, scale=s, shift=t, relu_mid=True)


def resnet_gcn_forward(x, edge_index, batch, params, num_graphs, num_classes):
    num_nodes = x.shape[0]
    feats = resnet_features(x, params)                    # (nodes, feat_pad) bf16
    a_hat = build_norm_adj(edge_index, num_nodes)         # (nodes, nodes) f32

    h = gcn_layer(feats, a_hat, params["gcn1_w"], params["gcn1_b"],
                  params["s_g1"], params["t_g1"])
    h = gcn_layer(h, a_hat, params["gcn2_w"], params["gcn2_b"],
                  params["s_g2"], params["t_g2"])
    h = gcn_layer(h, a_hat, params["gcn3_w"], params["gcn3_b"],
                  params["s_g3"], params["t_g3"])

    # global_mean_pool + Linear classifier fused:  logits = P @ (h @ Wc) + bc
    onehot = jax.nn.one_hot(batch, num_graphs, dtype=jnp.float32)     # (nodes, G)
    pool = (onehot / jnp.maximum(onehot.sum(axis=0), 1.0)).T          # (G, nodes)
    logits = fused_agg_matmul(pool, h, params["cls_w"], bias=params["cls_b"],
                              relu_mid=False, out_dtype=jnp.float32)
    logits = logits[:, :num_classes]                                  # drop lane pad
    return jnp.squeeze(logits)    # matches reference `x.squeeze()`


# --------------------------------------------------------------- parameters --

def init_params(key, in_ch, feat_dim, hidden, num_classes):
    """All weights stored lane-padded (multiples of 128) and pre-transposed (in,out);
    BatchNorm folded into per-channel (scale, shift) at init."""
    mid = feat_dim // 2
    feat_p, mid_p = _pad_to(feat_dim), _pad_to(mid)
    hid_p, cls_p = _pad_to(hidden), _pad_to(num_classes)
    k_stem, k_stem_p = in_ch * 9, _pad_to(in_ch * 9)

    ks = iter(jax.random.split(key, 64))

    def nrm(shape, scale=0.1):
        return scale * jax.random.normal(next(ks), shape, jnp.float32)

    def pad_vec(v, p, fill=0.0):
        out = jnp.full((p,), fill, jnp.float32)
        return out.at[:v.shape[0]].set(v)

    def dense(r_in, r_out, p_in, p_out):
        w = jnp.zeros((p_in, p_out), jnp.float32)
        w = w.at[:r_in, :r_out].set(nrm((r_in, r_out)))
        return w.astype(jnp.bfloat16)

    def conv3x3(cin_r, cin_p, cout_r, cout_p):
        w = jnp.zeros((9, cin_p, cout_p), jnp.float32)
        w = w.at[:, :cin_r, :cout_r].set(nrm((9, cin_r, cout_r)))
        return w.reshape(9 * cin_p, cout_p).astype(jnp.bfloat16)

    def bn_fold(c_real, c_pad, conv_bias=None, eps=1e-5):
        gamma = 1.0 + nrm((c_real,), 0.05)
        beta = nrm((c_real,), 0.05)
        mean = nrm((c_real,), 0.05)
        var = jnp.ones((c_real,), jnp.float32)
        s = gamma * jax.lax.rsqrt(var + eps)
        t = beta - mean * s
        if conv_bias is not None:
            t = t + conv_bias * s
        return pad_vec(s, c_pad, 1.0), pad_vec(t, c_pad, 0.0)

    p = {}
    # --- ResNet stand-in ---
    w_stem = conv3x3(in_ch, in_ch, feat_dim, feat_p)                  # (9*in_ch, feat_p)
    p["w_stem"] = jnp.zeros((k_stem_p, feat_p), jnp.bfloat16).at[:k_stem].set(w_stem)
    p["s_stem"], p["t_stem"] = bn_fold(feat_dim, feat_p, conv_bias=nrm((feat_dim,)))

    p["w1"] = dense(feat_dim, mid, feat_p, mid_p)
    p["s1"], p["t1"] = bn_fold(mid, mid_p, conv_bias=nrm((mid,)))
    p["w2"] = conv3x3(mid, mid_p, mid, mid_p)
    p["s2"], p["t2"] = bn_fold(mid, mid_p, conv_bias=nrm((mid,)))
    p["w3"] = dense(mid, feat_dim, mid_p, feat_p)
    p["s3"], p["t3"] = bn_fold(feat_dim, feat_p, conv_bias=nrm((feat_dim,)))

    # --- GCN layers (weights pre-transposed to (in, out)) ---
    p["gcn1_w"] = dense(feat_dim, hidden, feat_p, hid_p)
    p["gcn1_b"] = pad_vec(nrm((hidden,)), hid_p)
    p["s_g1"], p["t_g1"] = bn_fold(hidden, hid_p)
    p["gcn2_w"] = dense(hidden, hidden, hid_p, hid_p)
    p["gcn2_b"] = pad_vec(nrm((hidden,)), hid_p)
    p["s_g2"], p["t_g2"] = bn_fold(hidden, hid_p)
    p["gcn3_w"] = dense(hidden, hidden, hid_p, hid_p)
    p["gcn3_b"] = pad_vec(nrm((hidden,)), hid_p)
    p["s_g3"], p["t_g3"] = bn_fold(hidden, hid_p)

    # --- classifier ---
    p["cls_w"] = dense(hidden, num_classes, hid_p, cls_p)
    p["cls_b"] = pad_vec(nrm((num_classes,)), cls_p)
    return p


# --------------------------------------------------------------------- main --

if __name__ == "__main__":
    num_nodes, in_ch, H, W = 8, 4, 16, 16
    feat_dim, hidden, num_classes, num_graphs = 64, 32, 10, 2

    key = jax.random.PRNGKey(0)
    kp, kx = jax.random.split(key)
    params = init_params(kp, in_ch, feat_dim, hidden, num_classes)
    x = jax.random.normal(kx, (num_nodes, in_ch, H, W), jnp.float32)
    edge_index = jnp.array(
        [[0, 1, 1, 2, 2, 3, 0, 3, 4, 5, 5, 6, 6, 7, 4, 7],
         [1, 0, 2, 1, 3, 2, 3, 0, 5, 4, 6, 5, 7, 6, 7, 4]], dtype=jnp.int32)
    batch = jnp.array([0, 0, 0, 0, 1, 1, 1, 1], dtype=jnp.int32)

    fwd = jax.jit(functools.partial(resnet_gcn_forward,
                                    num_graphs=num_graphs, num_classes=num_classes))
    out = jax.block_until_ready(fwd(x, edge_index, batch, params))

    assert out.shape == (num_graphs, num_classes), out.shape
    assert bool(jnp.all(jnp.isfinite(out)))
    print("KERNEL_OK")
</pallas_src>

<mosaic_0001>
module attributes {stable_mosaic.version = 11 : i64} {
  func.func @_fused_matmul_kernel(%arg0: i32, %arg1: i32, %arg2: i32, %arg3: memref<256x128xbf16, #tpu.memory_space<vmem>>, %arg4: memref<128x128xbf16, #tpu.memory_space<vmem>>, %arg5: memref<1x128xf32, #tpu.memory_space<vmem>>, %arg6: memref<1x128xf32, #tpu.memory_space<vmem>>, %arg7: memref<1x128xf32, #tpu.memory_space<vmem>>, %arg8: memref<1x128xf32, #tpu.memory_space<vmem>>, %arg9: memref<256x128xbf16, #tpu.memory_space<vmem>>, %arg10: memref<256x128xf32, #tpu.memory_space<vmem>>) attributes {dimension_semantics = [#tpu.dimension_semantics<parallel>, #tpu.dimension_semantics<parallel>, #tpu.dimension_semantics<arbitrary>], iteration_bounds = array<i64: 8, 1, 1>, scalar_prefetch = 0 : i64, scratch_operands = 1 : i64, tpu.core_type = #tpu.core_type<tc>, window_params = [{transform_indices = @transform_0, window_bounds = array<i64: 256, 128>}, {transform_indices = @transform_1, window_bounds = array<i64: 128, 128>}, {transform_indices = @transform_2, window_bounds = array<i64: 1, 128>}, {transform_indices = @transform_3, window_bounds = array<i64: 1, 128>}, {transform_indices = @transform_4, window_bounds = array<i64: 1, 128>}, {transform_indices = @transform_5, window_bounds = array<i64: 1, 128>}, {transform_indices = @transform_6, window_bounds = array<i64: 256, 128>}]} {
    %c0_i32 = arith.constant 0 : i32
    %0 = arith.cmpi eq, %arg2, %c0_i32 : i32
    %1 = arith.extui %0 : i1 to i32
    %c0_i32_0 = arith.constant 0 : i32
    %2 = arith.cmpi ne, %1, %c0_i32_0 : i32
    scf.if %2 {
      %cst_10 = arith.constant 0.000000e+00 : f32
      %12 = vector.broadcast %cst_10 : f32 to vector<256x128xf32>
      %c0_11 = arith.constant 0 : index
      %c0_12 = arith.constant 0 : index
      %13 = vector.load %arg10[%c0_11, %c0_12] : memref<256x128xf32, #tpu.memory_space<vmem>>, vector<256x128xf32>
      tpu.vector_store %arg10[%c0_11, %c0_12], %12 {strides = array<i32>} : memref<256x128xf32, #tpu.memory_space<vmem>>, vector<256x128xf32>,
    } else {
    }
    %c0 = arith.constant 0 : index
    %c0_1 = arith.constant 0 : index
    %3 = vector.load %arg10[%c0, %c0_1] : memref<256x128xf32, #tpu.memory_space<vmem>>, vector<256x128xf32>
    %c0_2 = arith.constant 0 : index
    %c0_3 = arith.constant 0 : index
    %4 = vector.load %arg3[%c0_2, %c0_3] : memref<256x128xbf16, #tpu.memory_space<vmem>>, vector<256x128xbf16>
    %c0_4 = arith.constant 0 : index
    %c0_5 = arith.constant 0 : index
    %5 = vector.load %arg4[%c0_4, %c0_5] : memref<128x128xbf16, #tpu.memory_space<vmem>>, vector<128x128xbf16>
    %cst = arith.constant dense<0.000000e+00> : vector<256x128xf32>
    %6 = tpu.matmul %4, %5, %cst {dimension_numbers = #tpu.dot_dimension_numbers<[1], [0], [0], [1], [0, 0, 1, 1], [], []>} : vector<256x128xbf16>, vector<128x128xbf16>, vector<256x128xf32> -> vector<256x128xf32>
    %7 = arith.addf %3, %6 : vector<256x128xf32>
    %c0_6 = arith.constant 0 : index
    %c0_7 = arith.constant 0 : index
    %8 = vector.load %arg10[%c0_6, %c0_7] : memref<256x128xf32, #tpu.memory_space<vmem>>, vector<256x128xf32>
    tpu.vector_store %arg10[%c0_6, %c0_7], %7 {strides = array<i32>} : memref<256x128xf32, #tpu.memory_space<vmem>>, vector<256x128xf32>,
    %c0_i32_8 = arith.constant 0 : i32
    %9 = arith.cmpi eq, %arg2, %c0_i32_8 : i32
    %10 = arith.extui %9 : i1 to i32
    %c0_i32_9 = arith.constant 0 : i32
    %11 = arith.cmpi ne, %10, %c0_i32_9 : i32
    scf.if %11 {
      %c0_10 = arith.constant 0 : index
      %c0_11 = arith.constant 0 : index
      %12 = vector.load %arg10[%c0_10, %c0_11] : memref<256x128xf32, #tpu.memory_space<vmem>>, vector<256x128xf32>
      %c0_12 = arith.constant 0 : index
      %c0_13 = arith.constant 0 : index
      %13 = vector.load %arg5[%c0_12, %c0_13] : memref<1x128xf32, #tpu.memory_space<vmem>>, vector<1x128xf32>
      %14 = vector.broadcast %13 : vector<1x128xf32> to vector<256x128xf32>
      %15 = arith.mulf %12, %14 : vector<256x128xf32>
      %c0_14 = arith.constant 0 : index
      %c0_15 = arith.constant 0 : index
      %16 = vector.load %arg6[%c0_14, %c0_15] : memref<1x128xf32, #tpu.memory_space<vmem>>, vector<1x128xf32>
      %17 = vector.broadcast %16 : vector<1x128xf32> to vector<256x128xf32>
      %18 = arith.addf %15, %17 : vector<256x128xf32>
      %c0_16 = arith.constant 0 : index
      %c0_17 = arith.constant 0 : index
      %19 = vector.load %arg7[%c0_16, %c0_17] : memref<1x128xf32, #tpu.memory_space<vmem>>, vector<1x128xf32>
      %20 = vector.broadcast %19 : vector<1x128xf32> to vector<256x128xf32>
      %21 = arith.mulf %18, %20 : vector<256x128xf32>
      %c0_18 = arith.constant 0 : index
      %c0_19 = arith.constant 0 : index
      %22 = vector.load %arg8[%c0_18, %c0_19] : memref<1x128xf32, #tpu.memory_space<vmem>>, vector<1x128xf32>
      %23 = vector.broadcast %22 : vector<1x128xf32> to vector<256x128xf32>
      %24 = arith.addf %21, %23 : vector<256x128xf32>
      %cst_20 = arith.constant 0.000000e+00 : f32
      %25 = vector.broadcast %cst_20 : f32 to vector<256x128xf32>
      %26 = arith.maximumf %24, %25 : vector<256x128xf32>
      %27 = arith.truncf %26 : vector<256x128xf32> to vector<256x128xbf16>
      %c0_21 = arith.constant 0 : index
      %c0_22 = arith.constant 0 : index
      %28 = vector.load %arg9[%c0_21, %c0_22] : memref<256x128xbf16, #tpu.memory_space<vmem>>, vector<256x128xbf16>
      tpu.vector_store %arg9[%c0_21, %c0_22], %27 {strides = array<i32>} : memref<256x128xbf16, #tpu.memory_space<vmem>>, vector<256x128xbf16>,
    } else {
    }
    return
  }
  func.func @transform_0(%arg0: i32, %arg1: i32, %arg2: i32) -> (i32, i32) {
    %c0_i32 = arith.constant 0 : i32
    return %arg0, %arg2 : i32, i32
  }
  func.func @transform_1(%arg0: i32, %arg1: i32, %arg2: i32) -> (i32, i32) {
    %c0_i32 = arith.constant 0 : i32
    return %arg2, %arg1 : i32, i32
  }
  func.func @transform_2(%arg0: i32, %arg1: i32, %arg2: i32) -> (i32, i32) {
    %c0_i32 = arith.constant 0 : i32
    %c0_i32_0 = arith.constant 0 : i32
    return %c0_i32, %arg1 : i32, i32
  }
  func.func @transform_3(%arg0: i32, %arg1: i32, %arg2: i32) -> (i32, i32) {
    %c0_i32 = arith.constant 0 : i32
    %c0_i32_0 = arith.constant 0 : i32
    return %c0_i32, %arg1 : i32, i32
  }
  func.func @transform_4(%arg0: i32, %arg1: i32, %arg2: i32) -> (i32, i32) {
    %c0_i32 = arith.constant 0 : i32
    %c0_i32_0 = arith.constant 0 : i32
    return %c0_i32, %arg1 : i32, i32
  }
  func.func @transform_5(%arg0: i32, %arg1: i32, %arg2: i32) -> (i32, i32) {
    %c0_i32 = arith.constant 0 : i32
    %c0_i32_0 = arith.constant 0 : i32
    return %c0_i32, %arg1 : i32, i32
  }
  func.func @transform_6(%arg0: i32, %arg1: i32, %arg2: i32) -> (i32, i32) {
    %c0_i32 = arith.constant 0 : i32
    return %arg0, %arg1 : i32, i32
  }
}

module attributes {stable_mosaic.version = 11 : i64} {
  func.func @_fused_matmul_kernel(%arg0: i32, %arg1: i32, %arg2: i32, %arg3: memref<256x128xbf16, #tpu.memory_space<vmem>>, %arg4: memref<128x128xbf16, #tpu.memory_space<vmem>>, %arg5: memref<1x128xf32, #tpu.memory_space<vmem>>, %arg6: memref<1x128xf32, #tpu.memory_space<vmem>>, %arg7: memref<1x128xf32, #tpu.memory_space<vmem>>, %arg8: memref<1x128xf32, #tpu.memory_space<vmem>>, %arg9: memref<256x128xbf16, #tpu.memory_space<vmem>>, %arg10: memref<256x128xf32, #tpu.memory_space<vmem>>) attributes {dimension_semantics = [#tpu.dimension_semantics<parallel>, #tpu.dimension_semantics<parallel>, #tpu.dimension_semantics<arbitrary>], iteration_bounds = array<i64: 8, 1, 9>, scalar_prefetch = 0 : i64, scratch_operands = 1 : i64, tpu.core_type = #tpu.core_type<tc>, window_params = [{transform_indices = @transform_0, window_bounds = array<i64: 256, 128>}, {transform_indices = @transform_1, window_bounds = array<i64: 128, 128>}, {transform_indices = @transform_2, window_bounds = array<i64: 1, 128>}, {transform_indices = @transform_3, window_bounds = array<i64: 1, 128>}, {transform_indices = @transform_4, window_bounds = array<i64: 1, 128>}, {transform_indices = @transform_5, window_bounds = array<i64: 1, 128>}, {transform_indices = @transform_6, window_bounds = array<i64: 256, 128>}]} {
    %c0_i32 = arith.constant 0 : i32
    %0 = arith.cmpi eq, %arg2, %c0_i32 : i32
    %1 = arith.extui %0 : i1 to i32
    %c0_i32_0 = arith.constant 0 : i32
    %2 = arith.cmpi ne, %1, %c0_i32_0 : i32
    scf.if %2 {
      %cst_9 = arith.constant 0.000000e+00 : f32
      %12 = vector.broadcast %cst_9 : f32 to vector<256x128xf32>
      %c0_10 = arith.constant 0 : index
      %c0_11 = arith.constant 0 : index
      %13 = vector.load %arg10[%c0_10, %c0_11] : memref<256x128xf32, #tpu.memory_space<vmem>>, vector<256x128xf32>
      tpu.vector_store %arg10[%c0_10, %c0_11], %12 {strides = array<i32>} : memref<256x128xf32, #tpu.memory_space<vmem>>, vector<256x128xf32>,
    } else {
    }
    %c0 = arith.constant 0 : index
    %c0_1 = arith.constant 0 : index
    %3 = vector.load %arg10[%c0, %c0_1] : memref<256x128xf32, #tpu.memory_space<vmem>>, vector<256x128xf32>
    %c0_2 = arith.constant 0 : index
    %c0_3 = arith.constant 0 : index
    %4 = vector.load %arg3[%c0_2, %c0_3] : memref<256x128xbf16, #tpu.memory_space<vmem>>, vector<256x128xbf16>
    %c0_4 = arith.constant 0 : index
    %c0_5 = arith.constant 0 : index
    %5 = vector.load %arg4[%c0_4, %c0_5] : memref<128x128xbf16, #tpu.memory_space<vmem>>, vector<128x128xbf16>
    %cst = arith.constant dense<0.000000e+00> : vector<256x128xf32>
    %6 = tpu.matmul %4, %5, %cst {dimension_numbers = #tpu.dot_dimension_numbers<[1], [0], [0], [1], [0, 0, 1, 1], [], []>} : vector<256x128xbf16>, vector<128x128xbf16>, vector<256x128xf32> -> vector<256x128xf32>
    %7 = arith.addf %3, %6 : vector<256x128xf32>
    %c0_6 = arith.constant 0 : index
    %c0_7 = arith.constant 0 : index
    %8 = vector.load %arg10[%c0_6, %c0_7] : memref<256x128xf32, #tpu.memory_space<vmem>>, vector<256x128xf32>
    tpu.vector_store %arg10[%c0_6, %c0_7], %7 {strides = array<i32>} : memref<256x128xf32, #tpu.memory_space<vmem>>, vector<256x128xf32>,
    %c8_i32 = arith.constant 8 : i32
    %9 = arith.cmpi eq, %arg2, %c8_i32 : i32
    %10 = arith.extui %9 : i1 to i32
    %c0_i32_8 = arith.constant 0 : i32
    %11 = arith.cmpi ne, %10, %c0_i32_8 : i32
    scf.if %11 {
      %c0_9 = arith.constant 0 : index
      %c0_10 = arith.constant 0 : index
      %12 = vector.load %arg10[%c0_9, %c0_10] : memref<256x128xf32, #tpu.memory_space<vmem>>, vector<256x128xf32>
      %c0_11 = arith.constant 0 : index
      %c0_12 = arith.constant 0 : index
      %13 = vector.load %arg5[%c0_11, %c0_12] : memref<1x128xf32, #tpu.memory_space<vmem>>, vector<1x128xf32>
      %14 = vector.broadcast %13 : vector<1x128xf32> to vector<256x128xf32>
      %15 = arith.mulf %12, %14 : vector<256x128xf32>
      %c0_13 = arith.constant 0 : index
      %c0_14 = arith.constant 0 : index
      %16 = vector.load %arg6[%c0_13, %c0_14] : memref<1x128xf32, #tpu.memory_space<vmem>>, vector<1x128xf32>
      %17 = vector.broadcast %16 : vector<1x128xf32> to vector<256x128xf32>
      %18 = arith.addf %15, %17 : vector<256x128xf32>
      %c0_15 = arith.constant 0 : index
      %c0_16 = arith.constant 0 : index
      %19 = vector.load %arg7[%c0_15, %c0_16] : memref<1x128xf32, #tpu.memory_space<vmem>>, vector<1x128xf32>
      %20 = vector.broadcast %19 : vector<1x128xf32> to vector<256x128xf32>
      %21 = arith.mulf %18, %20 : vector<256x128xf32>
      %c0_17 = arith.constant 0 : index
      %c0_18 = arith.constant 0 : index
      %22 = vector.load %arg8[%c0_17, %c0_18] : memref<1x128xf32, #tpu.memory_space<vmem>>, vector<1x128xf32>
      %23 = vector.broadcast %22 : vector<1x128xf32> to vector<256x128xf32>
      %24 = arith.addf %21, %23 : vector<256x128xf32>
      %cst_19 = arith.constant 0.000000e+00 : f32
      %25 = vector.broadcast %cst_19 : f32 to vector<256x128xf32>
      %26 = arith.maximumf %24, %25 : vector<256x128xf32>
      %27 = arith.truncf %26 : vector<256x128xf32> to vector<256x128xbf16>
      %c0_20 = arith.constant 0 : index
      %c0_21 = arith.constant 0 : index
      %28 = vector.load %arg9[%c0_20, %c0_21] : memref<256x128xbf16, #tpu.memory_space<vmem>>, vector<256x128xbf16>
      tpu.vector_store %arg9[%c0_20, %c0_21], %27 {strides = array<i32>} : memref<256x128xbf16, #tpu.memory_space<vmem>>, vector<256x128xbf16>,
    } else {
    }
    return
  }
  func.func @transform_0(%arg0: i32, %arg1: i32, %arg2: i32) -> (i32, i32) {
    %c0_i32 = arith.constant 0 : i32
    return %arg0, %arg2 : i32, i32
  }
  func.func @transform_1(%arg0: i32, %arg1: i32, %arg2: i32) -> (i32, i32) {
    %c0_i32 = arith.constant 0 : i32
    return %arg2, %arg1 : i32, i32
  }
  func.func @transform_2(%arg0: i32, %arg1: i32, %arg2: i32) -> (i32, i32) {
    %c0_i32 = arith.constant 0 : i32
    %c0_i32_0 = arith.constant 0 : i32
    return %c0_i32, %arg1 : i32, i32
  }
  func.func @transform_3(%arg0: i32, %arg1: i32, %arg2: i32) -> (i32, i32) {
    %c0_i32 = arith.constant 0 : i32
    %c0_i32_0 = arith.constant 0 : i32
    return %c0_i32, %arg1 : i32, i32
  }
  func.func @transform_4(%arg0: i32, %arg1: i32, %arg2: i32) -> (i32, i32) {
    %c0_i32 = arith.constant 0 : i32
    %c0_i32_0 = arith.constant 0 : i32
    return %c0_i32, %arg1 : i32, i32
  }
  func.func @transform_5(%arg0: i32, %arg1: i32, %arg2: i32) -> (i32, i32) {
    %c0_i32 = arith.constant 0 : i32
    %c0_i32_0 = arith.constant 0 : i32
    return %c0_i32, %arg1 : i32, i32
  }
  func.func @transform_6(%arg0: i32, %arg1: i32, %arg2: i32) -> (i32, i32) {
    %c0_i32 = arith.constant 0 : i32
    return %arg0, %arg1 : i32, i32
  }
}

module attributes {stable_mosaic.version = 11 : i64} {
  func.func @_fused_matmul_kernel(%arg0: i32, %arg1: i32, %arg2: i32, %arg3: memref<256x128xbf16, #tpu.memory_space<vmem>>, %arg4: memref<128x128xbf16, #tpu.memory_space<vmem>>, %arg5: memref<1x128xf32, #tpu.memory_space<vmem>>, %arg6: memref<1x128xf32, #tpu.memory_space<vmem>>, %arg7: memref<1x128xf32, #tpu.memory_space<vmem>>, %arg8: memref<1x128xf32, #tpu.memory_space<vmem>>, %arg9: memref<256x128xbf16, #tpu.memory_space<vmem>>, %arg10: memref<256x128xbf16, #tpu.memory_space<vmem>>, %arg11: memref<256x128xf32, #tpu.memory_space<vmem>>) attributes {dimension_semantics = [#tpu.dimension_semantics<parallel>, #tpu.dimension_semantics<parallel>, #tpu.dimension_semantics<arbitrary>], iteration_bounds = array<i64: 8, 1, 1>, scalar_prefetch = 0 : i64, scratch_operands = 1 : i64, tpu.core_type = #tpu.core_type<tc>, window_params = [{transform_indices = @transform_0, window_bounds = array<i64: 256, 128>}, {transform_indices = @transform_1, window_bounds = array<i64: 128, 128>}, {transform_indices = @transform_2, window_bounds = array<i64: 1, 128>}, {transform_indices = @transform_3, window_bounds = array<i64: 1, 128>}, {transform_indices = @transform_4, window_bounds = array<i64: 1, 128>}, {transform_indices = @transform_5, window_bounds = array<i64: 1, 128>}, {transform_indices = @transform_6, window_bounds = array<i64: 256, 128>}, {transform_indices = @transform_7, window_bounds = array<i64: 256, 128>}]} {
    %c0_i32 = arith.constant 0 : i32
    %0 = arith.cmpi eq, %arg2, %c0_i32 : i32
    %1 = arith.extui %0 : i1 to i32
    %c0_i32_0 = arith.constant 0 : i32
    %2 = arith.cmpi ne, %1, %c0_i32_0 : i32
    scf.if %2 {
      %cst_10 = arith.constant 0.000000e+00 : f32
      %12 = vector.broadcast %cst_10 : f32 to vector<256x128xf32>
      %c0_11 = arith.constant 0 : index
      %c0_12 = arith.constant 0 : index
      %13 = vector.load %arg11[%c0_11, %c0_12] : memref<256x128xf32, #tpu.memory_space<vmem>>, vector<256x128xf32>
      tpu.vector_store %arg11[%c0_11, %c0_12], %12 {strides = array<i32>} : memref<256x128xf32, #tpu.memory_space<vmem>>, vector<256x128xf32>,
    } else {
    }
    %c0 = arith.constant 0 : index
    %c0_1 = arith.constant 0 : index
    %3 = vector.load %arg11[%c0, %c0_1] : memref<256x128xf32, #tpu.memory_space<vmem>>, vector<256x128xf32>
    %c0_2 = arith.constant 0 : index
    %c0_3 = arith.constant 0 : index
    %4 = vector.load %arg3[%c0_2, %c0_3] : memref<256x128xbf16, #tpu.memory_space<vmem>>, vector<256x128xbf16>
    %c0_4 = arith.constant 0 : index
    %c0_5 = arith.constant 0 : index
    %5 = vector.load %arg4[%c0_4, %c0_5] : memref<128x128xbf16, #tpu.memory_space<vmem>>, vector<128x128xbf16>
    %cst = arith.constant dense<0.000000e+00> : vector<256x128xf32>
    %6 = tpu.matmul %4, %5, %cst {dimension_numbers = #tpu.dot_dimension_numbers<[1], [0], [0], [1], [0, 0, 1, 1], [], []>} : vector<256x128xbf16>, vector<128x128xbf16>, vector<256x128xf32> -> vector<256x128xf32>
    %7 = arith.addf %3, %6 : vector<256x128xf32>
    %c0_6 = arith.constant 0 : index
    %c0_7 = arith.constant 0 : index
    %8 = vector.load %arg11[%c0_6, %c0_7] : memref<256x128xf32, #tpu.memory_space<vmem>>, vector<256x128xf32>
    tpu.vector_store %arg11[%c0_6, %c0_7], %7 {strides = array<i32>} : memref<256x128xf32, #tpu.memory_space<vmem>>, vector<256x128xf32>,
    %c0_i32_8 = arith.constant 0 : i32
    %9 = arith.cmpi eq, %arg2, %c0_i32_8 : i32
    %10 = arith.extui %9 : i1 to i32
    %c0_i32_9 = arith.constant 0 : i32
    %11 = arith.cmpi ne, %10, %c0_i32_9 : i32
    scf.if %11 {
      %c0_10 = arith.constant 0 : index
      %c0_11 = arith.constant 0 : index
      %12 = vector.load %arg11[%c0_10, %c0_11] : memref<256x128xf32, #tpu.memory_space<vmem>>, vector<256x128xf32>
      %c0_12 = arith.constant 0 : index
      %c0_13 = arith.constant 0 : index
      %13 = vector.load %arg5[%c0_12, %c0_13] : memref<1x128xf32, #tpu.memory_space<vmem>>, vector<1x128xf32>
      %14 = vector.broadcast %13 : vector<1x128xf32> to vector<256x128xf32>
      %15 = arith.mulf %12, %14 : vector<256x128xf32>
      %c0_14 = arith.constant 0 : index
      %c0_15 = arith.constant 0 : index
      %16 = vector.load %arg6[%c0_14, %c0_15] : memref<1x128xf32, #tpu.memory_space<vmem>>, vector<1x128xf32>
      %17 = vector.broadcast %16 : vector<1x128xf32> to vector<256x128xf32>
      %18 = arith.addf %15, %17 : vector<256x128xf32>
      %c0_16 = arith.constant 0 : index
      %c0_17 = arith.constant 0 : index
      %19 = vector.load %arg7[%c0_16, %c0_17] : memref<1x128xf32, #tpu.memory_space<vmem>>, vector<1x128xf32>
      %20 = vector.broadcast %19 : vector<1x128xf32> to vector<256x128xf32>
      %21 = arith.mulf %18, %20 : vector<256x128xf32>
      %c0_18 = arith.constant 0 : index
      %c0_19 = arith.constant 0 : index
      %22 = vector.load %arg8[%c0_18, %c0_19] : memref<1x128xf32, #tpu.memory_space<vmem>>, vector<1x128xf32>
      %23 = vector.broadcast %22 : vector<1x128xf32> to vector<256x128xf32>
      %24 = arith.addf %21, %23 : vector<256x128xf32>
      %c0_20 = arith.constant 0 : index
      %c0_21 = arith.constant 0 : index
      %25 = vector.load %arg9[%c0_20, %c0_21] : memref<256x128xbf16, #tpu.memory_space<vmem>>, vector<256x128xbf16>
      %26 = arith.extf %25 : vector<256x128xbf16> to vector<256x128xf32>
      %27 = arith.addf %24, %26 : vector<256x128xf32>
      %cst_22 = arith.constant 0.000000e+00 : f32
      %28 = vector.broadcast %cst_22 : f32 to vector<256x128xf32>
      %29 = arith.maximumf %27, %28 : vector<256x128xf32>
      %30 = arith.truncf %29 : vector<256x128xf32> to vector<256x128xbf16>
      %c0_23 = arith.constant 0 : index
      %c0_24 = arith.constant 0 : index
      %31 = vector.load %arg10[%c0_23, %c0_24] : memref<256x128xbf16, #tpu.memory_space<vmem>>, vector<256x128xbf16>
      tpu.vector_store %arg10[%c0_23, %c0_24], %30 {strides = array<i32>} : memref<256x128xbf16, #tpu.memory_space<vmem>>, vector<256x128xbf16>,
    } else {
    }
    return
  }
  func.func @transform_0(%arg0: i32, %arg1: i32, %arg2: i32) -> (i32, i32) {
    %c0_i32 = arith.constant 0 : i32
    return %arg0, %arg2 : i32, i32
  }
  func.func @transform_1(%arg0: i32, %arg1: i32, %arg2: i32) -> (i32, i32) {
    %c0_i32 = arith.constant 0 : i32
    return %arg2, %arg1 : i32, i32
  }
  func.func @transform_2(%arg0: i32, %arg1: i32, %arg2: i32) -> (i32, i32) {
    %c0_i32 = arith.constant 0 : i32
    %c0_i32_0 = arith.constant 0 : i32
    return %c0_i32, %arg1 : i32, i32
  }
  func.func @transform_3(%arg0: i32, %arg1: i32, %arg2: i32) -> (i32, i32) {
    %c0_i32 = arith.constant 0 : i32
    %c0_i32_0 = arith.constant 0 : i32
    return %c0_i32, %arg1 : i32, i32
  }
  func.func @transform_4(%arg0: i32, %arg1: i32, %arg2: i32) -> (i32, i32) {
    %c0_i32 = arith.constant 0 : i32
    %c0_i32_0 = arith.constant 0 : i32
    return %c0_i32, %arg1 : i32, i32
  }
  func.func @transform_5(%arg0: i32, %arg1: i32, %arg2: i32) -> (i32, i32) {
    %c0_i32 = arith.constant 0 : i32
    %c0_i32_0 = arith.constant 0 : i32
    return %c0_i32, %arg1 : i32, i32
  }
  func.func @transform_6(%arg0: i32, %arg1: i32, %arg2: i32) -> (i32, i32) {
    %c0_i32 = arith.constant 0 : i32
    return %arg0, %arg1 : i32, i32
  }
  func.func @transform_7(%arg0: i32, %arg1: i32, %arg2: i32) -> (i32, i32) {
    %c0_i32 = arith.constant 0 : i32
    return %arg0, %arg1 : i32, i32
  }
}

module attributes {stable_mosaic.version = 11 : i64} {
  func.func @_gap_kernel(%arg0: i32, %arg1: memref<2048x128xbf16, #tpu.memory_space<vmem>>, %arg2: memref<8x128xbf16, #tpu.memory_space<vmem>>) attributes {dimension_semantics = [#tpu.dimension_semantics<parallel>], iteration_bounds = array<i64: 1>, scalar_prefetch = 0 : i64, scratch_operands = 0 : i64, tpu.core_type = #tpu.core_type<tc>, window_params = [{transform_indices = @transform_0, window_bounds = array<i64: 2048, 128>}, {transform_indices = @transform_1, window_bounds = array<i64: 8, 128>}]} {
    %c0 = arith.constant 0 : index
    %c0_0 = arith.constant 0 : index
    %0 = vector.load %arg1[%c0, %c0_0] : memref<2048x128xbf16, #tpu.memory_space<vmem>>, vector<256x128xbf16>
    %1 = arith.extf %0 : vector<256x128xbf16> to vector<256x128xf32>
    %cst = arith.constant dense<0.000000e+00> : vector<128xf32>
    %2 = vector.multi_reduction <add>, %1, %cst [0] : vector<256x128xf32> to vector<128xf32>
    %3 = vector.shape_cast %2 : vector<128xf32> to vector<1x128xf32>
    %cst_1 = arith.constant 3.906250e-03 : f32
    %4 = vector.broadcast %cst_1 : f32 to vector<1x128xf32>
    %5 = arith.mulf %3, %4 : vector<1x128xf32>
    %6 = arith.truncf %5 : vector<1x128xf32> to vector<1x128xbf16>
    %c0_2 = arith.constant 0 : index
    %c0_3 = arith.constant 0 : index
    %7 = vector.load %arg2[%c0_2, %c0_3] : memref<8x128xbf16, #tpu.memory_space<vmem>>, vector<1x128xbf16>
    tpu.vector_store %arg2[%c0_2, %c0_3], %6 {strides = array<i32>} : memref<8x128xbf16, #tpu.memory_space<vmem>>, vector<1x128xbf16>,
    %c256 = arith.constant 256 : index
    %c0_4 = arith.constant 0 : index
    %8 = vector.load %arg1[%c256, %c0_4] : memref<2048x128xbf16, #tpu.memory_space<vmem>>, vector<256x128xbf16>
    %9 = arith.extf %8 : vector<256x128xbf16> to vector<256x128xf32>
    %cst_5 = arith.constant dense<0.000000e+00> : vector<128xf32>
    %10 = vector.multi_reduction <add>, %9, %cst_5 [0] : vector<256x128xf32> to vector<128xf32>
    %11 = vector.shape_cast %10 : vector<128xf32> to vector<1x128xf32>
    %cst_6 = arith.constant 3.906250e-03 : f32
    %12 = vector.broadcast %cst_6 : f32 to vector<1x128xf32>
    %13 = arith.mulf %11, %12 : vector<1x128xf32>
    %14 = arith.truncf %13 : vector<1x128xf32> to vector<1x128xbf16>
    %c1 = arith.constant 1 : index
    %c0_7 = arith.constant 0 : index
    %15 = vector.load %arg2[%c1, %c0_7] : memref<8x128xbf16, #tpu.memory_space<vmem>>, vector<1x128xbf16>
    tpu.vector_store %arg2[%c1, %c0_7], %14 {strides = array<i32>} : memref<8x128xbf16, #tpu.memory_space<vmem>>, vector<1x128xbf16>,
    %c512 = arith.constant 512 : index
    %c0_8 = arith.constant 0 : index
    %16 = vector.load %arg1[%c512, %c0_8] : memref<2048x128xbf16, #tpu.memory_space<vmem>>, vector<256x128xbf16>
    %17 = arith.extf %16 : vector<256x128xbf16> to vector<256x128xf32>
    %cst_9 = arith.constant dense<0.000000e+00> : vector<128xf32>
    %18 = vector.multi_reduction <add>, %17, %cst_9 [0] : vector<256x128xf32> to vector<128xf32>
    %19 = vector.shape_cast %18 : vector<128xf32> to vector<1x128xf32>
    %cst_10 = arith.constant 3.906250e-03 : f32
    %20 = vector.broadcast %cst_10 : f32 to vector<1x128xf32>
    %21 = arith.mulf %19, %20 : vector<1x128xf32>
    %22 = arith.truncf %21 : vector<1x128xf32> to vector<1x128xbf16>
    %c2 = arith.constant 2 : index
    %c0_11 = arith.constant 0 : index
    %23 = vector.load %arg2[%c2, %c0_11] : memref<8x128xbf16, #tpu.memory_space<vmem>>, vector<1x128xbf16>
    tpu.vector_store %arg2[%c2, %c0_11], %22 {strides = array<i32>} : memref<8x128xbf16, #tpu.memory_space<vmem>>, vector<1x128xbf16>,
    %c768 = arith.constant 768 : index
    %c0_12 = arith.constant 0 : index
    %24 = vector.load %arg1[%c768, %c0_12] : memref<2048x128xbf16, #tpu.memory_space<vmem>>, vector<256x128xbf16>
    %25 = arith.extf %24 : vector<256x128xbf16> to vector<256x128xf32>
    %cst_13 = arith.constant dense<0.000000e+00> : vector<128xf32>
    %26 = vector.multi_reduction <add>, %25, %cst_13 [0] : vector<256x128xf32> to vector<128xf32>
    %27 = vector.shape_cast %26 : vector<128xf32> to vector<1x128xf32>
    %cst_14 = arith.constant 3.906250e-03 : f32
    %28 = vector.broadcast %cst_14 : f32 to vector<1x128xf32>
    %29 = arith.mulf %27, %28 : vector<1x128xf32>
    %30 = arith.truncf %29 : vector<1x128xf32> to vector<1x128xbf16>
    %c3 = arith.constant 3 : index
    %c0_15 = arith.constant 0 : index
    %31 = vector.load %arg2[%c3, %c0_15] : memref<8x128xbf16, #tpu.memory_space<vmem>>, vector<1x128xbf16>
    tpu.vector_store %arg2[%c3, %c0_15], %30 {strides = array<i32>} : memref<8x128xbf16, #tpu.memory_space<vmem>>, vector<1x128xbf16>,
    %c1024 = arith.constant 1024 : index
    %c0_16 = arith.constant 0 : index
    %32 = vector.load %arg1[%c1024, %c0_16] : memref<2048x128xbf16, #tpu.memory_space<vmem>>, vector<256x128xbf16>
    %33 = arith.extf %32 : vector<256x128xbf16> to vector<256x128xf32>
    %cst_17 = arith.constant dense<0.000000e+00> : vector<128xf32>
    %34 = vector.multi_reduction <add>, %33, %cst_17 [0] : vector<256x128xf32> to vector<128xf32>
    %35 = vector.shape_cast %34 : vector<128xf32> to vector<1x128xf32>
    %cst_18 = arith.constant 3.906250e-03 : f32
    %36 = vector.broadcast %cst_18 : f32 to vector<1x128xf32>
    %37 = arith.mulf %35, %36 : vector<1x128xf32>
    %38 = arith.truncf %37 : vector<1x128xf32> to vector<1x128xbf16>
    %c4 = arith.constant 4 : index
    %c0_19 = arith.constant 0 : index
    %39 = vector.load %arg2[%c4, %c0_19] : memref<8x128xbf16, #tpu.memory_space<vmem>>, vector<1x128xbf16>
    tpu.vector_store %arg2[%c4, %c0_19], %38 {strides = array<i32>} : memref<8x128xbf16, #tpu.memory_space<vmem>>, vector<1x128xbf16>,
    %c1280 = arith.constant 1280 : index
    %c0_20 = arith.constant 0 : index
    %40 = vector.load %arg1[%c1280, %c0_20] : memref<2048x128xbf16, #tpu.memory_space<vmem>>, vector<256x128xbf16>
    %41 = arith.extf %40 : vector<256x128xbf16> to vector<256x128xf32>
    %cst_21 = arith.constant dense<0.000000e+00> : vector<128xf32>
    %42 = vector.multi_reduction <add>, %41, %cst_21 [0] : vector<256x128xf32> to vector<128xf32>
    %43 = vector.shape_cast %42 : vector<128xf32> to vector<1x128xf32>
    %cst_22 = arith.constant 3.906250e-03 : f32
    %44 = vector.broadcast %cst_22 : f32 to vector<1x128xf32>
    %45 = arith.mulf %43, %44 : vector<1x128xf32>
    %46 = arith.truncf %45 : vector<1x128xf32> to vector<1x128xbf16>
    %c5 = arith.constant 5 : index
    %c0_23 = arith.constant 0 : index
    %47 = vector.load %arg2[%c5, %c0_23] : memref<8x128xbf16, #tpu.memory_space<vmem>>, vector<1x128xbf16>
    tpu.vector_store %arg2[%c5, %c0_23], %46 {strides = array<i32>} : memref<8x128xbf16, #tpu.memory_space<vmem>>, vector<1x128xbf16>,
    %c1536 = arith.constant 1536 : index
    %c0_24 = arith.constant 0 : index
    %48 = vector.load %arg1[%c1536, %c0_24] : memref<2048x128xbf16, #tpu.memory_space<vmem>>, vector<256x128xbf16>
    %49 = arith.extf %48 : vector<256x128xbf16> to vector<256x128xf32>
    %cst_25 = arith.constant dense<0.000000e+00> : vector<128xf32>
    %50 = vector.multi_reduction <add>, %49, %cst_25 [0] : vector<256x128xf32> to vector<128xf32>
    %51 = vector.shape_cast %50 : vector<128xf32> to vector<1x128xf32>
    %cst_26 = arith.constant 3.906250e-03 : f32
    %52 = vector.broadcast %cst_26 : f32 to vector<1x128xf32>
    %53 = arith.mulf %51, %52 : vector<1x128xf32>
    %54 = arith.truncf %53 : vector<1x128xf32> to vector<1x128xbf16>
    %c6 = arith.constant 6 : index
    %c0_27 = arith.constant 0 : index
    %55 = vector.load %arg2[%c6, %c0_27] : memref<8x128xbf16, #tpu.memory_space<vmem>>, vector<1x128xbf16>
    tpu.vector_store %arg2[%c6, %c0_27], %54 {strides = array<i32>} : memref<8x128xbf16, #tpu.memory_space<vmem>>, vector<1x128xbf16>,
    %c1792 = arith.constant 1792 : index
    %c0_28 = arith.constant 0 : index
    %56 = vector.load %arg1[%c1792, %c0_28] : memref<2048x128xbf16, #tpu.memory_space<vmem>>, vector<256x128xbf16>
    %57 = arith.extf %56 : vector<256x128xbf16> to vector<256x128xf32>
    %cst_29 = arith.constant dense<0.000000e+00> : vector<128xf32>
    %58 = vector.multi_reduction <add>, %57, %cst_29 [0] : vector<256x128xf32> to vector<128xf32>
    %59 = vector.shape_cast %58 : vector<128xf32> to vector<1x128xf32>
    %cst_30 = arith.constant 3.906250e-03 : f32
    %60 = vector.broadcast %cst_30 : f32 to vector<1x128xf32>
    %61 = arith.mulf %59, %60 : vector<1x128xf32>
    %62 = arith.truncf %61 : vector<1x128xf32> to vector<1x128xbf16>
    %c7 = arith.constant 7 : index
    %c0_31 = arith.constant 0 : index
    %63 = vector.load %arg2[%c7, %c0_31] : memref<8x128xbf16, #tpu.memory_space<vmem>>, vector<1x128xbf16>
    tpu.vector_store %arg2[%c7, %c0_31], %62 {strides = array<i32>} : memref<8x128xbf16, #tpu.memory_space<vmem>>, vector<1x128xbf16>,
    return
  }
  func.func @transform_0(%arg0: i32) -> (i32, i32) {
    %c0_i32 = arith.constant 0 : i32
    %c0_i32_0 = arith.constant 0 : i32
    return %c0_i32, %arg0 : i32, i32
  }
  func.func @transform_1(%arg0: i32) -> (i32, i32) {
    %c0_i32 = arith.constant 0 : i32
    %c0_i32_0 = arith.constant 0 : i32
    return %c0_i32, %arg0 : i32, i32
  }
}

module attributes {stable_mosaic.version = 11 : i64} {
  func.func @_agg_matmul_kernel(%arg0: i32, %arg1: memref<8x8xf32, #tpu.memory_space<vmem>>, %arg2: memref<8x128xbf16, #tpu.memory_space<vmem>>, %arg3: memref<128x128xbf16, #tpu.memory_space<vmem>>, %arg4: memref<1x128xf32, #tpu.memory_space<vmem>>, %arg5: memref<1x128xf32, #tpu.memory_space<vmem>>, %arg6: memref<1x128xf32, #tpu.memory_space<vmem>>, %arg7: memref<8x128xbf16, #tpu.memory_space<vmem>>) attributes {dimension_semantics = [#tpu.dimension_semantics<parallel>], iteration_bounds = array<i64: 1>, scalar_prefetch = 0 : i64, scratch_operands = 0 : i64, tpu.core_type = #tpu.core_type<tc>, window_params = [{pipeline_mode = #tpu.pipeline_mode<synchronous>, transform_indices = @transform_0, window_bounds = array<i64: 8, 8>}, {pipeline_mode = #tpu.pipeline_mode<synchronous>, transform_indices = @transform_1, window_bounds = array<i64: 8, 128>}, {transform_indices = @transform_2, window_bounds = array<i64: 128, 128>}, {transform_indices = @transform_3, window_bounds = array<i64: 1, 128>}, {transform_indices = @transform_4, window_bounds = array<i64: 1, 128>}, {transform_indices = @transform_5, window_bounds = array<i64: 1, 128>}, {transform_indices = @transform_6, window_bounds = array<i64: 8, 128>}]} {
    %c0 = arith.constant 0 : index
    %c0_0 = arith.constant 0 : index
    %0 = vector.load %arg2[%c0, %c0_0] : memref<8x128xbf16, #tpu.memory_space<vmem>>, vector<8x128xbf16>
    %c0_1 = arith.constant 0 : index
    %c0_2 = arith.constant 0 : index
    %1 = vector.load %arg3[%c0_1, %c0_2] : memref<128x128xbf16, #tpu.memory_space<vmem>>, vector<128x128xbf16>
    %cst = arith.constant dense<0.000000e+00> : vector<8x128xf32>
    %2 = tpu.matmul %0, %1, %cst {dimension_numbers = #tpu.dot_dimension_numbers<[1], [0], [0], [1], [0, 0, 1, 1], [], []>} : vector<8x128xbf16>, vector<128x128xbf16>, vector<8x128xf32> -> vector<8x128xf32>
    %c0_3 = arith.constant 0 : index
    %c0_4 = arith.constant 0 : index
    %3 = vector.load %arg1[%c0_3, %c0_4] : memref<8x8xf32, #tpu.memory_space<vmem>>, vector<8x8xf32>
    %cst_5 = arith.constant dense<0.000000e+00> : vector<8x128xf32>
    %4 = tpu.matmul %3, %2, %cst_5 {dimension_numbers = #tpu.dot_dimension_numbers<[1], [0], [0], [1], [0, 0, 1, 1], [], []>} : vector<8x8xf32>, vector<8x128xf32>, vector<8x128xf32> -> vector<8x128xf32>
    %c0_6 = arith.constant 0 : index
    %c0_7 = arith.constant 0 : index
    %5 = vector.load %arg4[%c0_6, %c0_7] : memref<1x128xf32, #tpu.memory_space<vmem>>, vector<1x128xf32>
    %6 = vector.broadcast %5 : vector<1x128xf32> to vector<8x128xf32>
    %7 = arith.addf %4, %6 : vector<8x128xf32>
    %cst_8 = arith.constant 0.000000e+00 : f32
    %8 = vector.broadcast %cst_8 : f32 to vector<8x128xf32>
    %9 = arith.maximumf %7, %8 : vector<8x128xf32>
    %c0_9 = arith.constant 0 : index
    %c0_10 = arith.constant 0 : index
    %10 = vector.load %arg5[%c0_9, %c0_10] : memref<1x128xf32, #tpu.memory_space<vmem>>, vector<1x128xf32>
    %11 = vector.broadcast %10 : vector<1x128xf32> to vector<8x128xf32>
    %12 = arith.mulf %9, %11 : vector<8x128xf32>
    %c0_11 = arith.constant 0 : index
    %c0_12 = arith.constant 0 : index
    %13 = vector.load %arg6[%c0_11, %c0_12] : memref<1x128xf32, #tpu.memory_space<vmem>>, vector<1x128xf32>
    %14 = vector.broadcast %13 : vector<1x128xf32> to vector<8x128xf32>
    %15 = arith.addf %12, %14 : vector<8x128xf32>
    %16 = arith.truncf %15 : vector<8x128xf32> to vector<8x128xbf16>
    %c0_13 = arith.constant 0 : index
    %c0_14 = arith.constant 0 : index
    %17 = vector.load %arg7[%c0_13, %c0_14] : memref<8x128xbf16, #tpu.memory_space<vmem>>, vector<8x128xbf16>
    tpu.vector_store %arg7[%c0_13, %c0_14], %16 {strides = array<i32>} : memref<8x128xbf16, #tpu.memory_space<vmem>>, vector<8x128xbf16>,
    return
  }
  func.func @transform_0(%arg0: i32) -> (i32, i32) {
    %c0_i32 = arith.constant 0 : i32
    %c0_i32_0 = arith.constant 0 : i32
    %c0_i32_1 = arith.constant 0 : i32
    return %c0_i32, %c0_i32_0 : i32, i32
  }
  func.func @transform_1(%arg0: i32) -> (i32, i32) {
    %c0_i32 = arith.constant 0 : i32
    %c0_i32_0 = arith.constant 0 : i32
    %c0_i32_1 = arith.constant 0 : i32
    return %c0_i32, %c0_i32_0 : i32, i32
  }
  func.func @transform_2(%arg0: i32) -> (i32, i32) {
    %c0_i32 = arith.constant 0 : i32
    %c0_i32_0 = arith.constant 0 : i32
    return %c0_i32, %arg0 : i32, i32
  }
  func.func @transform_3(%arg0: i32) -> (i32, i32) {
    %c0_i32 = arith.constant 0 : i32
    %c0_i32_0 = arith.constant 0 : i32
    return %c0_i32, %arg0 : i32, i32
  }
  func.func @transform_4(%arg0: i32) -> (i32, i32) {
    %c0_i32 = arith.constant 0 : i32
    %c0_i32_0 = arith.constant 0 : i32
    return %c0_i32, %arg0 : i32, i32
  }
  func.func @transform_5(%arg0: i32) -> (i32, i32) {
    %c0_i32 = arith.constant 0 : i32
    %c0_i32_0 = arith.constant 0 : i32
    return %c0_i32, %arg0 : i32, i32
  }
  func.func @transform_6(%arg0: i32) -> (i32, i32) {
    %c0_i32 = arith.constant 0 : i32
    %c0_i32_0 = arith.constant 0 : i32
    return %c0_i32, %arg0 : i32, i32
  }
}

module attributes {stable_mosaic.version = 11 : i64} {
  func.func @_agg_matmul_kernel(%arg0: i32, %arg1: memref<2x8xf32, #tpu.memory_space<vmem>>, %arg2: memref<8x128xbf16, #tpu.memory_space<vmem>>, %arg3: memref<128x128xbf16, #tpu.memory_space<vmem>>, %arg4: memref<1x128xf32, #tpu.memory_space<vmem>>, %arg5: memref<1x128xf32, #tpu.memory_space<vmem>>, %arg6: memref<1x128xf32, #tpu.memory_space<vmem>>, %arg7: memref<2x128xf32, #tpu.memory_space<vmem>>) attributes {dimension_semantics = [#tpu.dimension_semantics<parallel>], iteration_bounds = array<i64: 1>, scalar_prefetch = 0 : i64, scratch_operands = 0 : i64, tpu.core_type = #tpu.core_type<tc>, window_params = [{pipeline_mode = #tpu.pipeline_mode<synchronous>, transform_indices = @transform_0, window_bounds = array<i64: 2, 8>}, {pipeline_mode = #tpu.pipeline_mode<synchronous>, transform_indices = @transform_1, window_bounds = array<i64: 8, 128>}, {transform_indices = @transform_2, window_bounds = array<i64: 128, 128>}, {transform_indices = @transform_3, window_bounds = array<i64: 1, 128>}, {transform_indices = @transform_4, window_bounds = array<i64: 1, 128>}, {transform_indices = @transform_5, window_bounds = array<i64: 1, 128>}, {transform_indices = @transform_6, window_bounds = array<i64: 2, 128>}]} {
    %c0 = arith.constant 0 : index
    %c0_0 = arith.constant 0 : index
    %0 = vector.load %arg2[%c0, %c0_0] : memref<8x128xbf16, #tpu.memory_space<vmem>>, vector<8x128xbf16>
    %c0_1 = arith.constant 0 : index
    %c0_2 = arith.constant 0 : index
    %1 = vector.load %arg3[%c0_1, %c0_2] : memref<128x128xbf16, #tpu.memory_space<vmem>>, vector<128x128xbf16>
    %cst = arith.constant dense<0.000000e+00> : vector<8x128xf32>
    %2 = tpu.matmul %0, %1, %cst {dimension_numbers = #tpu.dot_dimension_numbers<[1], [0], [0], [1], [0, 0, 1, 1], [], []>} : vector<8x128xbf16>, vector<128x128xbf16>, vector<8x128xf32> -> vector<8x128xf32>
    %c0_3 = arith.constant 0 : index
    %c0_4 = arith.constant 0 : index
    %3 = vector.load %arg1[%c0_3, %c0_4] : memref<2x8xf32, #tpu.memory_space<vmem>>, vector<2x8xf32>
    %cst_5 = arith.constant dense<0.000000e+00> : vector<2x128xf32>
    %4 = tpu.matmul %3, %2, %cst_5 {dimension_numbers = #tpu.dot_dimension_numbers<[1], [0], [0], [1], [0, 0, 1, 1], [], []>} : vector<2x8xf32>, vector<8x128xf32>, vector<2x128xf32> -> vector<2x128xf32>
    %c0_6 = arith.constant 0 : index
    %c0_7 = arith.constant 0 : index
    %5 = vector.load %arg4[%c0_6, %c0_7] : memref<1x128xf32, #tpu.memory_space<vmem>>, vector<1x128xf32>
    %6 = vector.broadcast %5 : vector<1x128xf32> to vector<2x128xf32>
    %7 = arith.addf %4, %6 : vector<2x128xf32>
    %c0_8 = arith.constant 0 : index
    %c0_9 = arith.constant 0 : index
    %8 = vector.load %arg5[%c0_8, %c0_9] : memref<1x128xf32, #tpu.memory_space<vmem>>, vector<1x128xf32>
    %9 = vector.broadcast %8 : vector<1x128xf32> to vector<2x128xf32>
    %10 = arith.mulf %7, %9 : vector<2x128xf32>
    %c0_10 = arith.constant 0 : index
    %c0_11 = arith.constant 0 : index
    %11 = vector.load %arg6[%c0_10, %c0_11] : memref<1x128xf32, #tpu.memory_space<vmem>>, vector<1x128xf32>
    %12 = vector.broadcast %11 : vector<1x128xf32> to vector<2x128xf32>
    %13 = arith.addf %10, %12 : vector<2x128xf32>
    %c0_12 = arith.constant 0 : index
    %c0_13 = arith.constant 0 : index
    %14 = vector.load %arg7[%c0_12, %c0_13] : memref<2x128xf32, #tpu.memory_space<vmem>>, vector<2x128xf32>
    tpu.vector_store %arg7[%c0_12, %c0_13], %13 {strides = array<i32>} : memref<2x128xf32, #tpu.memory_space<vmem>>, vector<2x128xf32>,
    return
  }
  func.func @transform_0(%arg0: i32) -> (i32, i32) {
    %c0_i32 = arith.constant 0 : i32
    %c0_i32_0 = arith.constant 0 : i32
    %c0_i32_1 = arith.constant 0 : i32
    return %c0_i32, %c0_i32_0 : i32, i32
  }
  func.func @transform_1(%arg0: i32) -> (i32, i32) {
    %c0_i32 = arith.constant 0 : i32
    %c0_i32_0 = arith.constant 0 : i32
    %c0_i32_1 = arith.constant 0 : i32
    return %c0_i32, %c0_i32_0 : i32, i32
  }
  func.func @transform_2(%arg0: i32) -> (i32, i32) {
    %c0_i32 = arith.constant 0 : i32
    %c0_i32_0 = arith.constant 0 : i32
    return %c0_i32, %arg0 : i32, i32
  }
  func.func @transform_3(%arg0: i32) -> (i32, i32) {
    %c0_i32 = arith.constant 0 : i32
    %c0_i32_0 = arith.constant 0 : i32
    return %c0_i32, %arg0 : i32, i32
  }
  func.func @transform_4(%arg0: i32) -> (i32, i32) {
    %c0_i32 = arith.constant 0 : i32
    %c0_i32_0 = arith.constant 0 : i32
    return %c0_i32, %arg0 : i32, i32
  }
  func.func @transform_5(%arg0: i32) -> (i32, i32) {
    %c0_i32 = arith.constant 0 : i32
    %c0_i32_0 = arith.constant 0 : i32
    return %c0_i32, %arg0 : i32, i32
  }
  func.func @transform_6(%arg0: i32) -> (i32, i32) {
    %c0_i32 = arith.constant 0 : i32
    %c0_i32_0 = arith.constant 0 : i32
    return %c0_i32, %arg0 : i32, i32
  }
}

</mosaic_0001>

<llo_original>
// kernel: resnet_gcn_forward.9
$region0: #{resnet_gcn_forward.9}
  #allocation0 [shape = 'u32[]', space=smem, size = 0x4, offset = 0x4, fixed_abs, tag = 'smem constant byte address 0x4 - core index']
  #allocation1 [shape = 'u32[144,128]{1,0:T(1,128)}', space=vmem, size = 0x12000, scoped, tag = 'internal scratch']
  #allocation2 [shape = 'f32[256,128]{1,0:T(8,128)}', space=vmem, size = 0x20000, scoped, tag = 'scratch operand']
  %s0 = inlined_call_operand.vmem [shape: bf16[2048,128], index: 0, kind: input, shape index: {}]
  %s1 = inlined_call_operand.vmem [shape: bf16[128,128], index: 1, kind: input, shape index: {}]
  %s2 = inlined_call_operand.vmem [shape: f32[1,128], index: 2, kind: input, shape index: {}]
  %s3 = inlined_call_operand.vmem [shape: f32[1,128], index: 3, kind: input, shape index: {}]
  %s4 = inlined_call_operand.vmem [shape: f32[1,128], index: 4, kind: input, shape index: {}]
  %s5 = inlined_call_operand.vmem [shape: f32[1,128], index: 5, kind: input, shape index: {}]
  %s6 = inlined_call_operand.vmem [shape: bf16[2048,128], index: 6, kind: output, shape index: {}]
  %s7 = sld [smem:[#allocation0]]
  $region65: #{resnet_gcn_forward.9} parent=0
    _
  %s9 = ssub.s32 1, %s7
  %s10 = scalar_select 0, %s9, %s7
  loop: start=0, step=1, limit=10
  $region2: #{resnet_gcn_forward.9} parent=0 // loop_pre_header
    _
  $region3: #{resnet_gcn_forward.9} parent=0 // loop_header
    %s12 = sphi 0, %s16
    %p13 = scmp.ge.s32.totalorder %s12, 10
    %s19 = sphi 0, %s38
    %s20 = sphi 0, %s34
    %s21 = sphi 0, %s30
    %s22 = sphi 0, %s19
    %s23 = sphi 0, %s20
    %s24 = sphi 0, %s21
    %s25 = sphi 0, %s22
    %s26 = sphi 0, %s23
    %s27 = sphi 0, %s24
    %s43 = sphi 0, %s45
    %s46 = sphi 0, %s43
    %s47 = sphi 0, %s46
    %s63 = sphi 0, %s47
    %s71 = sphi 0, %s73
    %s74 = sphi 0, %s71
    %s75 = sphi 0, %s74
    %s91 = sphi 0, %s75
    %s97 = sphi 0, %s99
    %s100 = sphi 0, %s97
    %s101 = sphi 0, %s100
    %s117 = sphi 0, %s101
    %s123 = sphi 0, %s125
    %s126 = sphi 0, %s123
    %s127 = sphi 0, %s126
    %s143 = sphi 0, %s127
    %s149 = sphi 0, %s151
    %s152 = sphi 0, %s149
    %s153 = sphi 0, %s152
    %s169 = sphi 0, %s153
    %s175 = sphi 0, %s177
    %s178 = sphi 0, %s175
    %s179 = sphi 0, %s178
    %s195 = sphi 0, %s179
    %s203 = sphi 0, %s205
    %s206 = sphi 0, %s203
    %s207 = sphi 0, %s206
    %s223 = sphi 0, %s207
  $region4: #{resnet_gcn_forward.9} parent=0 // loop_header_branch
    %15 = sbr.rel (%p13) target = $region8
  $region5: #{resnet_gcn_forward.9} parent=0 // loop_body
    %s17 = ssub.s32 %s12, 1
    %s18 = ssub.s32 %s12, 2
    %s28 = sadd.s32 1, %s21
    %p29 = scmp.ge.s32.totalorder %s28, 1
    %s30 = scalar_select %p29, 0, %s28
    %s31 = sadd.s32 1, %s20
    %s32 = scalar_select %p29, %s31, %s20
    %p33 = scmp.ge.s32.totalorder %s32, 1
    %s34 = scalar_select %p33, 0, %s32
    %s35 = sadd.s32 1, %s19
    %s36 = scalar_select %p33, %s35, %s19
    %p37 = scmp.ge.s32.totalorder %s36, 8
    %s38 = scalar_select %p37, 0, %s36
    %s39 = ssub.s32 %s19, %s38
    %s40 = ssub.s32 %s21, %s30
    %s41 = sor.u32 %s39, %s40
    %p42 = scmp.eq.s32.totalorder %s41, 0
    %s44 = sadd.s32 %s43, 1
    %s45 = scalar_select %p42, %s43, %s44
    %p48 = pneg %p42
    %p49 = scmp.eq.s32.totalorder %s12, 7
    %p50 = por %p48, %p49
    %p51 = scmp.ne.s32.totalorder %s43, %s46
    %p52 = scmp.eq.s32.totalorder %s12, 0
    %p53 = por %p51, %p52
    %p54 = scmp.ne.s32.totalorder %s43, %s46
    %p55 = scmp.eq.s32.totalorder %s17, 7
    %p56 = por %p54, %p55
    %p57 = scmp.ne.s32.totalorder %s46, %s47
    %p58 = scmp.eq.s32.totalorder %s17, 0
    %p59 = por %p57, %p58
    %p60 = scmp.ne.s32.totalorder %s46, %s47
    %p61 = scmp.eq.s32.totalorder %s18, 7
    %p62 = por %p60, %p61
    %p64 = scmp.ne.s32.totalorder %s47, %s63
    %p65 = scmp.eq.s32.totalorder %s18, 0
    %p66 = por %p64, %p65
    %s67 = ssub.s32 %s21, %s30
    %s68 = ssub.s32 %s20, %s34
    %s69 = sor.u32 %s67, %s68
    %p70 = scmp.eq.s32.totalorder %s69, 0
    %s72 = sadd.s32 %s71, 1
    %s73 = scalar_select %p70, %s71, %s72
    %p76 = pneg %p70
    %p77 = scmp.eq.s32.totalorder %s12, 7
    %p78 = por %p76, %p77
    %p79 = scmp.ne.s32.totalorder %s71, %s74
    %p80 = scmp.eq.s32.totalorder %s12, 0
    %p81 = por %p79, %p80
    %p82 = scmp.ne.s32.totalorder %s71, %s74
    %p83 = scmp.eq.s32.totalorder %s17, 7
    %p84 = por %p82, %p83
    %p85 = scmp.ne.s32.totalorder %s74, %s75
    %p86 = scmp.eq.s32.totalorder %s17, 0
    %p87 = por %p85, %p86
    %p88 = scmp.ne.s32.totalorder %s74, %s75
    %p89 = scmp.eq.s32.totalorder %s18, 7
    %p90 = por %p88, %p89
    %p92 = scmp.ne.s32.totalorder %s75, %s91
    %p93 = scmp.eq.s32.totalorder %s18, 0
    %p94 = por %p92, %p93
    %s95 = ssub.s32 %s20, %s34
    %p96 = scmp.eq.s32.totalorder %s95, 0
    %s98 = sadd.s32 %s97, 1
    %s99 = scalar_select %p96, %s97, %s98
    %p102 = pneg %p96
    %p103 = scmp.eq.s32.totalorder %s12, 7
    %p104 = por %p102, %p103
    %p105 = scmp.ne.s32.totalorder %s97, %s100
    %p106 = scmp.eq.s32.totalorder %s12, 0
    %p107 = por %p105, %p106
    %p108 = scmp.ne.s32.totalorder %s97, %s100
    %p109 = scmp.eq.s32.totalorder %s17, 7
    %p110 = por %p108, %p109
    %p111 = scmp.ne.s32.totalorder %s100, %s101
    %p112 = scmp.eq.s32.totalorder %s17, 0
    %p113 = por %p111, %p112
    %p114 = scmp.ne.s32.totalorder %s100, %s101
    %p115 = scmp.eq.s32.totalorder %s18, 7
    %p116 = por %p114, %p115
    %p118 = scmp.ne.s32.totalorder %s101, %s117
    %p119 = scmp.eq.s32.totalorder %s18, 0
    %p120 = por %p118, %p119
    %s121 = ssub.s32 %s20, %s34
    %p122 = scmp.eq.s32.totalorder %s121, 0
    %s124 = sadd.s32 %s123, 1
    %s125 = scalar_select %p122, %s123, %s124
    %p128 = pneg %p122
    %p129 = scmp.eq.s32.totalorder %s12, 7
    %p130 = por %p128, %p129
    %p131 = scmp.ne.s32.totalorder %s123, %s126
    %p132 = scmp.eq.s32.totalorder %s12, 0
    %p133 = por %p131, %p132
    %p134 = scmp.ne.s32.totalorder %s123, %s126
    %p135 = scmp.eq.s32.totalorder %s17, 7
    %p136 = por %p134, %p135
    %p137 = scmp.ne.s32.totalorder %s126, %s127
    %p138 = scmp.eq.s32.totalorder %s17, 0
    %p139 = por %p137, %p138
    %p140 = scmp.ne.s32.totalorder %s126, %s127
    %p141 = scmp.eq.s32.totalorder %s18, 7
    %p142 = por %p140, %p141
    %p144 = scmp.ne.s32.totalorder %s127, %s143
    %p145 = scmp.eq.s32.totalorder %s18, 0
    %p146 = por %p144, %p145
    %s147 = ssub.s32 %s20, %s34
    %p148 = scmp.eq.s32.totalorder %s147, 0
    %s150 = sadd.s32 %s149, 1
    %s151 = scalar_select %p148, %s149, %s150
    %p154 = pneg %p148
    %p155 = scmp.eq.s32.totalorder %s12, 7
    %p156 = por %p154, %p155
    %p157 = scmp.ne.s32.totalorder %s149, %s152
    %p158 = scmp.eq.s32.totalorder %s12, 0
    %p159 = por %p157, %p158
    %p160 = scmp.ne.s32.totalorder %s149, %s152
    %p161 = scmp.eq.s32.totalorder %s17, 7
    %p162 = por %p160, %p161
    %p163 = scmp.ne.s32.totalorder %s152, %s153
    %p164 = scmp.eq.s32.totalorder %s17, 0
    %p165 = por %p163, %p164
    %p166 = scmp.ne.s32.totalorder %s152, %s153
    %p167 = scmp.eq.s32.totalorder %s18, 7
    %p168 = por %p166, %p167
    %p170 = scmp.ne.s32.totalorder %s153, %s169
    %p171 = scmp.eq.s32.totalorder %s18, 0
    %p172 = por %p170, %p171
    %s173 = ssub.s32 %s20, %s34
    %p174 = scmp.eq.s32.totalorder %s173, 0
    %s176 = sadd.s32 %s175, 1
    %s177 = scalar_select %p174, %s175, %s176
    %p180 = pneg %p174
    %p181 = scmp.eq.s32.totalorder %s12, 7
    %p182 = por %p180, %p181
    %p183 = scmp.ne.s32.totalorder %s175, %s178
    %p184 = scmp.eq.s32.totalorder %s12, 0
    %p185 = por %p183, %p184
    %p186 = scmp.ne.s32.totalorder %s175, %s178
    %p187 = scmp.eq.s32.totalorder %s17, 7
    %p188 = por %p186, %p187
    %p189 = scmp.ne.s32.totalorder %s178, %s179
    %p190 = scmp.eq.s32.totalorder %s17, 0
    %p191 = por %p189, %p190
    %p192 = scmp.ne.s32.totalorder %s178, %s179
    %p193 = scmp.eq.s32.totalorder %s18, 7
    %p194 = por %p192, %p193
    %p196 = scmp.ne.s32.totalorder %s179, %s195
    %p197 = scmp.eq.s32.totalorder %s18, 0
    %p198 = por %p196, %p197
    %s199 = ssub.s32 %s19, %s38
    %s200 = ssub.s32 %s20, %s34
    %s201 = sor.u32 %s199, %s200
    %p202 = scmp.eq.s32.totalorder %s201, 0
    %s204 = sadd.s32 %s203, 1
    %s205 = scalar_select %p202, %s203, %s204
    %p208 = pneg %p202
    %p209 = scmp.eq.s32.totalorder %s12, 7
    %p210 = por %p208, %p209
    %p211 = scmp.ne.s32.totalorder %s203, %s206
    %p212 = scmp.eq.s32.totalorder %s12, 0
    %p213 = por %p211, %p212
    %p214 = scmp.ne.s32.totalorder %s203, %s206
    %p215 = scmp.eq.s32.totalorder %s17, 7
    %p216 = por %p214, %p215
    %p217 = scmp.ne.s32.totalorder %s206, %s207
    %p218 = scmp.eq.s32.totalorder %s17, 0
    %p219 = por %p217, %p218
    %p220 = scmp.ne.s32.totalorder %s206, %s207
    %p221 = scmp.eq.s32.totalorder %s18, 7
    %p222 = por %p220, %p221
    %p224 = scmp.ne.s32.totalorder %s207, %s223
    %p225 = scmp.eq.s32.totalorder %s18, 0
    %p226 = por %p224, %p225
    %p227 = scmp.le.s32.totalorder 1, %s12
    %p228 = scmp.lt.s32.totalorder %s12, 9
    %p229 = pnand %p227, %p228
    %p230 = pneg %p229
    // Predicated region
    $region9: #{resnet_gcn_forward.9} parent=5 // pred_check
      _
    $region10: #{resnet_gcn_forward.9} parent=5 // pred_check_branch
      %232 = sbr.rel (%p229) target = $region12
    $region11: #{resnet_gcn_forward.9} parent=5 // pred_region
      %s233 = ssub.s32 %s12, 1
      // Predicated region
      $region13: #{resnet_gcn_forward.9} parent=11 // pred_check
        %p234 = pneg %p87
      $region14: #{resnet_gcn_forward.9} parent=11 // pred_check_branch
        %236 = sbr.rel (%p234) target = $region16
      $region15: #{resnet_gcn_forward.9} parent=11 // pred_region
        %s237 = smul.u32 16, %s24
        %p238 = scmp.lt.s32.totalorder %s237, 15
        %s239 = scalar_select %p238, %s237, 15
        %p240 = scmp.lt.s32.totalorder %s23, 0
        %s241 = scalar_select %p240, %s23, 0
        %s242 = sadd.s32 %s241, %s239
        %s243 = smul.addr %s242, 4
        %s244 = scalar_lea.vmem %s1, %s243
        %s245 = smul.u32 16, %s24
      $region16: #{resnet_gcn_forward.9} parent=11 // pred_fallthru
        _
      // Predicated region
      $region17: #{resnet_gcn_forward.9} parent=11 // pred_check
        %p246 = pneg %p113
      $region18: #{resnet_gcn_forward.9} parent=11 // pred_check_branch
        %248 = sbr.rel (%p246) target = $region20
      $region19: #{resnet_gcn_forward.9} parent=11 // pred_region
        %p249 = scmp.lt.s32.totalorder %s23, 0
        %s250 = scalar_select %p249, %s23, 0
        %s251 = scalar_lea.vmem %s2, %s250
      $region20: #{resnet_gcn_forward.9} parent=11 // pred_fallthru
        _
      // Predicated region
      $region21: #{resnet_gcn_forward.9} parent=11 // pred_check
        %p252 = pneg %p139
      $region22: #{resnet_gcn_forward.9} parent=11 // pred_check_branch
        %254 = sbr.rel (%p252) target = $region24
      $region23: #{resnet_gcn_forward.9} parent=11 // pred_region
        %p255 = scmp.lt.s32.totalorder %s23, 0
        %s256 = scalar_select %p255, %s23, 0
        %s257 = scalar_lea.vmem %s3, %s256
      $region24: #{resnet_gcn_forward.9} parent=11 // pred_fallthru
        _
      // Predicated region
      $region25: #{resnet_gcn_forward.9} parent=11 // pred_check
        %p258 = pneg %p165
      $region26: #{resnet_gcn_forward.9} parent=11 // pred_check_branch
        %260 = sbr.rel (%p258) target = $region28
      $region27: #{resnet_gcn_forward.9} parent=11 // pred_region
        %p261 = scmp.lt.s32.totalorder %s23, 0
        %s262 = scalar_select %p261, %s23, 0
        %s263 = scalar_lea.vmem %s4, %s262
      $region28: #{resnet_gcn_forward.9} parent=11 // pred_fallthru
        _
      // Predicated region
      $region29: #{resnet_gcn_forward.9} parent=11 // pred_check
        %p264 = pneg %p191
      $region30: #{resnet_gcn_forward.9} parent=11 // pred_check_branch
        %266 = sbr.rel (%p264) target = $region32
      $region31: #{resnet_gcn_forward.9} parent=11 // pred_region
        %p267 = scmp.lt.s32.totalorder %s23, 0
        %s268 = scalar_select %p267, %s23, 0
        %s269 = scalar_lea.vmem %s5, %s268
      $region32: #{resnet_gcn_forward.9} parent=11 // pred_fallthru
        _
    $region12: #{resnet_gcn_forward.9} parent=5 // pred_fallthru
      _
    %p270 = scmp.lt.s32.totalorder %s12, 8
    // Predicated region
    $region33: #{resnet_gcn_forward.9} parent=5 // pred_check
      %p271 = pneg %p270
    $region34: #{resnet_gcn_forward.9} parent=5 // pred_check_branch
      %273 = sbr.rel (%p271) target = $region36
    $region35: #{resnet_gcn_forward.9} parent=5 // pred_region
      // Predicated region
      $region37: #{resnet_gcn_forward.9} parent=35 // pred_check
        %p274 = pneg %p53
      $region38: #{resnet_gcn_forward.9} parent=35 // pred_check_branch
        %276 = sbr.rel (%p274) target = $region40
      $region39: #{resnet_gcn_forward.9} parent=35 // pred_region
        %s277 = smul.u32 32, %s19
        %p278 = scmp.lt.s32.totalorder %s277, 255
        %s279 = scalar_select %p278, %s277, 255
        %p280 = scmp.lt.s32.totalorder %s21, 0
        %s281 = scalar_select %p280, %s21, 0
        %s282 = sadd.s32 %s281, %s279
        %s283 = smul.addr %s282, 4
        %s284 = scalar_lea.vmem %s0, %s283
        %s285 = smul.u32 32, %s19
      $region40: #{resnet_gcn_forward.9} parent=35 // pred_fallthru
        _
    $region36: #{resnet_gcn_forward.9} parent=5 // pred_fallthru
      _
    %p286 = scmp.le.s32.totalorder 1, %s12
    %p287 = scmp.lt.s32.totalorder %s12, 9
    %p288 = pnand %p286, %p287
    %p289 = pneg %p288
    // Predicated region
    $region41: #{resnet_gcn_forward.9} parent=5 // pred_check
      _
    $region42: #{resnet_gcn_forward.9} parent=5 // pred_check_branch
      %291 = sbr.rel (%p288) target = $region44
    $region43: #{resnet_gcn_forward.9} parent=5 // pred_region
      %s292 = ssub.s32 %s12, 1
      %s293 = smul.u32 32, %s22
      %p294 = scmp.lt.s32.totalorder %s293, 255
      %s295 = scalar_select %p294, %s293, 255
      %p296 = scmp.lt.s32.totalorder %s24, 0
      %s297 = scalar_select %p296, %s24, 0
      %s298 = sadd.s32 %s297, %s295
      %s299 = smul.addr %s298, 4
      %s300 = scalar_lea.vmem %s0, %s299
      %p301 = pneg %p59
      %p302 = pneg %p56
      %s303 = smul.u32 16, %s24
      %p304 = scmp.lt.s32.totalorder %s303, 15
      %s305 = scalar_select %p304, %s303, 15
      %p306 = scmp.lt.s32.totalorder %s23, 0
      %s307 = scalar_select %p306, %s23, 0
      %s308 = sadd.s32 %s307, %s305
      %s309 = smul.addr %s308, 4
      %s310 = scalar_lea.vmem %s1, %s309
      %p311 = pneg %p87
      %p312 = pneg %p84
      %p313 = scmp.lt.s32.totalorder %s23, 0
      %s314 = scalar_select %p313, %s23, 0
      %s315 = scalar_lea.vmem %s2, %s314
      %p316 = pneg %p113
      %p317 = pneg %p110
      %p318 = scmp.lt.s32.totalorder %s23, 0
      %s319 = scalar_select %p318, %s23, 0
      %s320 = scalar_lea.vmem %s3, %s319
      %p321 = pneg %p139
      %p322 = pneg %p136
      %p323 = scmp.lt.s32.totalorder %s23, 0
      %s324 = scalar_select %p323, %s23, 0
      %s325 = scalar_lea.vmem %s4, %s324
      %p326 = pneg %p165
      %p327 = pneg %p162
      %p328 = scmp.lt.s32.totalorder %s23, 0
      %s329 = scalar_select %p328, %s23, 0
      %s330 = scalar_lea.vmem %s5, %s329
      %p331 = pneg %p191
      %p332 = pneg %p188
      %p333 = pneg %p219
      %p334 = pneg %p216
      %s335 = smul.u32 32, %s22
      %p336 = scmp.lt.s32.totalorder %s335, 255
      %s337 = scalar_select %p336, %s335, 255
      %p338 = scmp.lt.s32.totalorder %s23, 0
      %s339 = scalar_select %p338, %s23, 0
      %s340 = sadd.s32 %s339, %s337
      %s341 = smul.addr %s340, 4
      %s342 = scalar_lea.vmem %s6, %s341
      %s343 = smul.u32 32, %s22
      %p344 = scmp.lt.s32.totalorder %s343, 255
      %s345 = scalar_select %p344, %s343, 255
      %p346 = scmp.lt.s32.totalorder %s24, 0
      %s347 = scalar_select %p346, %s24, 0
      %s348 = sadd.s32 %s347, %s345
      %s349 = smul.addr %s348, 4
      %s350 = scalar_lea.vmem %s0, %s349
      %s351 = smul.u32 32, %s22
      %s352 = smul.u32 16, %s24
      %p353 = scmp.lt.s32.totalorder %s352, 15
      %s354 = scalar_select %p353, %s352, 15
      %p355 = scmp.lt.s32.totalorder %s23, 0
      %s356 = scalar_select %p355, %s23, 0
      %s357 = sadd.s32 %s356, %s354
      %s358 = smul.addr %s357, 4
      %s359 = scalar_lea.vmem %s1, %s358
      %s360 = smul.u32 16, %s24
      %p361 = scmp.lt.s32.totalorder %s23, 0
      %s362 = scalar_select %p361, %s23, 0
      %s363 = scalar_lea.vmem %s2, %s362
      %p364 = scmp.lt.s32.totalorder %s23, 0
      %s365 = scalar_select %p364, %s23, 0
      %s366 = scalar_lea.vmem %s3, %s365
      %p367 = scmp.lt.s32.totalorder %s23, 0
      %s368 = scalar_select %p367, %s23, 0
      %s369 = scalar_lea.vmem %s4, %s368
      %p370 = scmp.lt.s32.totalorder %s23, 0
      %s371 = scalar_select %p370, %s23, 0
      %s372 = scalar_lea.vmem %s5, %s371
      %s373 = smul.u32 32, %s22
      %p374 = scmp.lt.s32.totalorder %s373, 255
      %s375 = scalar_select %p374, %s373, 255
      %p376 = scmp.lt.s32.totalorder %s23, 0
      %s377 = scalar_select %p376, %s23, 0
      %s378 = sadd.s32 %s377, %s375
      %s379 = smul.addr %s378, 4
      %s380 = scalar_lea.vmem %s6, %s379
      %s381 = smul.u32 32, %s22
      %p383 = scmp.eq.s32.totalorder %s24, 0
      // Predicated region
      $region45: #{resnet_gcn_forward.9} parent=43 // pred_check
        %p384 = pneg %p383
      $region46: #{resnet_gcn_forward.9} parent=43 // pred_check_branch
        %386 = sbr.rel (%p384) target = $region48
      $region47: #{resnet_gcn_forward.9} parent=43 // pred_region
        %387 = vst [vmem:[#allocation2] sm:$0xff] 0.0
        %388 = vst [vmem:[#allocation2 + $0x8] sm:$0xff] 0.0
        %389 = vst [vmem:[#allocation2 + $0x10] sm:$0xff] 0.0
        %390 = vst [vmem:[#allocation2 + $0x18] sm:$0xff] 0.0
        %391 = vst [vmem:[#allocation2 + $0x20] sm:$0xff] 0.0
        %392 = vst [vmem:[#allocation2 + $0x28] sm:$0xff] 0.0
        %393 = vst [vmem:[#allocation2 + $0x30] sm:$0xff] 0.0
        %394 = vst [vmem:[#allocation2 + $0x38] sm:$0xff] 0.0
        %395 = vst [vmem:[#allocation2 + $0x40] sm:$0xff] 0.0
        %396 = vst [vmem:[#allocation2 + $0x48] sm:$0xff] 0.0
        %397 = vst [vmem:[#allocation2 + $0x50] sm:$0xff] 0.0
        %398 = vst [vmem:[#allocation2 + $0x58] sm:$0xff] 0.0
        %399 = vst [vmem:[#allocation2 + $0x60] sm:$0xff] 0.0
        %400 = vst [vmem:[#allocation2 + $0x68] sm:$0xff] 0.0
        %401 = vst [vmem:[#allocation2 + $0x70] sm:$0xff] 0.0
        %402 = vst [vmem:[#allocation2 + $0x78] sm:$0xff] 0.0
        %403 = vst [vmem:[#allocation2 + $0x80] sm:$0xff] 0.0
        %404 = vst [vmem:[#allocation2 + $0x88] sm:$0xff] 0.0
        %405 = vst [vmem:[#allocation2 + $0x90] sm:$0xff] 0.0
        %406 = vst [vmem:[#allocation2 + $0x98] sm:$0xff] 0.0
        %407 = vst [vmem:[#allocation2 + $0xa0] sm:$0xff] 0.0
        %408 = vst [vmem:[#allocation2 + $0xa8] sm:$0xff] 0.0
        %409 = vst [vmem:[#allocation2 + $0xb0] sm:$0xff] 0.0
        %410 = vst [vmem:[#allocation2 + $0xb8] sm:$0xff] 0.0
        %411 = vst [vmem:[#allocation2 + $0xc0] sm:$0xff] 0.0
        %412 = vst [vmem:[#allocation2 + $0xc8] sm:$0xff] 0.0
        %413 = vst [vmem:[#allocation2 + $0xd0] sm:$0xff] 0.0
        %414 = vst [vmem:[#allocation2 + $0xd8] sm:$0xff] 0.0
        %415 = vst [vmem:[#allocation2 + $0xe0] sm:$0xff] 0.0
        %416 = vst [vmem:[#allocation2 + $0xe8] sm:$0xff] 0.0
        %417 = vst [vmem:[#allocation2 + $0xf0] sm:$0xff] 0.0
        %418 = vst [vmem:[#allocation2 + $0xf8] sm:$0xff] 0.0
      $region48: #{resnet_gcn_forward.9} parent=43 // pred_fallthru
        _
      %v419 = vld [vmem:[#allocation2] sm:$0xff]
      %v420 = vld [vmem:[#allocation2 + $0x8] sm:$0xff]
      %v421 = vld [vmem:[#allocation2 + $0x10] sm:$0xff]
      %v422 = vld [vmem:[#allocation2 + $0x18] sm:$0xff]
      %v423 = vld [vmem:[#allocation2 + $0x20] sm:$0xff]
      %v424 = vld [vmem:[#allocation2 + $0x28] sm:$0xff]
      %v425 = vld [vmem:[#allocation2 + $0x30] sm:$0xff]
      %v426 = vld [vmem:[#allocation2 + $0x38] sm:$0xff]
      %v427 = vld [vmem:[#allocation2 + $0x40] sm:$0xff]
      %v428 = vld [vmem:[#allocation2 + $0x48] sm:$0xff]
      %v429 = vld [vmem:[#allocation2 + $0x50] sm:$0xff]
      %v430 = vld [vmem:[#allocation2 + $0x58] sm:$0xff]
      %v431 = vld [vmem:[#allocation2 + $0x60] sm:$0xff]
      %v432 = vld [vmem:[#allocation2 + $0x68] sm:$0xff]
      %v433 = vld [vmem:[#allocation2 + $0x70] sm:$0xff]
      %v434 = vld [vmem:[#allocation2 + $0x78] sm:$0xff]
      %v435 = vld [vmem:[#allocation2 + $0x80] sm:$0xff]
      %v436 = vld [vmem:[#allocation2 + $0x88] sm:$0xff]
      %v437 = vld [vmem:[#allocation2 + $0x90] sm:$0xff]
      %v438 = vld [vmem:[#allocation2 + $0x98] sm:$0xff]
      %v439 = vld [vmem:[#allocation2 + $0xa0] sm:$0xff]
      %v440 = vld [vmem:[#allocation2 + $0xa8] sm:$0xff]
      %v441 = vld [vmem:[#allocation2 + $0xb0] sm:$0xff]
      %v442 = vld [vmem:[#allocation2 + $0xb8] sm:$0xff]
      %v443 = vld [vmem:[#allocation2 + $0xc0] sm:$0xff]
      %v444 = vld [vmem:[#allocation2 + $0xc8] sm:$0xff]
      %v445 = vld [vmem:[#allocation2 + $0xd0] sm:$0xff]
      %v446 = vld [vmem:[#allocation2 + $0xd8] sm:$0xff]
      %v447 = vld [vmem:[#allocation2 + $0xe0] sm:$0xff]
      %v448 = vld [vmem:[#allocation2 + $0xe8] sm:$0xff]
      %v449 = vld [vmem:[#allocation2 + $0xf0] sm:$0xff]
      %v450 = vld [vmem:[#allocation2 + $0xf8] sm:$0xff]
      %v451 = vld [vmem:[%s350] sm:$0xf]
      %v452 = vld [vmem:[%s350 + $0x4] sm:$0xf]
      %v453 = vld [vmem:[%s350 + $0x8] sm:$0xf]
      %v454 = vld [vmem:[%s350 + $0xc] sm:$0xf]
      %v455 = vld [vmem:[%s350 + $0x10] sm:$0xf]
      %v456 = vld [vmem:[%s350 + $0x14] sm:$0xf]
      %v457 = vld [vmem:[%s350 + $0x18] sm:$0xf]
      %v458 = vld [vmem:[%s350 + $0x1c] sm:$0xf]
      %v459 = vld [vmem:[%s350 + $0x20] sm:$0xf]
      %v460 = vld [vmem:[%s350 + $0x24] sm:$0xf]
      %v461 = vld [vmem:[%s350 + $0x28] sm:$0xf]
      %v462 = vld [vmem:[%s350 + $0x2c] sm:$0xf]
      %v463 = vld [vmem:[%s350 + $0x30] sm:$0xf]
      %v464 = vld [vmem:[%s350 + $0x34] sm:$0xf]
      %v465 = vld [vmem:[%s350 + $0x38] sm:$0xf]
      %v466 = vld [vmem:[%s350 + $0x3c] sm:$0xf]
      %v467 = vld [vmem:[%s350 + $0x40] sm:$0xf]
      %v468 = vld [vmem:[%s350 + $0x44] sm:$0xf]
      %v469 = vld [vmem:[%s350 + $0x48] sm:$0xf]
      %v470 = vld [vmem:[%s350 + $0x4c] sm:$0xf]
      %v471 = vld [vmem:[%s350 + $0x50] sm:$0xf]
      %v472 = vld [vmem:[%s350 + $0x54] sm:$0xf]
      %v473 = vld [vmem:[%s350 + $0x58] sm:$0xf]
      %v474 = vld [vmem:[%s350 + $0x5c] sm:$0xf]
      %v475 = vld [vmem:[%s350 + $0x60] sm:$0xf]
      %v476 = vld [vmem:[%s350 + $0x64] sm:$0xf]
      %v477 = vld [vmem:[%s350 + $0x68] sm:$0xf]
      %v478 = vld [vmem:[%s350 + $0x6c] sm:$0xf]
      %v479 = vld [vmem:[%s350 + $0x70] sm:$0xf]
      %v480 = vld [vmem:[%s350 + $0x74] sm:$0xf]
      %v481 = vld [vmem:[%s350 + $0x78] sm:$0xf]
      %v482 = vld [vmem:[%s350 + $0x7c] sm:$0xf]
      %v483 = vld [vmem:[%s359] sm:$0xf]
      %v484 = vld [vmem:[%s359 + $0x4] sm:$0xf]
      %v485 = vld [vmem:[%s359 + $0x8] sm:$0xf]
      %v486 = vld [vmem:[%s359 + $0xc] sm:$0xf]
      %v487 = vld [vmem:[%s359 + $0x10] sm:$0xf]
      %v488 = vld [vmem:[%s359 + $0x14] sm:$0xf]
      %v489 = vld [vmem:[%s359 + $0x18] sm:$0xf]
      %v490 = vld [vmem:[%s359 + $0x1c] sm:$0xf]
      %v491 = vld [vmem:[%s359 + $0x20] sm:$0xf]
      %v492 = vld [vmem:[%s359 + $0x24] sm:$0xf]
      %v493 = vld [vmem:[%s359 + $0x28] sm:$0xf]
      %v494 = vld [vmem:[%s359 + $0x2c] sm:$0xf]
      %v495 = vld [vmem:[%s359 + $0x30] sm:$0xf]
      %v496 = vld [vmem:[%s359 + $0x34] sm:$0xf]
      %v497 = vld [vmem:[%s359 + $0x38] sm:$0xf]
      %v498 = vld [vmem:[%s359 + $0x3c] sm:$0xf]
      %v531 = vunpack.c.l.b16 %v451
      %v532 = vunpack.c.l.b16 %v452
      %v533 = vunpack.c.l.b16 %v453
      %v534 = vunpack.c.l.b16 %v454
      %v535 = vunpack.c.l.b16 %v455
      %v536 = vunpack.c.l.b16 %v456
      %v537 = vunpack.c.l.b16 %v457
      %v538 = vunpack.c.l.b16 %v458
      %v539 = vunpack.c.l.b16 %v459
      %v540 = vunpack.c.l.b16 %v460
      %v541 = vunpack.c.l.b16 %v461
      %v542 = vunpack.c.l.b16 %v462
      %v543 = vunpack.c.l.b16 %v463
      %v544 = vunpack.c.l.b16 %v464
      %v545 = vunpack.c.l.b16 %v465
      %v546 = vunpack.c.l.b16 %v466
      %v547 = vunpack.c.l.b16 %v467
      %v548 = vunpack.c.l.b16 %v468
      %v549 = vunpack.c.l.b16 %v469
      %v550 = vunpack.c.l.b16 %v470
      %v551 = vunpack.c.l.b16 %v471
      %v552 = vunpack.c.l.b16 %v472
      %v553 = vunpack.c.l.b16 %v473
      %v554 = vunpack.c.l.b16 %v474
      %v555 = vunpack.c.l.b16 %v475
      %v556 = vunpack.c.l.b16 %v476
      %v557 = vunpack.c.l.b16 %v477
      %v558 = vunpack.c.l.b16 %v478
      %v559 = vunpack.c.l.b16 %v479
      %v560 = vunpack.c.l.b16 %v480
      %v561 = vunpack.c.l.b16 %v481
      %v562 = vunpack.c.l.b16 %v482
      %v563 = vpack.c.b16 %v532, %v531
      %v564 = vpack.c.b16 %v534, %v533
      %v565 = vpack.c.b16 %v536, %v535
      %v566 = vpack.c.b16 %v538, %v537
      %v567 = vpack.c.b16 %v540, %v539
      %v568 = vpack.c.b16 %v542, %v541
      %v569 = vpack.c.b16 %v544, %v543
      %v570 = vpack.c.b16 %v546, %v545
      %v571 = vpack.c.b16 %v548, %v547
      %v572 = vpack.c.b16 %v550, %v549
      %v573 = vpack.c.b16 %v552, %v551
      %v574 = vpack.c.b16 %v554, %v553
      %v575 = vpack.c.b16 %v556, %v555
      %v576 = vpack.c.b16 %v558, %v557
      %v577 = vpack.c.b16 %v560, %v559
      %v578 = vpack.c.b16 %v562, %v561
      %v611 = vunpack.c.l.b16 %v483
      %v612 = vunpack.c.l.b16 %v484
      %v613 = vunpack.c.l.b16 %v485
      %v614 = vunpack.c.l.b16 %v486
      %v615 = vunpack.c.l.b16 %v487
      %v616 = vunpack.c.l.b16 %v488
      %v617 = vunpack.c.l.b16 %v489
      %v618 = vunpack.c.l.b16 %v490
      %v619 = vunpack.c.l.b16 %v491
      %v620 = vunpack.c.l.b16 %v492
      %v621 = vunpack.c.l.b16 %v493
      %v622 = vunpack.c.l.b16 %v494
      %v623 = vunpack.c.l.b16 %v495
      %v624 = vunpack.c.l.b16 %v496
      %v625 = vunpack.c.l.b16 %v497
      %v626 = vunpack.c.l.b16 %v498
      %v627 = vpack.c.b16 %v612, %v611
      %v628 = vpack.c.b16 %v614, %v613
      %v629 = vpack.c.b16 %v616, %v615
      %v630 = vpack.c.b16 %v618, %v617
      %v631 = vpack.c.b16 %v620, %v619
      %v632 = vpack.c.b16 %v622, %v621
      %v633 = vpack.c.b16 %v624, %v623
      %v634 = vpack.c.b16 %v626, %v625
      %643 = vmatprep.subr.bf16.mxu0 0
      %644 = vmatpush1.bf16.msra.mxu0 %v627
      %645 = vmatprep.subr.bf16.mxu0 0
      %646 = vmatpush1.bf16.msra.mxu0 %v628
      %647 = vmatprep.subr.bf16.mxu0 0
      %648 = vmatpush1.bf16.msra.mxu0 %v629
      %649 = vmatprep.subr.bf16.mxu0 0
      %650 = vmatpush1.bf16.msra.mxu0 %v630
      %651 = vmatprep.subr.bf16.mxu0 0
      %652 = vmatpush1.bf16.msra.mxu0 %v631
      %653 = vmatprep.subr.bf16.mxu0 0
      %654 = vmatpush1.bf16.msra.mxu0 %v632
      %655 = vmatprep.subr.bf16.mxu0 0
      %656 = vmatpush1.bf16.msra.mxu0 %v633
      %657 = vmatprep.subr.bf16.mxu0 0
      %658 = vmatpush1.bf16.msra.mxu0 %v634
      %659 = vmatprep.subr.bf16.mxu0 0
      %660 = vmatpush1.bf16.msra.mxu0 0
      %661 = vmatprep.subr.bf16.mxu0 0
      %662 = vmatpush1.bf16.msra.mxu0 0
      %663 = vmatprep.subr.bf16.mxu0 0
      %664 = vmatpush1.bf16.msra.mxu0 0
      %665 = vmatprep.subr.bf16.mxu0 0
      %666 = vmatpush1.bf16.msra.mxu0 0
      %667 = vmatprep.subr.bf16.mxu0 0
      %668 = vmatpush1.bf16.msra.mxu0 0
      %669 = vmatprep.subr.bf16.mxu0 0
      %670 = vmatpush1.bf16.msra.mxu0 0
      %671 = vmatprep.subr.bf16.mxu0 0
      %672 = vmatpush1.bf16.msra.mxu0 0
      %673 = vmatprep.subr.bf16.mxu0 0
      %674 = vmatpush1.bf16.msra.mxu0 0
      %675 = vmatprep.mubr.bf16.mxu0 0
      %676 = vmatmul.mubr.bf16.gmra.mrb[0].mxu0 %v563
      %v677 = vpop.f32.mrb[0].mxu0
      %v678 = vadd.f32 0.0, %v677
      %v679 = vpop.f32.mrb[0].mxu0
      %v680 = vpop.f32.mrb[0].mxu0
      %v681 = vadd.f32 0.0, %v680
      %v682 = vpop.f32.mrb[0].mxu0
      %683 = vmatprep.mubr.bf16.mxu0 0
      %684 = vmatmul.mubr.bf16.gmra.mrb[0].mxu0 %v564
      %v685 = vpop.f32.mrb[0].mxu0
      %v686 = vadd.f32 0.0, %v685
      %v687 = vpop.f32.mrb[0].mxu0
      %v688 = vpop.f32.mrb[0].mxu0
      %v689 = vadd.f32 0.0, %v688
      %v690 = vpop.f32.mrb[0].mxu0
      %691 = vmatprep.mubr.bf16.mxu0 0
      %692 = vmatmul.mubr.bf16.gmra.mrb[0].mxu0 %v565
      %v693 = vpop.f32.mrb[0].mxu0
      %v694 = vadd.f32 0.0, %v693
      %v695 = vpop.f32.mrb[0].mxu0
      %v696 = vpop.f32.mrb[0].mxu0
      %v697 = vadd.f32 0.0, %v696
      %v698 = vpop.f32.mrb[0].mxu0
      %699 = vmatprep.mubr.bf16.mxu0 0
      %700 = vmatmul.mubr.bf16.gmra.mrb[0].mxu0 %v566
      %v701 = vpop.f32.mrb[0].mxu0
      %v702 = vadd.f32 0.0, %v701
      %v703 = vpop.f32.mrb[0].mxu0
      %v704 = vpop.f32.mrb[0].mxu0
      %v705 = vadd.f32 0.0, %v704
      %v706 = vpop.f32.mrb[0].mxu0
      %707 = vmatprep.mubr.bf16.mxu0 0
      %708 = vmatmul.mubr.bf16.gmra.mrb[0].mxu0 %v567
      %v709 = vpop.f32.mrb[0].mxu0
      %v710 = vadd.f32 0.0, %v709
      %v711 = vpop.f32.mrb[0].mxu0
      %v712 = vpop.f32.mrb[0].mxu0
      %v713 = vadd.f32 0.0, %v712
      %v714 = vpop.f32.mrb[0].mxu0
      %715 = vmatprep.mubr.bf16.mxu0 0
      %716 = vmatmul.mubr.bf16.gmra.mrb[0].mxu0 %v568
      %v717 = vpop.f32.mrb[0].mxu0
      %v718 = vadd.f32 0.0, %v717
      %v719 = vpop.f32.mrb[0].mxu0
      %v720 = vpop.f32.mrb[0].mxu0
      %v721 = vadd.f32 0.0, %v720
      %v722 = vpop.f32.mrb[0].mxu0
      %723 = vmatprep.mubr.bf16.mxu0 0
      %724 = vmatmul.mubr.bf16.gmra.mrb[0].mxu0 %v569
      %v725 = vpop.f32.mrb[0].mxu0
      %v726 = vadd.f32 0.0, %v725
      %v727 = vpop.f32.mrb[0].mxu0
      %v728 = vpop.f32.mrb[0].mxu0
      %v729 = vadd.f32 0.0, %v728
      %v730 = vpop.f32.mrb[0].mxu0
      %731 = vmatprep.mubr.bf16.mxu0 0
      %732 = vmatmul.mubr.bf16.gmra.mrb[0].mxu0 %v570
      %v733 = vpop.f32.mrb[0].mxu0
      %v734 = vadd.f32 0.0, %v733
      %v735 = vpop.f32.mrb[0].mxu0
      %v736 = vpop.f32.mrb[0].mxu0
      %v737 = vadd.f32 0.0, %v736
      %v738 = vpop.f32.mrb[0].mxu0
      %739 = vmatprep.mubr.bf16.mxu0 0
      %740 = vmatmul.mubr.bf16.gmra.mrb[0].mxu0 %v571
      %v741 = vpop.f32.mrb[0].mxu0
      %v742 = vadd.f32 0.0, %v741
      %v743 = vpop.f32.mrb[0].mxu0
      %v744 = vpop.f32.mrb[0].mxu0
      %v745 = vadd.f32 0.0, %v744
      %v746 = vpop.f32.mrb[0].mxu0
      %747 = vmatprep.mubr.bf16.mxu0 0
      %748 = vmatmul.mubr.bf16.gmra.mrb[0].mxu0 %v572
      %v749 = vpop.f32.mrb[0].mxu0
      %v750 = vadd.f32 0.0, %v749
      %v751 = vpop.f32.mrb[0].mxu0
      %v752 = vpop.f32.mrb[0].mxu0
      %v753 = vadd.f32 0.0, %v752
      %v754 = vpop.f32.mrb[0].mxu0
      %755 = vmatprep.mubr.bf16.mxu0 0
      %756 = vmatmul.mubr.bf16.gmra.mrb[0].mxu0 %v573
      %v757 = vpop.f32.mrb[0].mxu0
      %v758 = vadd.f32 0.0, %v757
      %v759 = vpop.f32.mrb[0].mxu0
      %v760 = vpop.f32.mrb[0].mxu0
      %v761 = vadd.f32 0.0, %v760
      %v762 = vpop.f32.mrb[0].mxu0
      %763 = vmatprep.mubr.bf16.mxu0 0
      %764 = vmatmul.mubr.bf16.gmra.mrb[0].mxu0 %v574
      %v765 = vpop.f32.mrb[0].mxu0
      %v766 = vadd.f32 0.0, %v765
      %v767 = vpop.f32.mrb[0].mxu0
      %v768 = vpop.f32.mrb[0].mxu0
      %v769 = vadd.f32 0.0, %v768
      %v770 = vpop.f32.mrb[0].mxu0
      %771 = vmatprep.mubr.bf16.mxu0 0
      %772 = vmatmul.mubr.bf16.gmra.mrb[0].mxu0 %v575
      %v773 = vpop.f32.mrb[0].mxu0
      %v774 = vadd.f32 0.0, %v773
      %v775 = vpop.f32.mrb[0].mxu0
      %v776 = vpop.f32.mrb[0].mxu0
      %v777 = vadd.f32 0.0, %v776
      %v778 = vpop.f32.mrb[0].mxu0
      %779 = vmatprep.mubr.bf16.mxu0 0
      %780 = vmatmul.mubr.bf16.gmra.mrb[0].mxu0 %v576
      %v781 = vpop.f32.mrb[0].mxu0
      %v782 = vadd.f32 0.0, %v781
      %v783 = vpop.f32.mrb[0].mxu0
      %v784 = vpop.f32.mrb[0].mxu0
      %v785 = vadd.f32 0.0, %v784
      %v786 = vpop.f32.mrb[0].mxu0
      %787 = vmatprep.mubr.bf16.mxu0 0
      %788 = vmatmul.mubr.bf16.gmra.mrb[0].mxu0 %v577
      %v789 = vpop.f32.mrb[0].mxu0
      %v790 = vadd.f32 0.0, %v789
      %v791 = vpop.f32.mrb[0].mxu0
      %v792 = vpop.f32.mrb[0].mxu0
      %v793 = vadd.f32 0.0, %v792
      %v794 = vpop.f32.mrb[0].mxu0
      %795 = vmatprep.mubr.bf16.mxu0 0
      %796 = vmatmul.mubr.bf16.gmra.mrb[0].mxu0 %v578
      %v797 = vpop.f32.mrb[0].mxu0
      %v798 = vadd.f32 0.0, %v797
      %v799 = vpop.f32.mrb[0].mxu0
      %v800 = vpop.f32.mrb[0].mxu0
      %v801 = vadd.f32 0.0, %v800
      %v802 = vpop.f32.mrb[0].mxu0
      %803 = vdwg.mxu0
      %v804 = vadd.f32 %v419, %v678
      %v805 = vadd.f32 %v420, %v681
      %v806 = vadd.f32 %v421, %v686
      %v807 = vadd.f32 %v422, %v689
      %v808 = vadd.f32 %v423, %v694
      %v809 = vadd.f32 %v424, %v697
      %v810 = vadd.f32 %v425, %v702
      %v811 = vadd.f32 %v426, %v705
      %v812 = vadd.f32 %v427, %v710
      %v813 = vadd.f32 %v428, %v713
      %v814 = vadd.f32 %v429, %v718
      %v815 = vadd.f32 %v430, %v721
      %v816 = vadd.f32 %v431, %v726
      %v817 = vadd.f32 %v432, %v729
      %v818 = vadd.f32 %v433, %v734
      %v819 = vadd.f32 %v434, %v737
      %v820 = vadd.f32 %v435, %v742
      %v821 = vadd.f32 %v436, %v745
      %v822 = vadd.f32 %v437, %v750
      %v823 = vadd.f32 %v438, %v753
      %v824 = vadd.f32 %v439, %v758
      %v825 = vadd.f32 %v440, %v761
      %v826 = vadd.f32 %v441, %v766
      %v827 = vadd.f32 %v442, %v769
      %v828 = vadd.f32 %v443, %v774
      %v829 = vadd.f32 %v444, %v777
      %v830 = vadd.f32 %v445, %v782
      %v831 = vadd.f32 %v446, %v785
      %v832 = vadd.f32 %v447, %v790
      %v833 = vadd.f32 %v448, %v793
      %v834 = vadd.f32 %v449, %v798
      %v835 = vadd.f32 %v450, %v801
      %836 = vst [vmem:[#allocation2] sm:$0xff] %v804
      %837 = vst [vmem:[#allocation2 + $0x8] sm:$0xff] %v805
      %838 = vst [vmem:[#allocation2 + $0x10] sm:$0xff] %v806
      %839 = vst [vmem:[#allocation2 + $0x18] sm:$0xff] %v807
      %840 = vst [vmem:[#allocation2 + $0x20] sm:$0xff] %v808
      %841 = vst [vmem:[#allocation2 + $0x28] sm:$0xff] %v809
      %842 = vst [vmem:[#allocation2 + $0x30] sm:$0xff] %v810
      %843 = vst [vmem:[#allocation2 + $0x38] sm:$0xff] %v811
      %844 = vst [vmem:[#allocation2 + $0x40] sm:$0xff] %v812
      %845 = vst [vmem:[#allocation2 + $0x48] sm:$0xff] %v813
      %846 = vst [vmem:[#allocation2 + $0x50] sm:$0xff] %v814
      %847 = vst [vmem:[#allocation2 + $0x58] sm:$0xff] %v815
      %848 = vst [vmem:[#allocation2 + $0x60] sm:$0xff] %v816
      %849 = vst [vmem:[#allocation2 + $0x68] sm:$0xff] %v817
      %850 = vst [vmem:[#allocation2 + $0x70] sm:$0xff] %v818
      %851 = vst [vmem:[#allocation2 + $0x78] sm:$0xff] %v819
      %852 = vst [vmem:[#allocation2 + $0x80] sm:$0xff] %v820
      %853 = vst [vmem:[#allocation2 + $0x88] sm:$0xff] %v821
      %854 = vst [vmem:[#allocation2 + $0x90] sm:$0xff] %v822
      %855 = vst [vmem:[#allocation2 + $0x98] sm:$0xff] %v823
      %856 = vst [vmem:[#allocation2 + $0xa0] sm:$0xff] %v824
      %857 = vst [vmem:[#allocation2 + $0xa8] sm:$0xff] %v825
      %858 = vst [vmem:[#allocation2 + $0xb0] sm:$0xff] %v826
      %859 = vst [vmem:[#allocation2 + $0xb8] sm:$0xff] %v827
      %860 = vst [vmem:[#allocation2 + $0xc0] sm:$0xff] %v828
      %861 = vst [vmem:[#allocation2 + $0xc8] sm:$0xff] %v829
      %862 = vst [vmem:[#allocation2 + $0xd0] sm:$0xff] %v830
      %863 = vst [vmem:[#allocation2 + $0xd8] sm:$0xff] %v831
      %864 = vst [vmem:[#allocation2 + $0xe0] sm:$0xff] %v832
      %865 = vst [vmem:[#allocation2 + $0xe8] sm:$0xff] %v833
      %866 = vst [vmem:[#allocation2 + $0xf0] sm:$0xff] %v834
      %867 = vst [vmem:[#allocation2 + $0xf8] sm:$0xff] %v835
      // Predicated region
      $region49: #{resnet_gcn_forward.9} parent=43 // pred_check
        %p868 = pneg %p383
      $region50: #{resnet_gcn_forward.9} parent=43 // pred_check_branch
        %870 = sbr.rel (%p868) target = $region52
      $region51: #{resnet_gcn_forward.9} parent=43 // pred_region
        %v871 = vld [vmem:[#allocation2] sm:$0xff]
        %v872 = vld [vmem:[#allocation2 + $0x8] sm:$0xff]
        %v873 = vld [vmem:[#allocation2 + $0x10] sm:$0xff]
        %v874 = vld [vmem:[#allocation2 + $0x18] sm:$0xff]
        %v875 = vld [vmem:[#allocation2 + $0x20] sm:$0xff]
        %v876 = vld [vmem:[#allocation2 + $0x28] sm:$0xff]
        %v877 = vld [vmem:[#allocation2 + $0x30] sm:$0xff]
        %v878 = vld [vmem:[#allocation2 + $0x38] sm:$0xff]
        %v879 = vld [vmem:[#allocation2 + $0x40] sm:$0xff]
        %v880 = vld [vmem:[#allocation2 + $0x48] sm:$0xff]
        %v881 = vld [vmem:[#allocation2 + $0x50] sm:$0xff]
        %v882 = vld [vmem:[#allocation2 + $0x58] sm:$0xff]
        %v883 = vld [vmem:[#allocation2 + $0x60] sm:$0xff]
        %v884 = vld [vmem:[#allocation2 + $0x68] sm:$0xff]
        %v885 = vld [vmem:[#allocation2 + $0x70] sm:$0xff]
        %v886 = vld [vmem:[#allocation2 + $0x78] sm:$0xff]
        %v887 = vld [vmem:[#allocation2 + $0x80] sm:$0xff]
        %v888 = vld [vmem:[#allocation2 + $0x88] sm:$0xff]
        %v889 = vld [vmem:[#allocation2 + $0x90] sm:$0xff]
        %v890 = vld [vmem:[#allocation2 + $0x98] sm:$0xff]
        %v891 = vld [vmem:[#allocation2 + $0xa0] sm:$0xff]
        %v892 = vld [vmem:[#allocation2 + $0xa8] sm:$0xff]
        %v893 = vld [vmem:[#allocation2 + $0xb0] sm:$0xff]
        %v894 = vld [vmem:[#allocation2 + $0xb8] sm:$0xff]
        %v895 = vld [vmem:[#allocation2 + $0xc0] sm:$0xff]
        %v896 = vld [vmem:[#allocation2 + $0xc8] sm:$0xff]
        %v897 = vld [vmem:[#allocation2 + $0xd0] sm:$0xff]
        %v898 = vld [vmem:[#allocation2 + $0xd8] sm:$0xff]
        %v899 = vld [vmem:[#allocation2 + $0xe0] sm:$0xff]
        %v900 = vld [vmem:[#allocation2 + $0xe8] sm:$0xff]
        %v901 = vld [vmem:[#allocation2 + $0xf0] sm:$0xff]
        %v902 = vld [vmem:[#allocation2 + $0xf8] sm:$0xff]
        %v903 = vld [vmem:[%s363] sm:$0x1]
        %v905 = vlaneseq
        %v906 = vshrl.u32 %v905, 7
        %v907 = vsub.s32 0, %v906
        %v908 = vrot.slane %v903, %v907
        %v910 = vmul.f32 %v871, %v908
        %v911 = vmul.f32 %v872, %v908
        %v912 = vmul.f32 %v873, %v908
        %v913 = vmul.f32 %v874, %v908
        %v914 = vmul.f32 %v875, %v908
        %v915 = vmul.f32 %v876, %v908
        %v916 = vmul.f32 %v877, %v908
        %v917 = vmul.f32 %v878, %v908
        %v918 = vmul.f32 %v879, %v908
        %v919 = vmul.f32 %v880, %v908
        %v920 = vmul.f32 %v881, %v908
        %v921 = vmul.f32 %v882, %v908
        %v922 = vmul.f32 %v883, %v908
        %v923 = vmul.f32 %v884, %v908
        %v924 = vmul.f32 %v885, %v908
        %v925 = vmul.f32 %v886, %v908
        %v926 = vmul.f32 %v887, %v908
        %v927 = vmul.f32 %v888, %v908
        %v928 = vmul.f32 %v889, %v908
        %v929 = vmul.f32 %v890, %v908
        %v930 = vmul.f32 %v891, %v908
        %v931 = vmul.f32 %v892, %v908
        %v932 = vmul.f32 %v893, %v908
        %v933 = vmul.f32 %v894, %v908
        %v934 = vmul.f32 %v895, %v908
        %v935 = vmul.f32 %v896, %v908
        %v936 = vmul.f32 %v897, %v908
        %v937 = vmul.f32 %v898, %v908
        %v938 = vmul.f32 %v899, %v908
        %v939 = vmul.f32 %v900, %v908
        %v940 = vmul.f32 %v901, %v908
        %v941 = vmul.f32 %v902, %v908
        %v942 = vld [vmem:[%s366] sm:$0x1]
        %v944 = vlaneseq
        %v945 = vshrl.u32 %v944, 7
        %v946 = vsub.s32 0, %v945
        %v947 = vrot.slane %v942, %v946
        %v949 = vadd.f32 %v910, %v947
        %v950 = vadd.f32 %v911, %v947
        %v951 = vadd.f32 %v912, %v947
        %v952 = vadd.f32 %v913, %v947
        %v953 = vadd.f32 %v914, %v947
        %v954 = vadd.f32 %v915, %v947
        %v955 = vadd.f32 %v916, %v947
        %v956 = vadd.f32 %v917, %v947
        %v957 = vadd.f32 %v918, %v947
        %v958 = vadd.f32 %v919, %v947
        %v959 = vadd.f32 %v920, %v947
        %v960 = vadd.f32 %v921, %v947
        %v961 = vadd.f32 %v922, %v947
        %v962 = vadd.f32 %v923, %v947
        %v963 = vadd.f32 %v924, %v947
        %v964 = vadd.f32 %v925, %v947
        %v965 = vadd.f32 %v926, %v947
        %v966 = vadd.f32 %v927, %v947
        %v967 = vadd.f32 %v928, %v947
        %v968 = vadd.f32 %v929, %v947
        %v969 = vadd.f32 %v930, %v947
        %v970 = vadd.f32 %v931, %v947
        %v971 = vadd.f32 %v932, %v947
        %v972 = vadd.f32 %v933, %v947
        %v973 = vadd.f32 %v934, %v947
        %v974 = vadd.f32 %v935, %v947
        %v975 = vadd.f32 %v936, %v947
        %v976 = vadd.f32 %v937, %v947
        %v977 = vadd.f32 %v938, %v947
        %v978 = vadd.f32 %v939, %v947
        %v979 = vadd.f32 %v940, %v947
        %v980 = vadd.f32 %v941, %v947
        %v981 = vld [vmem:[%s369] sm:$0x1]
        %v983 = vlaneseq
        %v984 = vshrl.u32 %v983, 7
        %v985 = vsub.s32 0, %v984
        %v986 = vrot.slane %v981, %v985
        %v988 = vmul.f32 %v949, %v986
        %v989 = vmul.f32 %v950, %v986
        %v990 = vmul.f32 %v951, %v986
        %v991 = vmul.f32 %v952, %v986
        %v992 = vmul.f32 %v953, %v986
        %v993 = vmul.f32 %v954, %v986
        %v994 = vmul.f32 %v955, %v986
        %v995 = vmul.f32 %v956, %v986
        %v996 = vmul.f32 %v957, %v986
        %v997 = vmul.f32 %v958, %v986
        %v998 = vmul.f32 %v959, %v986
        %v999 = vmul.f32 %v960, %v986
        %v1000 = vmul.f32 %v961, %v986
        %v1001 = vmul.f32 %v962, %v986
        %v1002 = vmul.f32 %v963, %v986
        %v1003 = vmul.f32 %v964, %v986
        %v1004 = vmul.f32 %v965, %v986
        %v1005 = vmul.f32 %v966, %v986
        %v1006 = vmul.f32 %v967, %v986
        %v1007 = vmul.f32 %v968, %v986
        %v1008 = vmul.f32 %v969, %v986
        %v1009 = vmul.f32 %v970, %v986
        %v1010 = vmul.f32 %v971, %v986
        %v1011 = vmul.f32 %v972, %v986
        %v1012 = vmul.f32 %v973, %v986
        %v1013 = vmul.f32 %v974, %v986
        %v1014 = vmul.f32 %v975, %v986
        %v1015 = vmul.f32 %v976, %v986
        %v1016 = vmul.f32 %v977, %v986
        %v1017 = vmul.f32 %v978, %v986
        %v1018 = vmul.f32 %v979, %v986
        %v1019 = vmul.f32 %v980, %v986
        %v1020 = vld [vmem:[%s372] sm:$0x1]
        %v1022 = vlaneseq
        %v1023 = vshrl.u32 %v1022, 7
        %v1024 = vsub.s32 0, %v1023
        %v1025 = vrot.slane %v1020, %v1024
        %v1027 = vadd.f32 %v988, %v1025
        %v1028 = vadd.f32 %v989, %v1025
        %v1029 = vadd.f32 %v990, %v1025
        %v1030 = vadd.f32 %v991, %v1025
        %v1031 = vadd.f32 %v992, %v1025
        %v1032 = vadd.f32 %v993, %v1025
        %v1033 = vadd.f32 %v994, %v1025
        %v1034 = vadd.f32 %v995, %v1025
        %v1035 = vadd.f32 %v996, %v1025
        %v1036 = vadd.f32 %v997, %v1025
        %v1037 = vadd.f32 %v998, %v1025
        %v1038 = vadd.f32 %v999, %v1025
        %v1039 = vadd.f32 %v1000, %v1025
        %v1040 = vadd.f32 %v1001, %v1025
        %v1041 = vadd.f32 %v1002, %v1025
        %v1042 = vadd.f32 %v1003, %v1025
        %v1043 = vadd.f32 %v1004, %v1025
        %v1044 = vadd.f32 %v1005, %v1025
        %v1045 = vadd.f32 %v1006, %v1025
        %v1046 = vadd.f32 %v1007, %v1025
        %v1047 = vadd.f32 %v1008, %v1025
        %v1048 = vadd.f32 %v1009, %v1025
        %v1049 = vadd.f32 %v1010, %v1025
        %v1050 = vadd.f32 %v1011, %v1025
        %v1051 = vadd.f32 %v1012, %v1025
        %v1052 = vadd.f32 %v1013, %v1025
        %v1053 = vadd.f32 %v1014, %v1025
        %v1054 = vadd.f32 %v1015, %v1025
        %v1055 = vadd.f32 %v1016, %v1025
        %v1056 = vadd.f32 %v1017, %v1025
        %v1057 = vadd.f32 %v1018, %v1025
        %v1058 = vadd.f32 %v1019, %v1025
        %v1059 = vmax.f32 %v1027, 0.0
        %v1060 = vmax.f32 %v1028, 0.0
        %v1061 = vmax.f32 %v1029, 0.0
        %v1062 = vmax.f32 %v1030, 0.0
        %v1063 = vmax.f32 %v1031, 0.0
        %v1064 = vmax.f32 %v1032, 0.0
        %v1065 = vmax.f32 %v1033, 0.0
        %v1066 = vmax.f32 %v1034, 0.0
        %v1067 = vmax.f32 %v1035, 0.0
        %v1068 = vmax.f32 %v1036, 0.0
        %v1069 = vmax.f32 %v1037, 0.0
        %v1070 = vmax.f32 %v1038, 0.0
        %v1071 = vmax.f32 %v1039, 0.0
        %v1072 = vmax.f32 %v1040, 0.0
        %v1073 = vmax.f32 %v1041, 0.0
        %v1074 = vmax.f32 %v1042, 0.0
        %v1075 = vmax.f32 %v1043, 0.0
        %v1076 = vmax.f32 %v1044, 0.0
        %v1077 = vmax.f32 %v1045, 0.0
        %v1078 = vmax.f32 %v1046, 0.0
        %v1079 = vmax.f32 %v1047, 0.0
        %v1080 = vmax.f32 %v1048, 0.0
        %v1081 = vmax.f32 %v1049, 0.0
        %v1082 = vmax.f32 %v1050, 0.0
        %v1083 = vmax.f32 %v1051, 0.0
        %v1084 = vmax.f32 %v1052, 0.0
        %v1085 = vmax.f32 %v1053, 0.0
        %v1086 = vmax.f32 %v1054, 0.0
        %v1087 = vmax.f32 %v1055, 0.0
        %v1088 = vmax.f32 %v1056, 0.0
        %v1089 = vmax.f32 %v1057, 0.0
        %v1090 = vmax.f32 %v1058, 0.0
        %v1091 = vpack.c.bf16 %v1060, %v1059
        %v1092 = vpack.c.bf16 %v1062, %v1061
        %v1093 = vpack.c.bf16 %v1064, %v1063
        %v1094 = vpack.c.bf16 %v1066, %v1065
        %v1095 = vpack.c.bf16 %v1068, %v1067
        %v1096 = vpack.c.bf16 %v1070, %v1069
        %v1097 = vpack.c.bf16 %v1072, %v1071
        %v1098 = vpack.c.bf16 %v1074, %v1073
        %v1099 = vpack.c.bf16 %v1076, %v1075
        %v1100 = vpack.c.bf16 %v1078, %v1077
        %v1101 = vpack.c.bf16 %v1080, %v1079
        %v1102 = vpack.c.bf16 %v1082, %v1081
        %v1103 = vpack.c.bf16 %v1084, %v1083
        %v1104 = vpack.c.bf16 %v1086, %v1085
        %v1105 = vpack.c.bf16 %v1088, %v1087
        %v1106 = vpack.c.bf16 %v1090, %v1089
        %v1123 = vunpack.c.l.b16 %v1091
        %v1124 = vunpack.c.h.b16 %v1091
        %v1125 = vunpack.c.l.b16 %v1092
        %v1126 = vunpack.c.h.b16 %v1092
        %v1127 = vunpack.c.l.b16 %v1093
        %v1128 = vunpack.c.h.b16 %v1093
        %v1129 = vunpack.c.l.b16 %v1094
        %v1130 = vunpack.c.h.b16 %v1094
        %v1131 = vunpack.c.l.b16 %v1095
        %v1132 = vunpack.c.h.b16 %v1095
        %v1133 = vunpack.c.l.b16 %v1096
        %v1134 = vunpack.c.h.b16 %v1096
        %v1135 = vunpack.c.l.b16 %v1097
        %v1136 = vunpack.c.h.b16 %v1097
        %v1137 = vunpack.c.l.b16 %v1098
        %v1138 = vunpack.c.h.b16 %v1098
        %v1139 = vunpack.c.l.b16 %v1099
        %v1140 = vunpack.c.h.b16 %v1099
        %v1141 = vunpack.c.l.b16 %v1100
        %v1142 = vunpack.c.h.b16 %v1100
        %v1143 = vunpack.c.l.b16 %v1101
        %v1144 = vunpack.c.h.b16 %v1101
        %v1145 = vunpack.c.l.b16 %v1102
        %v1146 = vunpack.c.h.b16 %v1102
        %v1147 = vunpack.c.l.b16 %v1103
        %v1148 = vunpack.c.h.b16 %v1103
        %v1149 = vunpack.c.l.b16 %v1104
        %v1150 = vunpack.c.h.b16 %v1104
        %v1151 = vunpack.c.l.b16 %v1105
        %v1152 = vunpack.c.h.b16 %v1105
        %v1153 = vunpack.c.l.b16 %v1106
        %v1154 = vunpack.c.h.b16 %v1106
        %v1155 = vpack.c.b16 %v1123, %v1123
        %v1156 = vpack.c.b16 %v1124, %v1124
        %v1157 = vpack.c.b16 %v1125, %v1125
        %v1158 = vpack.c.b16 %v1126, %v1126
        %v1159 = vpack.c.b16 %v1127, %v1127
        %v1160 = vpack.c.b16 %v1128, %v1128
        %v1161 = vpack.c.b16 %v1129, %v1129
        %v1162 = vpack.c.b16 %v1130, %v1130
        %v1163 = vpack.c.b16 %v1131, %v1131
        %v1164 = vpack.c.b16 %v1132, %v1132
        %v1165 = vpack.c.b16 %v1133, %v1133
        %v1166 = vpack.c.b16 %v1134, %v1134
        %v1167 = vpack.c.b16 %v1135, %v1135
        %v1168 = vpack.c.b16 %v1136, %v1136
        %v1169 = vpack.c.b16 %v1137, %v1137
        %v1170 = vpack.c.b16 %v1138, %v1138
        %v1171 = vpack.c.b16 %v1139, %v1139
        %v1172 = vpack.c.b16 %v1140, %v1140
        %v1173 = vpack.c.b16 %v1141, %v1141
        %v1174 = vpack.c.b16 %v1142, %v1142
        %v1175 = vpack.c.b16 %v1143, %v1143
        %v1176 = vpack.c.b16 %v1144, %v1144
        %v1177 = vpack.c.b16 %v1145, %v1145
        %v1178 = vpack.c.b16 %v1146, %v1146
        %v1179 = vpack.c.b16 %v1147, %v1147
        %v1180 = vpack.c.b16 %v1148, %v1148
        %v1181 = vpack.c.b16 %v1149, %v1149
        %v1182 = vpack.c.b16 %v1150, %v1150
        %v1183 = vpack.c.b16 %v1151, %v1151
        %v1184 = vpack.c.b16 %v1152, %v1152
        %v1185 = vpack.c.b16 %v1153, %v1153
        %v1186 = vpack.c.b16 %v1154, %v1154
        %1219 = vst [vmem:[%s380] sm:$0xf] %v1155
        %1220 = vst [vmem:[%s380 + $0x4] sm:$0xf] %v1156
        %1221 = vst [vmem:[%s380 + $0x8] sm:$0xf] %v1157
        %1222 = vst [vmem:[%s380 + $0xc] sm:$0xf] %v1158
        %1223 = vst [vmem:[%s380 + $0x10] sm:$0xf] %v1159
        %1224 = vst [vmem:[%s380 + $0x14] sm:$0xf] %v1160
        %1225 = vst [vmem:[%s380 + $0x18] sm:$0xf] %v1161
        %1226 = vst [vmem:[%s380 + $0x1c] sm:$0xf] %v1162
        %1227 = vst [vmem:[%s380 + $0x20] sm:$0xf] %v1163
        %1228 = vst [vmem:[%s380 + $0x24] sm:$0xf] %v1164
        %1229 = vst [vmem:[%s380 + $0x28] sm:$0xf] %v1165
        %1230 = vst [vmem:[%s380 + $0x2c] sm:$0xf] %v1166
        %1231 = vst [vmem:[%s380 + $0x30] sm:$0xf] %v1167
        %1232 = vst [vmem:[%s380 + $0x34] sm:$0xf] %v1168
        %1233 = vst [vmem:[%s380 + $0x38] sm:$0xf] %v1169
        %1234 = vst [vmem:[%s380 + $0x3c] sm:$0xf] %v1170
        %1235 = vst [vmem:[%s380 + $0x40] sm:$0xf] %v1171
        %1236 = vst [vmem:[%s380 + $0x44] sm:$0xf] %v1172
        %1237 = vst [vmem:[%s380 + $0x48] sm:$0xf] %v1173
        %1238 = vst [vmem:[%s380 + $0x4c] sm:$0xf] %v1174
        %1239 = vst [vmem:[%s380 + $0x50] sm:$0xf] %v1175
        %1240 = vst [vmem:[%s380 + $0x54] sm:$0xf] %v1176
        %1241 = vst [vmem:[%s380 + $0x58] sm:$0xf] %v1177
        %1242 = vst [vmem:[%s380 + $0x5c] sm:$0xf] %v1178
        %1243 = vst [vmem:[%s380 + $0x60] sm:$0xf] %v1179
        %1244 = vst [vmem:[%s380 + $0x64] sm:$0xf] %v1180
        %1245 = vst [vmem:[%s380 + $0x68] sm:$0xf] %v1181
        %1246 = vst [vmem:[%s380 + $0x6c] sm:$0xf] %v1182
        %1247 = vst [vmem:[%s380 + $0x70] sm:$0xf] %v1183
        %1248 = vst [vmem:[%s380 + $0x74] sm:$0xf] %v1184
        %1249 = vst [vmem:[%s380 + $0x78] sm:$0xf] %v1185
        %1250 = vst [vmem:[%s380 + $0x7c] sm:$0xf] %v1186
      $region52: #{resnet_gcn_forward.9} parent=43 // pred_fallthru
        _
      %s1251 = smul.u32 32, %s22
      %p1252 = scmp.lt.s32.totalorder %s1251, 255
      %s1253 = scalar_select %p1252, %s1251, 255
      %p1254 = scmp.lt.s32.totalorder %s23, 0
      %s1255 = scalar_select %p1254, %s23, 0
      %s1256 = sadd.s32 %s1255, %s1253
      %s1257 = smul.addr %s1256, 4
      %s1258 = scalar_lea.vmem %s6, %s1257
      // Predicated region
      $region53: #{resnet_gcn_forward.9} parent=43 // pred_check
        %p1259 = pneg %p216
      $region54: #{resnet_gcn_forward.9} parent=43 // pred_check_branch
        %1261 = sbr.rel (%p1259) target = $region56
      $region55: #{resnet_gcn_forward.9} parent=43 // pred_region
        %s1262 = smul.u32 32, %s22
      $region56: #{resnet_gcn_forward.9} parent=43 // pred_fallthru
        _
    $region44: #{resnet_gcn_forward.9} parent=5 // pred_fallthru
      _
    %p1263 = scmp.le.s32.totalorder 2, %s12
    // Predicated region
    $region57: #{resnet_gcn_forward.9} parent=5 // pred_check
      %p1264 = pneg %p1263
    $region58: #{resnet_gcn_forward.9} parent=5 // pred_check_branch
      %1266 = sbr.rel (%p1264) target = $region60
    $region59: #{resnet_gcn_forward.9} parent=5 // pred_region
      %s1267 = ssub.s32 %s12, 2
      // Predicated region
      $region61: #{resnet_gcn_forward.9} parent=59 // pred_check
        %p1268 = pneg %p222
      $region62: #{resnet_gcn_forward.9} parent=59 // pred_check_branch
        %1270 = sbr.rel (%p1268) target = $region64
      $region63: #{resnet_gcn_forward.9} parent=59 // pred_region
        %s1271 = smul.u32 32, %s25
        %p1272 = scmp.lt.s32.totalorder %s1271, 255
        %s1273 = scalar_select %p1272, %s1271, 255
        %p1274 = scmp.lt.s32.totalorder %s26, 0
        %s1275 = scalar_select %p1274, %s26, 0
        %s1276 = sadd.s32 %s1275, %s1273
        %s1277 = smul.addr %s1276, 4
        %s1278 = scalar_lea.vmem %s6, %s1277
      $region64: #{resnet_gcn_forward.9} parent=59 // pred_fallthru
        _
    $region60: #{resnet_gcn_forward.9} parent=5 // pred_fallthru
      _
  $region6: #{resnet_gcn_forward.9} parent=0 // loop_footer
    %s16 = sadd.s32 1, %s12
  $region7: #{resnet_gcn_forward.9} parent=0 // loop_footer_branch
    %11 = sbr.rel target = $region3
  $region8: #{resnet_gcn_forward.9} parent=0 // loop_exit
    _

// kernel: resnet_gcn_forward.11
$region0: #{resnet_gcn_forward.11}
  #allocation0 [shape = 'u32[]', space=smem, size = 0x4, offset = 0x4, fixed_abs, tag = 'smem constant byte address 0x4 - core index']
  #allocation1 [shape = 'u32[144,128]{1,0:T(1,128)}', space=vmem, size = 0x12000, scoped, tag = 'internal scratch']
  #allocation2 [shape = 'f32[256,128]{1,0:T(8,128)}', space=vmem, size = 0x20000, scoped, tag = 'scratch operand']
  %s0 = inlined_call_operand.vmem [shape: bf16[2048,1152], index: 0, kind: input, shape index: {}]
  %s1 = inlined_call_operand.vmem [shape: bf16[1152,128], index: 1, kind: input, shape index: {}]
  %s2 = inlined_call_operand.vmem [shape: f32[1,128], index: 2, kind: input, shape index: {}]
  %s3 = inlined_call_operand.vmem [shape: f32[1,128], index: 3, kind: input, shape index: {}]
  %s4 = inlined_call_operand.vmem [shape: f32[1,128], index: 4, kind: input, shape index: {}]
  %s5 = inlined_call_operand.vmem [shape: f32[1,128], index: 5, kind: input, shape index: {}]
  %s6 = inlined_call_operand.vmem [shape: bf16[2048,128], index: 6, kind: output, shape index: {}]
  %s7 = sld [smem:[#allocation0]]
  $region106: #{resnet_gcn_forward.11} parent=0
    _
  %s9 = ssub.s32 1, %s7
  %s10 = scalar_select 0, %s9, %s7
  $region1: #{resnet_gcn_forward.11} parent=0
    #allocation3 [shape = 'u8[131072]{0}', space=vmem, size = 0x20000, scoped, tag = 'input window, operand 0']
    loop: start=0, step=1, limit=74
    $region2: #{resnet_gcn_forward.11} parent=1 // loop_pre_header
      _
    $region3: #{resnet_gcn_forward.11} parent=1 // loop_header
      %s12 = sphi 0, %s16
      %p13 = scmp.ge.s32.totalorder %s12, 74
      %s19 = sphi 0, %s38
      %s20 = sphi 0, %s34
      %s21 = sphi 0, %s30
      %s22 = sphi 0, %s19
      %s23 = sphi 0, %s20
      %s24 = sphi 0, %s21
      %s25 = sphi 0, %s22
      %s26 = sphi 0, %s23
      %s27 = sphi 0, %s24
      %s43 = sphi 0, %s45
      %s46 = sphi 0, %s43
      %s47 = sphi 0, %s46
      %s63 = sphi 0, %s47
      %s71 = sphi 0, %s73
      %s74 = sphi 0, %s71
      %s75 = sphi 0, %s74
      %s91 = sphi 0, %s75
      %s97 = sphi 0, %s99
      %s100 = sphi 0, %s97
      %s101 = sphi 0, %s100
      %s117 = sphi 0, %s101
      %s123 = sphi 0, %s125
      %s126 = sphi 0, %s123
      %s127 = sphi 0, %s126
      %s143 = sphi 0, %s127
      %s149 = sphi 0, %s151
      %s152 = sphi 0, %s149
      %s153 = sphi 0, %s152
      %s169 = sphi 0, %s153
      %s175 = sphi 0, %s177
      %s178 = sphi 0, %s175
      %s179 = sphi 0, %s178
      %s195 = sphi 0, %s179
      %s203 = sphi 0, %s205
      %s206 = sphi 0, %s203
      %s207 = sphi 0, %s206
      %s223 = sphi 0, %s207
    $region4: #{resnet_gcn_forward.11} parent=1 // loop_header_branch
      %15 = sbr.rel (%p13) target = $region8
    $region5: #{resnet_gcn_forward.11} parent=1 // loop_body
      %s17 = ssub.s32 %s12, 1
      %s18 = ssub.s32 %s12, 2
      %s28 = sadd.s32 1, %s21
      %p29 = scmp.ge.s32.totalorder %s28, 9
      %s30 = scalar_select %p29, 0, %s28
      %s31 = sadd.s32 1, %s20
      %s32 = scalar_select %p29, %s31, %s20
      %p33 = scmp.ge.s32.totalorder %s32, 1
      %s34 = scalar_select %p33, 0, %s32
      %s35 = sadd.s32 1, %s19
      %s36 = scalar_select %p33, %s35, %s19
      %p37 = scmp.ge.s32.totalorder %s36, 8
      %s38 = scalar_select %p37, 0, %s36
      %s39 = ssub.s32 %s19, %s38
      %s40 = ssub.s32 %s21, %s30
      %s41 = sor.u32 %s39, %s40
      %p42 = scmp.eq.s32.totalorder %s41, 0
      %s44 = sadd.s32 %s43, 1
      %s45 = scalar_select %p42, %s43, %s44
      %p48 = pneg %p42
      %p49 = scmp.eq.s32.totalorder %s12, 71
      %p50 = por %p48, %p49
      %p51 = scmp.ne.s32.totalorder %s43, %s46
      %p52 = scmp.eq.s32.totalorder %s12, 0
      %p53 = por %p51, %p52
      %p54 = scmp.ne.s32.totalorder %s43, %s46
      %p55 = scmp.eq.s32.totalorder %s17, 71
      %p56 = por %p54, %p55
      %p57 = scmp.ne.s32.totalorder %s46, %s47
      %p58 = scmp.eq.s32.totalorder %s17, 0
      %p59 = por %p57, %p58
      %p60 = scmp.ne.s32.totalorder %s46, %s47
      %p61 = scmp.eq.s32.totalorder %s18, 71
      %p62 = por %p60, %p61
      %p64 = scmp.ne.s32.totalorder %s47, %s63
      %p65 = scmp.eq.s32.totalorder %s18, 0
      %p66 = por %p64, %p65
      %s67 = ssub.s32 %s21, %s30
      %s68 = ssub.s32 %s20, %s34
      %s69 = sor.u32 %s67, %s68
      %p70 = scmp.eq.s32.totalorder %s69, 0
      %s72 = sadd.s32 %s71, 1
      %s73 = scalar_select %p70, %s71, %s72
      %p76 = pneg %p70
      %p77 = scmp.eq.s32.totalorder %s12, 71
      %p78 = por %p76, %p77
      %p79 = scmp.ne.s32.totalorder %s71, %s74
      %p80 = scmp.eq.s32.totalorder %s12, 0
      %p81 = por %p79, %p80
      %p82 = scmp.ne.s32.totalorder %s71, %s74
      %p83 = scmp.eq.s32.totalorder %s17, 71
      %p84 = por %p82, %p83
      %p85 = scmp.ne.s32.totalorder %s74, %s75
      %p86 = scmp.eq.s32.totalorder %s17, 0
      %p87 = por %p85, %p86
      %p88 = scmp.ne.s32.totalorder %s74, %s75
      %p89 = scmp.eq.s32.totalorder %s18, 71
      %p90 = por %p88, %p89
      %p92 = scmp.ne.s32.totalorder %s75, %s91
      %p93 = scmp.eq.s32.totalorder %s18, 0
      %p94 = por %p92, %p93
      %s95 = ssub.s32 %s20, %s34
      %p96 = scmp.eq.s32.totalorder %s95, 0
      %s98 = sadd.s32 %s97, 1
      %s99 = scalar_select %p96, %s97, %s98
      %p102 = pneg %p96
      %p103 = scmp.eq.s32.totalorder %s12, 71
      %p104 = por %p102, %p103
      %p105 = scmp.ne.s32.totalorder %s97, %s100
      %p106 = scmp.eq.s32.totalorder %s12, 0
      %p107 = por %p105, %p106
      %p108 = scmp.ne.s32.totalorder %s97, %s100
      %p109 = scmp.eq.s32.totalorder %s17, 71
      %p110 = por %p108, %p109
      %p111 = scmp.ne.s32.totalorder %s100, %s101
      %p112 = scmp.eq.s32.totalorder %s17, 0
      %p113 = por %p111, %p112
      %p114 = scmp.ne.s32.totalorder %s100, %s101
      %p115 = scmp.eq.s32.totalorder %s18, 71
      %p116 = por %p114, %p115
      %p118 = scmp.ne.s32.totalorder %s101, %s117
      %p119 = scmp.eq.s32.totalorder %s18, 0
      %p120 = por %p118, %p119
      %s121 = ssub.s32 %s20, %s34
      %p122 = scmp.eq.s32.totalorder %s121, 0
      %s124 = sadd.s32 %s123, 1
      %s125 = scalar_select %p122, %s123, %s124
      %p128 = pneg %p122
      %p129 = scmp.eq.s32.totalorder %s12, 71
      %p130 = por %p128, %p129
      %p131 = scmp.ne.s32.totalorder %s123, %s126
      %p132 = scmp.eq.s32.totalorder %s12, 0
      %p133 = por %p131, %p132
      %p134 = scmp.ne.s32.totalorder %s123, %s126
      %p135 = scmp.eq.s32.totalorder %s17, 71
      %p136 = por %p134, %p135
      %p137 = scmp.ne.s32.totalorder %s126, %s127
      %p138 = scmp.eq.s32.totalorder %s17, 0
      %p139 = por %p137, %p138
      %p140 = scmp.ne.s32.totalorder %s126, %s127
      %p141 = scmp.eq.s32.totalorder %s18, 71
      %p142 = por %p140, %p141
      %p144 = scmp.ne.s32.totalorder %s127, %s143
      %p145 = scmp.eq.s32.totalorder %s18, 0
      %p146 = por %p144, %p145
      %s147 = ssub.s32 %s20, %s34
      %p148 = scmp.eq.s32.totalorder %s147, 0
      %s150 = sadd.s32 %s149, 1
      %s151 = scalar_select %p148, %s149, %s150
      %p154 = pneg %p148
      %p155 = scmp.eq.s32.totalorder %s12, 71
      %p156 = por %p154, %p155
      %p157 = scmp.ne.s32.totalorder %s149, %s152
      %p158 = scmp.eq.s32.totalorder %s12, 0
      %p159 = por %p157, %p158
      %p160 = scmp.ne.s32.totalorder %s149, %s152
      %p161 = scmp.eq.s32.totalorder %s17, 71
      %p162 = por %p160, %p161
      %p163 = scmp.ne.s32.totalorder %s152, %s153
      %p164 = scmp.eq.s32.totalorder %s17, 0
      %p165 = por %p163, %p164
      %p166 = scmp.ne.s32.totalorder %s152, %s153
      %p167 = scmp.eq.s32.totalorder %s18, 71
      %p168 = por %p166, %p167
      %p170 = scmp.ne.s32.totalorder %s153, %s169
      %p171 = scmp.eq.s32.totalorder %s18, 0
      %p172 = por %p170, %p171
      %s173 = ssub.s32 %s20, %s34
      %p174 = scmp.eq.s32.totalorder %s173, 0
      %s176 = sadd.s32 %s175, 1
      %s177 = scalar_select %p174, %s175, %s176
      %p180 = pneg %p174
      %p181 = scmp.eq.s32.totalorder %s12, 71
      %p182 = por %p180, %p181
      %p183 = scmp.ne.s32.totalorder %s175, %s178
      %p184 = scmp.eq.s32.totalorder %s12, 0
      %p185 = por %p183, %p184
      %p186 = scmp.ne.s32.totalorder %s175, %s178
      %p187 = scmp.eq.s32.totalorder %s17, 71
      %p188 = por %p186, %p187
      %p189 = scmp.ne.s32.totalorder %s178, %s179
      %p190 = scmp.eq.s32.totalorder %s17, 0
      %p191 = por %p189, %p190
      %p192 = scmp.ne.s32.totalorder %s178, %s179
      %p193 = scmp.eq.s32.totalorder %s18, 71
      %p194 = por %p192, %p193
      %p196 = scmp.ne.s32.totalorder %s179, %s195
      %p197 = scmp.eq.s32.totalorder %s18, 0
      %p198 = por %p196, %p197
      %s199 = ssub.s32 %s19, %s38
      %s200 = ssub.s32 %s20, %s34
      %s201 = sor.u32 %s199, %s200
      %p202 = scmp.eq.s32.totalorder %s201, 0
      %s204 = sadd.s32 %s203, 1
      %s205 = scalar_select %p202, %s203, %s204
      %p208 = pneg %p202
      %p209 = scmp.eq.s32.totalorder %s12, 71
      %p210 = por %p208, %p209
      %p211 = scmp.ne.s32.totalorder %s203, %s206
      %p212 = scmp.eq.s32.totalorder %s12, 0
      %p213 = por %p211, %p212
      %p214 = scmp.ne.s32.totalorder %s203, %s206
      %p215 = scmp.eq.s32.totalorder %s17, 71
      %p216 = por %p214, %p215
      %p217 = scmp.ne.s32.totalorder %s206, %s207
      %p218 = scmp.eq.s32.totalorder %s17, 0
      %p219 = por %p217, %p218
      %p220 = scmp.ne.s32.totalorder %s206, %s207
      %p221 = scmp.eq.s32.totalorder %s18, 71
      %p222 = por %p220, %p221
      %p224 = scmp.ne.s32.totalorder %s207, %s223
      %p225 = scmp.eq.s32.totalorder %s18, 0
      %p226 = por %p224, %p225
      %p227 = scmp.le.s32.totalorder 1, %s12
      %p228 = scmp.lt.s32.totalorder %s12, 73
      %p229 = pnand %p227, %p228
      %p230 = pneg %p229
      // Predicated region
      $region9: #{resnet_gcn_forward.11} parent=5 // pred_check
        _
      $region10: #{resnet_gcn_forward.11} parent=5 // pred_check_branch
        %232 = sbr.rel (%p229) target = $region12
      $region11: #{resnet_gcn_forward.11} parent=5 // pred_region
        %s233 = ssub.s32 %s12, 1
        // Predicated region
        $region13: #{resnet_gcn_forward.11} parent=11 // pred_check
          %p234 = pneg %p113
        $region14: #{resnet_gcn_forward.11} parent=11 // pred_check_branch
          %236 = sbr.rel (%p234) target = $region16
        $region15: #{resnet_gcn_forward.11} parent=11 // pred_region
          %p237 = scmp.lt.s32.totalorder %s23, 0
          %s238 = scalar_select %p237, %s23, 0
          %s239 = scalar_lea.vmem %s2, %s238
        $region16: #{resnet_gcn_forward.11} parent=11 // pred_fallthru
          _
        // Predicated region
        $region17: #{resnet_gcn_forward.11} parent=11 // pred_check
          %p240 = pneg %p139
        $region18: #{resnet_gcn_forward.11} parent=11 // pred_check_branch
          %242 = sbr.rel (%p240) target = $region20
        $region19: #{resnet_gcn_forward.11} parent=11 // pred_region
          %p243 = scmp.lt.s32.totalorder %s23, 0
          %s244 = scalar_select %p243, %s23, 0
          %s245 = scalar_lea.vmem %s3, %s244
        $region20: #{resnet_gcn_forward.11} parent=11 // pred_fallthru
          _
        // Predicated region
        $region21: #{resnet_gcn_forward.11} parent=11 // pred_check
          %p246 = pneg %p165
        $region22: #{resnet_gcn_forward.11} parent=11 // pred_check_branch
          %248 = sbr.rel (%p246) target = $region24
        $region23: #{resnet_gcn_forward.11} parent=11 // pred_region
          %p249 = scmp.lt.s32.totalorder %s23, 0
          %s250 = scalar_select %p249, %s23, 0
          %s251 = scalar_lea.vmem %s4, %s250
        $region24: #{resnet_gcn_forward.11} parent=11 // pred_fallthru
          _
        // Predicated region
        $region25: #{resnet_gcn_forward.11} parent=11 // pred_check
          %p252 = pneg %p191
        $region26: #{resnet_gcn_forward.11} parent=11 // pred_check_branch
          %254 = sbr.rel (%p252) target = $region28
        $region27: #{resnet_gcn_forward.11} parent=11 // pred_region
          %p255 = scmp.lt.s32.totalorder %s23, 0
          %s256 = scalar_select %p255, %s23, 0
          %s257 = scalar_lea.vmem %s5, %s256
        $region28: #{resnet_gcn_forward.11} parent=11 // pred_fallthru
          _
      $region12: #{resnet_gcn_forward.11} parent=5 // pred_fallthru
        _
      %p258 = scmp.lt.s32.totalorder %s12, 72
      // Predicated region
      $region29: #{resnet_gcn_forward.11} parent=5 // pred_check
        %p259 = pneg %p258
      $region30: #{resnet_gcn_forward.11} parent=5 // pred_check_branch
        %261 = sbr.rel (%p259) target = $region32
      $region31: #{resnet_gcn_forward.11} parent=5 // pred_region
        // Predicated region
        $region33: #{resnet_gcn_forward.11} parent=31 // pred_check
          %p262 = pneg %p53
        $region34: #{resnet_gcn_forward.11} parent=31 // pred_check_branch
          %264 = sbr.rel (%p262) target = $region36
        $region35: #{resnet_gcn_forward.11} parent=31 // pred_region
          %s265 = sand.u32 %s43, 1
          %s266 = sand.u32 %s43, 1
          %s267 = smul.addr %s266, 128
          %s268 = scalar_lea.vmem [#allocation3], %s267
          %s269 = smul.u32 32, %s19
          %s270 = smul.addr %s269, 9
          %s271 = sadd.s32 %s21, %s270
          %s272 = smul.addr %s271, 4
          %s273 = scalar_lea.vmem %s0, %s272
          // Predicated region
          $region37: #{resnet_gcn_forward.11} parent=35 // pred_check
            _
          $region38: #{resnet_gcn_forward.11} parent=35 // pred_check_branch
            %275 = sbr.rel (0) target = $region40
          $region39: #{resnet_gcn_forward.11} parent=35 // pred_region
            // Predicated region
            $region41: #{resnet_gcn_forward.11} parent=39 // pred_check
              _
            $region42: #{resnet_gcn_forward.11} parent=39 // pred_check_branch
              %277 = sbr.rel target = $region44
            $region43: #{resnet_gcn_forward.11} parent=39 // pred_region
              // Predicated region
              $region56: #{resnet_gcn_forward.11} parent=43 // pred_check
                _
              $region57: #{resnet_gcn_forward.11} parent=43 // pred_check_branch
                %354 = sbr.rel (0) target = $region59
              $region58: #{resnet_gcn_forward.11} parent=43 // pred_region
                loop: start=0, step=1, limit=1
                $region60: #{resnet_gcn_forward.11} parent=58 // loop_pre_header
                  _
                $region61: #{resnet_gcn_forward.11} parent=58 // loop_header
                  %s356 = sphi 0, %s360
                  %p357 = scmp.ge.s32.totalorder %s356, 1
                  %s361 = sphi %s273, %s273
                  %s362 = sphi %s268, %s268
                $region62: #{resnet_gcn_forward.11} parent=58 // loop_header_branch
                  %359 = sbr.rel (%p357) target = $region66
                $region63: #{resnet_gcn_forward.11} parent=58 // loop_body
                  _
                $region64: #{resnet_gcn_forward.11} parent=58 // loop_footer
                  %s360 = sadd.s32 1, %s356
                $region65: #{resnet_gcn_forward.11} parent=58 // loop_footer_branch
                  %355 = sbr.rel target = $region61
                $region66: #{resnet_gcn_forward.11} parent=58 // loop_exit
                  _
                loop: start=0, step=1, limit=1
                $region67: #{resnet_gcn_forward.11} parent=58 // loop_pre_header
                  _
                $region68: #{resnet_gcn_forward.11} parent=58 // loop_header
                  %s365 = sphi 0, %s369
                  %p366 = scmp.ge.s32.totalorder %s365, 1
                  %s370 = sphi %s273, %s273
                  %s371 = sphi %s268, %s268
                $region69: #{resnet_gcn_forward.11} parent=58 // loop_header_branch
                  %368 = sbr.rel (%p366) target = $region73
                $region70: #{resnet_gcn_forward.11} parent=58 // loop_body
                  %v372 = vld [vmem:[%s370] sm:$0xf]
                  %373 = vst [vmem:[%s371] sm:$0xf] %v372
                  %v374 = vld [vmem:[%s370 + $0x24] sm:$0xf]
                  %375 = vst [vmem:[%s371 + $0x4] sm:$0xf] %v374
                  %v376 = vld [vmem:[%s370 + $0x48] sm:$0xf]
                  %377 = vst [vmem:[%s371 + $0x8] sm:$0xf] %v376
                  %v378 = vld [vmem:[%s370 + $0x6c] sm:$0xf]
                  %379 = vst [vmem:[%s371 + $0xc] sm:$0xf] %v378
                  %v380 = vld [vmem:[%s370 + $0x90] sm:$0xf]
                  %381 = vst [vmem:[%s371 + $0x10] sm:$0xf] %v380
                  %v382 = vld [vmem:[%s370 + $0xb4] sm:$0xf]
                  %383 = vst [vmem:[%s371 + $0x14] sm:$0xf] %v382
                  %v384 = vld [vmem:[%s370 + $0xd8] sm:$0xf]
                  %385 = vst [vmem:[%s371 + $0x18] sm:$0xf] %v384
                  %v386 = vld [vmem:[%s370 + $0xfc] sm:$0xf]
                  %387 = vst [vmem:[%s371 + $0x1c] sm:$0xf] %v386
                  %v388 = vld [vmem:[%s370 + $0x120] sm:$0xf]
                  %389 = vst [vmem:[%s371 + $0x20] sm:$0xf] %v388
                  %v390 = vld [vmem:[%s370 + $0x144] sm:$0xf]
                  %391 = vst [vmem:[%s371 + $0x24] sm:$0xf] %v390
                  %v392 = vld [vmem:[%s370 + $0x168] sm:$0xf]
                  %393 = vst [vmem:[%s371 + $0x28] sm:$0xf] %v392
                  %v394 = vld [vmem:[%s370 + $0x18c] sm:$0xf]
                  %395 = vst [vmem:[%s371 + $0x2c] sm:$0xf] %v394
                  %v396 = vld [vmem:[%s370 + $0x1b0] sm:$0xf]
                  %397 = vst [vmem:[%s371 + $0x30] sm:$0xf] %v396
                  %v398 = vld [vmem:[%s370 + $0x1d4] sm:$0xf]
                  %399 = vst [vmem:[%s371 + $0x34] sm:$0xf] %v398
                  %v400 = vld [vmem:[%s370 + $0x1f8] sm:$0xf]
                  %401 = vst [vmem:[%s371 + $0x38] sm:$0xf] %v400
                  %v402 = vld [vmem:[%s370 + $0x21c] sm:$0xf]
                  %403 = vst [vmem:[%s371 + $0x3c] sm:$0xf] %v402
                  %v404 = vld [vmem:[%s370 + $0x240] sm:$0xf]
                  %405 = vst [vmem:[%s371 + $0x40] sm:$0xf] %v404
                  %v406 = vld [vmem:[%s370 + $0x264] sm:$0xf]
                  %407 = vst [vmem:[%s371 + $0x44] sm:$0xf] %v406
                  %v408 = vld [vmem:[%s370 + $0x288] sm:$0xf]
                  %409 = vst [vmem:[%s371 + $0x48] sm:$0xf] %v408
                  %v410 = vld [vmem:[%s370 + $0x2ac] sm:$0xf]
                  %411 = vst [vmem:[%s371 + $0x4c] sm:$0xf] %v410
                  %v412 = vld [vmem:[%s370 + $0x2d0] sm:$0xf]
                  %413 = vst [vmem:[%s371 + $0x50] sm:$0xf] %v412
                  %v414 = vld [vmem:[%s370 + $0x2f4] sm:$0xf]
                  %415 = vst [vmem:[%s371 + $0x54] sm:$0xf] %v414
                  %v416 = vld [vmem:[%s370 + $0x318] sm:$0xf]
                  %417 = vst [vmem:[%s371 + $0x58] sm:$0xf] %v416
                  %v418 = vld [vmem:[%s370 + $0x33c] sm:$0xf]
                  %419 = vst [vmem:[%s371 + $0x5c] sm:$0xf] %v418
                  %v420 = vld [vmem:[%s370 + $0x360] sm:$0xf]
                  %421 = vst [vmem:[%s371 + $0x60] sm:$0xf] %v420
                  %v422 = vld [vmem:[%s370 + $0x384] sm:$0xf]
                  %423 = vst [vmem:[%s371 + $0x64] sm:$0xf] %v422
                  %v424 = vld [vmem:[%s370 + $0x3a8] sm:$0xf]
                  %425 = vst [vmem:[%s371 + $0x68] sm:$0xf] %v424
                  %v426 = vld [vmem:[%s370 + $0x3cc] sm:$0xf]
                  %427 = vst [vmem:[%s371 + $0x6c] sm:$0xf] %v426
                  %v428 = vld [vmem:[%s370 + $0x3f0] sm:$0xf]
                  %429 = vst [vmem:[%s371 + $0x70] sm:$0xf] %v428
                  %v430 = vld [vmem:[%s370 + $0x414] sm:$0xf]
                  %431 = vst [vmem:[%s371 + $0x74] sm:$0xf] %v430
                  %v432 = vld [vmem:[%s370 + $0x438] sm:$0xf]
                  %433 = vst [vmem:[%s371 + $0x78] sm:$0xf] %v432
                  %v434 = vld [vmem:[%s370 + $0x45c] sm:$0xf]
                  %435 = vst [vmem:[%s371 + $0x7c] sm:$0xf] %v434
                $region71: #{resnet_gcn_forward.11} parent=58 // loop_footer
                  %s369 = sadd.s32 1, %s365
                $region72: #{resnet_gcn_forward.11} parent=58 // loop_footer_branch
                  %364 = sbr.rel target = $region68
                $region73: #{resnet_gcn_forward.11} parent=58 // loop_exit
                  _
              $region59: #{resnet_gcn_forward.11} parent=43 // pred_fallthru
                _
            $region44: #{resnet_gcn_forward.11} parent=39 // pred_fallthru
              _
            // Predicated region
            $region45: #{resnet_gcn_forward.11} parent=39 // pred_check
              _
            $region46: #{resnet_gcn_forward.11} parent=39 // pred_check_branch
              %279 = sbr.rel (0) target = $region48
            $region47: #{resnet_gcn_forward.11} parent=39 // pred_region
              loop: start=0, step=1, limit=1
              $region49: #{resnet_gcn_forward.11} parent=47 // loop_pre_header
                _
              $region50: #{resnet_gcn_forward.11} parent=47 // loop_header
                %s282 = sphi 0, %s286
                %p283 = scmp.ge.s32.totalorder %s282, 1
                %s287 = sphi %s273, %s273
                %s288 = sphi %s268, %s268
              $region51: #{resnet_gcn_forward.11} parent=47 // loop_header_branch
                %285 = sbr.rel (%p283) target = $region55
              $region52: #{resnet_gcn_forward.11} parent=47 // loop_body
                %v289 = vld [vmem:[%s287] sm:$0xf]
                %290 = vst [vmem:[%s288] sm:$0xf] %v289
                %v291 = vld [vmem:[%s287 + $0x24] sm:$0xf]
                %292 = vst [vmem:[%s288 + $0x4] sm:$0xf] %v291
                %v293 = vld [vmem:[%s287 + $0x48] sm:$0xf]
                %294 = vst [vmem:[%s288 + $0x8] sm:$0xf] %v293
                %v295 = vld [vmem:[%s287 + $0x6c] sm:$0xf]
                %296 = vst [vmem:[%s288 + $0xc] sm:$0xf] %v295
                %v297 = vld [vmem:[%s287 + $0x90] sm:$0xf]
                %298 = vst [vmem:[%s288 + $0x10] sm:$0xf] %v297
                %v299 = vld [vmem:[%s287 + $0xb4] sm:$0xf]
                %300 = vst [vmem:[%s288 + $0x14] sm:$0xf] %v299
                %v301 = vld [vmem:[%s287 + $0xd8] sm:$0xf]
                %302 = vst [vmem:[%s288 + $0x18] sm:$0xf] %v301
                %v303 = vld [vmem:[%s287 + $0xfc] sm:$0xf]
                %304 = vst [vmem:[%s288 + $0x1c] sm:$0xf] %v303
                %v305 = vld [vmem:[%s287 + $0x120] sm:$0xf]
                %306 = vst [vmem:[%s288 + $0x20] sm:$0xf] %v305
                %v307 = vld [vmem:[%s287 + $0x144] sm:$0xf]
                %308 = vst [vmem:[%s288 + $0x24] sm:$0xf] %v307
                %v309 = vld [vmem:[%s287 + $0x168] sm:$0xf]
                %310 = vst [vmem:[%s288 + $0x28] sm:$0xf] %v309
                %v311 = vld [vmem:[%s287 + $0x18c] sm:$0xf]
                %312 = vst [vmem:[%s288 + $0x2c] sm:$0xf] %v311
                %v313 = vld [vmem:[%s287 + $0x1b0] sm:$0xf]
                %314 = vst [vmem:[%s288 + $0x30] sm:$0xf] %v313
                %v315 = vld [vmem:[%s287 + $0x1d4] sm:$0xf]
                %316 = vst [vmem:[%s288 + $0x34] sm:$0xf] %v315
                %v317 = vld [vmem:[%s287 + $0x1f8] sm:$0xf]
                %318 = vst [vmem:[%s288 + $0x38] sm:$0xf] %v317
                %v319 = vld [vmem:[%s287 + $0x21c] sm:$0xf]
                %320 = vst [vmem:[%s288 + $0x3c] sm:$0xf] %v319
                %v321 = vld [vmem:[%s287 + $0x240] sm:$0xf]
                %322 = vst [vmem:[%s288 + $0x40] sm:$0xf] %v321
                %v323 = vld [vmem:[%s287 + $0x264] sm:$0xf]
                %324 = vst [vmem:[%s288 + $0x44] sm:$0xf] %v323
                %v325 = vld [vmem:[%s287 + $0x288] sm:$0xf]
                %326 = vst [vmem:[%s288 + $0x48] sm:$0xf] %v325
                %v327 = vld [vmem:[%s287 + $0x2ac] sm:$0xf]
                %328 = vst [vmem:[%s288 + $0x4c] sm:$0xf] %v327
                %v329 = vld [vmem:[%s287 + $0x2d0] sm:$0xf]
                %330 = vst [vmem:[%s288 + $0x50] sm:$0xf] %v329
                %v331 = vld [vmem:[%s287 + $0x2f4] sm:$0xf]
                %332 = vst [vmem:[%s288 + $0x54] sm:$0xf] %v331
                %v333 = vld [vmem:[%s287 + $0x318] sm:$0xf]
                %334 = vst [vmem:[%s288 + $0x58] sm:$0xf] %v333
                %v335 = vld [vmem:[%s287 + $0x33c] sm:$0xf]
                %336 = vst [vmem:[%s288 + $0x5c] sm:$0xf] %v335
                %v337 = vld [vmem:[%s287 + $0x360] sm:$0xf]
                %338 = vst [vmem:[%s288 + $0x60] sm:$0xf] %v337
                %v339 = vld [vmem:[%s287 + $0x384] sm:$0xf]
                %340 = vst [vmem:[%s288 + $0x64] sm:$0xf] %v339
                %v341 = vld [vmem:[%s287 + $0x3a8] sm:$0xf]
                %342 = vst [vmem:[%s288 + $0x68] sm:$0xf] %v341
                %v343 = vld [vmem:[%s287 + $0x3cc] sm:$0xf]
                %344 = vst [vmem:[%s288 + $0x6c] sm:$0xf] %v343
                %v345 = vld [vmem:[%s287 + $0x3f0] sm:$0xf]
                %346 = vst [vmem:[%s288 + $0x70] sm:$0xf] %v345
                %v347 = vld [vmem:[%s287 + $0x414] sm:$0xf]
                %348 = vst [vmem:[%s288 + $0x74] sm:$0xf] %v347
                %v349 = vld [vmem:[%s287 + $0x438] sm:$0xf]
                %350 = vst [vmem:[%s288 + $0x78] sm:$0xf] %v349
                %v351 = vld [vmem:[%s287 + $0x45c] sm:$0xf]
                %352 = vst [vmem:[%s288 + $0x7c] sm:$0xf] %v351
              $region53: #{resnet_gcn_forward.11} parent=47 // loop_footer
                %s286 = sadd.s32 1, %s282
              $region54: #{resnet_gcn_forward.11} parent=47 // loop_footer_branch
                %281 = sbr.rel target = $region50
              $region55: #{resnet_gcn_forward.11} parent=47 // loop_exit
                _
            $region48: #{resnet_gcn_forward.11} parent=39 // pred_fallthru
              _
          $region40: #{resnet_gcn_forward.11} parent=35 // pred_fallthru
            _
          %436 = vnop
        $region36: #{resnet_gcn_forward.11} parent=31 // pred_fallthru
          _
        // Predicated region
        $region74: #{resnet_gcn_forward.11} parent=31 // pred_check
          %p437 = pneg %p81
        $region75: #{resnet_gcn_forward.11} parent=31 // pred_check_branch
          %439 = sbr.rel (%p437) target = $region77
        $region76: #{resnet_gcn_forward.11} parent=31 // pred_region
          %s440 = smul.u32 16, %s21
          %p441 = scmp.lt.s32.totalorder %s440, 143
          %s442 = scalar_select %p441, %s440, 143
          %p443 = scmp.lt.s32.totalorder %s20, 0
          %s444 = scalar_select %p443, %s20, 0
          %s445 = sadd.s32 %s444, %s442
          %s446 = smul.addr %s445, 4
          %s447 = scalar_lea.vmem %s1, %s446
          %s448 = smul.u32 16, %s21
        $region77: #{resnet_gcn_forward.11} parent=31 // pred_fallthru
          _
      $region32: #{resnet_gcn_forward.11} parent=5 // pred_fallthru
        _
      %p449 = scmp.le.s32.totalorder 1, %s12
      %p450 = scmp.lt.s32.totalorder %s12, 73
      %p451 = pnand %p449, %p450
      %p452 = pneg %p451
      // Predicated region
      $region78: #{resnet_gcn_forward.11} parent=5 // pred_check
        _
      $region79: #{resnet_gcn_forward.11} parent=5 // pred_check_branch
        %454 = sbr.rel (%p451) target = $region81
      $region80: #{resnet_gcn_forward.11} parent=5 // pred_region
        %s455 = ssub.s32 %s12, 1
        %s456 = sand.u32 %s46, 1
        %s457 = sand.u32 %s46, 1
        %s458 = smul.addr %s457, 128
        %s459 = scalar_lea.vmem [#allocation3], %s458
        // Predicated region
        $region82: #{resnet_gcn_forward.11} parent=80 // pred_check
          %p460 = pneg %p59
        $region83: #{resnet_gcn_forward.11} parent=80 // pred_check_branch
          %462 = sbr.rel (%p460) target = $region85
        $region84: #{resnet_gcn_forward.11} parent=80 // pred_region
          _
        $region85: #{resnet_gcn_forward.11} parent=80 // pred_fallthru
          _
        %s463 = sand.u32 %s46, 1
        %s464 = sand.u32 %s46, 1
        %s465 = smul.addr %s464, 128
        %s466 = scalar_lea.vmem [#allocation3], %s465
        %p467 = pneg %p59
        %p468 = pneg %p56
        %s469 = smul.u32 16, %s24
        %p470 = scmp.lt.s32.totalorder %s469, 143
        %s471 = scalar_select %p470, %s469, 143
        %p472 = scmp.lt.s32.totalorder %s23, 0
        %s473 = scalar_select %p472, %s23, 0
        %s474 = sadd.s32 %s473, %s471
        %s475 = smul.addr %s474, 4
        %s476 = scalar_lea.vmem %s1, %s475
        %p477 = pneg %p87
        %p478 = pneg %p84
        %p479 = scmp.lt.s32.totalorder %s23, 0
        %s480 = scalar_select %p479, %s23, 0
        %s481 = scalar_lea.vmem %s2, %s480
        %p482 = pneg %p113
        %p483 = pneg %p110
        %p484 = scmp.lt.s32.totalorder %s23, 0
        %s485 = scalar_select %p484, %s23, 0
        %s486 = scalar_lea.vmem %s3, %s485
        %p487 = pneg %p139
        %p488 = pneg %p136
        %p489 = scmp.lt.s32.totalorder %s23, 0
        %s490 = scalar_select %p489, %s23, 0
        %s491 = scalar_lea.vmem %s4, %s490
        %p492 = pneg %p165
        %p493 = pneg %p162
        %p494 = scmp.lt.s32.totalorder %s23, 0
        %s495 = scalar_select %p494, %s23, 0
        %s496 = scalar_lea.vmem %s5, %s495
        %p497 = pneg %p191
        %p498 = pneg %p188
        %p499 = pneg %p219
        %p500 = pneg %p216
        %s501 = smul.u32 32, %s22
        %p502 = scmp.lt.s32.totalorder %s501, 255
        %s503 = scalar_select %p502, %s501, 255
        %p504 = scmp.lt.s32.totalorder %s23, 0
        %s505 = scalar_select %p504, %s23, 0
        %s506 = sadd.s32 %s505, %s503
        %s507 = smul.addr %s506, 4
        %s508 = scalar_lea.vmem %s6, %s507
        %s509 = smul.u32 32, %s22
        %s510 = smul.u32 16, %s24
        %p511 = scmp.lt.s32.totalorder %s510, 143
        %s512 = scalar_select %p511, %s510, 143
        %p513 = scmp.lt.s32.totalorder %s23, 0
        %s514 = scalar_select %p513, %s23, 0
        %s515 = sadd.s32 %s514, %s512
        %s516 = smul.addr %s515, 4
        %s517 = scalar_lea.vmem %s1, %s516
        %s518 = smul.u32 16, %s24
        %p519 = scmp.lt.s32.totalorder %s23, 0
        %s520 = scalar_select %p519, %s23, 0
        %s521 = scalar_lea.vmem %s2, %s520
        %p522 = scmp.lt.s32.totalorder %s23, 0
        %s523 = scalar_select %p522, %s23, 0
        %s524 = scalar_lea.vmem %s3, %s523
        %p525 = scmp.lt.s32.totalorder %s23, 0
        %s526 = scalar_select %p525, %s23, 0
        %s527 = scalar_lea.vmem %s4, %s526
        %p528 = scmp.lt.s32.totalorder %s23, 0
        %s529 = scalar_select %p528, %s23, 0
        %s530 = scalar_lea.vmem %s5, %s529
        %s531 = smul.u32 32, %s22
        %p532 = scmp.lt.s32.totalorder %s531, 255
        %s533 = scalar_select %p532, %s531, 255
        %p534 = scmp.lt.s32.totalorder %s23, 0
        %s535 = scalar_select %p534, %s23, 0
        %s536 = sadd.s32 %s535, %s533
        %s537 = smul.addr %s536, 4
        %s538 = scalar_lea.vmem %s6, %s537
        %s539 = smul.u32 32, %s22
        %p541 = scmp.eq.s32.totalorder %s24, 0
        // Predicated region
        $region86: #{resnet_gcn_forward.11} parent=80 // pred_check
          %p542 = pneg %p541
        $region87: #{resnet_gcn_forward.11} parent=80 // pred_check_branch
          %544 = sbr.rel (%p542) target = $region89
        $region88: #{resnet_gcn_forward.11} parent=80 // pred_region
          %545 = vst [vmem:[#allocation2] sm:$0xff] 0.0
          %546 = vst [vmem:[#allocation2 + $0x8] sm:$0xff] 0.0
          %547 = vst [vmem:[#allocation2 + $0x10] sm:$0xff] 0.0
          %548 = vst [vmem:[#allocation2 + $0x18] sm:$0xff] 0.0
          %549 = vst [vmem:[#allocation2 + $0x20] sm:$0xff] 0.0
          %550 = vst [vmem:[#allocation2 + $0x28] sm:$0xff] 0.0
          %551 = vst [vmem:[#allocation2 + $0x30] sm:$0xff] 0.0
          %552 = vst [vmem:[#allocation2 + $0x38] sm:$0xff] 0.0
          %553 = vst [vmem:[#allocation2 + $0x40] sm:$0xff] 0.0
          %554 = vst [vmem:[#allocation2 + $0x48] sm:$0xff] 0.0
          %555 = vst [vmem:[#allocation2 + $0x50] sm:$0xff] 0.0
          %556 = vst [vmem:[#allocation2 + $0x58] sm:$0xff] 0.0
          %557 = vst [vmem:[#allocation2 + $0x60] sm:$0xff] 0.0
          %558 = vst [vmem:[#allocation2 + $0x68] sm:$0xff] 0.0
          %559 = vst [vmem:[#allocation2 + $0x70] sm:$0xff] 0.0
          %560 = vst [vmem:[#allocation2 + $0x78] sm:$0xff] 0.0
          %561 = vst [vmem:[#allocation2 + $0x80] sm:$0xff] 0.0
          %562 = vst [vmem:[#allocation2 + $0x88] sm:$0xff] 0.0
          %563 = vst [vmem:[#allocation2 + $0x90] sm:$0xff] 0.0
          %564 = vst [vmem:[#allocation2 + $0x98] sm:$0xff] 0.0
          %565 = vst [vmem:[#allocation2 + $0xa0] sm:$0xff] 0.0
          %566 = vst [vmem:[#allocation2 + $0xa8] sm:$0xff] 0.0
          %567 = vst [vmem:[#allocation2 + $0xb0] sm:$0xff] 0.0
          %568 = vst [vmem:[#allocation2 + $0xb8] sm:$0xff] 0.0
          %569 = vst [vmem:[#allocation2 + $0xc0] sm:$0xff] 0.0
          %570 = vst [vmem:[#allocation2 + $0xc8] sm:$0xff] 0.0
          %571 = vst [vmem:[#allocation2 + $0xd0] sm:$0xff] 0.0
          %572 = vst [vmem:[#allocation2 + $0xd8] sm:$0xff] 0.0
          %573 = vst [vmem:[#allocation2 + $0xe0] sm:$0xff] 0.0
          %574 = vst [vmem:[#allocation2 + $0xe8] sm:$0xff] 0.0
          %575 = vst [vmem:[#allocation2 + $0xf0] sm:$0xff] 0.0
          %576 = vst [vmem:[#allocation2 + $0xf8] sm:$0xff] 0.0
        $region89: #{resnet_gcn_forward.11} parent=80 // pred_fallthru
          _
        %v577 = vld [vmem:[#allocation2] sm:$0xff]
        %v578 = vld [vmem:[#allocation2 + $0x8] sm:$0xff]
        %v579 = vld [vmem:[#allocation2 + $0x10] sm:$0xff]
        %v580 = vld [vmem:[#allocation2 + $0x18] sm:$0xff]
        %v581 = vld [vmem:[#allocation2 + $0x20] sm:$0xff]
        %v582 = vld [vmem:[#allocation2 + $0x28] sm:$0xff]
        %v583 = vld [vmem:[#allocation2 + $0x30] sm:$0xff]
        %v584 = vld [vmem:[#allocation2 + $0x38] sm:$0xff]
        %v585 = vld [vmem:[#allocation2 + $0x40] sm:$0xff]
        %v586 = vld [vmem:[#allocation2 + $0x48] sm:$0xff]
        %v587 = vld [vmem:[#allocation2 + $0x50] sm:$0xff]
        %v588 = vld [vmem:[#allocation2 + $0x58] sm:$0xff]
        %v589 = vld [vmem:[#allocation2 + $0x60] sm:$0xff]
        %v590 = vld [vmem:[#allocation2 + $0x68] sm:$0xff]
        %v591 = vld [vmem:[#allocation2 + $0x70] sm:$0xff]
        %v592 = vld [vmem:[#allocation2 + $0x78] sm:$0xff]
        %v593 = vld [vmem:[#allocation2 + $0x80] sm:$0xff]
        %v594 = vld [vmem:[#allocation2 + $0x88] sm:$0xff]
        %v595 = vld [vmem:[#allocation2 + $0x90] sm:$0xff]
        %v596 = vld [vmem:[#allocation2 + $0x98] sm:$0xff]
        %v597 = vld [vmem:[#allocation2 + $0xa0] sm:$0xff]
        %v598 = vld [vmem:[#allocation2 + $0xa8] sm:$0xff]
        %v599 = vld [vmem:[#allocation2 + $0xb0] sm:$0xff]
        %v600 = vld [vmem:[#allocation2 + $0xb8] sm:$0xff]
        %v601 = vld [vmem:[#allocation2 + $0xc0] sm:$0xff]
        %v602 = vld [vmem:[#allocation2 + $0xc8] sm:$0xff]
        %v603 = vld [vmem:[#allocation2 + $0xd0] sm:$0xff]
        %v604 = vld [vmem:[#allocation2 + $0xd8] sm:$0xff]
        %v605 = vld [vmem:[#allocation2 + $0xe0] sm:$0xff]
        %v606 = vld [vmem:[#allocation2 + $0xe8] sm:$0xff]
        %v607 = vld [vmem:[#allocation2 + $0xf0] sm:$0xff]
        %v608 = vld [vmem:[#allocation2 + $0xf8] sm:$0xff]
        %v609 = vld [vmem:[%s459] sm:$0xf]
        %v610 = vld [vmem:[%s459 + $0x4] sm:$0xf]
        %v611 = vld [vmem:[%s459 + $0x8] sm:$0xf]
        %v612 = vld [vmem:[%s459 + $0xc] sm:$0xf]
        %v613 = vld [vmem:[%s459 + $0x10] sm:$0xf]
        %v614 = vld [vmem:[%s459 + $0x14] sm:$0xf]
        %v615 = vld [vmem:[%s459 + $0x18] sm:$0xf]
        %v616 = vld [vmem:[%s459 + $0x1c] sm:$0xf]
        %v617 = vld [vmem:[%s459 + $0x20] sm:$0xf]
        %v618 = vld [vmem:[%s459 + $0x24] sm:$0xf]
        %v619 = vld [vmem:[%s459 + $0x28] sm:$0xf]
        %v620 = vld [vmem:[%s459 + $0x2c] sm:$0xf]
        %v621 = vld [vmem:[%s459 + $0x30] sm:$0xf]
        %v622 = vld [vmem:[%s459 + $0x34] sm:$0xf]
        %v623 = vld [vmem:[%s459 + $0x38] sm:$0xf]
        %v624 = vld [vmem:[%s459 + $0x3c] sm:$0xf]
        %v625 = vld [vmem:[%s459 + $0x40] sm:$0xf]
        %v626 = vld [vmem:[%s459 + $0x44] sm:$0xf]
        %v627 = vld [vmem:[%s459 + $0x48] sm:$0xf]
        %v628 = vld [vmem:[%s459 + $0x4c] sm:$0xf]
        %v629 = vld [vmem:[%s459 + $0x50] sm:$0xf]
        %v630 = vld [vmem:[%s459 + $0x54] sm:$0xf]
        %v631 = vld [vmem:[%s459 + $0x58] sm:$0xf]
        %v632 = vld [vmem:[%s459 + $0x5c] sm:$0xf]
        %v633 = vld [vmem:[%s459 + $0x60] sm:$0xf]
        %v634 = vld [vmem:[%s459 + $0x64] sm:$0xf]
        %v635 = vld [vmem:[%s459 + $0x68] sm:$0xf]
        %v636 = vld [vmem:[%s459 + $0x6c] sm:$0xf]
        %v637 = vld [vmem:[%s459 + $0x70] sm:$0xf]
        %v638 = vld [vmem:[%s459 + $0x74] sm:$0xf]
        %v639 = vld [vmem:[%s459 + $0x78] sm:$0xf]
        %v640 = vld [vmem:[%s459 + $0x7c] sm:$0xf]
        %v641 = vld [vmem:[%s517] sm:$0xf]
        %v642 = vld [vmem:[%s517 + $0x4] sm:$0xf]
        %v643 = vld [vmem:[%s517 + $0x8] sm:$0xf]
        %v644 = vld [vmem:[%s517 + $0xc] sm:$0xf]
        %v645 = vld [vmem:[%s517 + $0x10] sm:$0xf]
        %v646 = vld [vmem:[%s517 + $0x14] sm:$0xf]
        %v647 = vld [vmem:[%s517 + $0x18] sm:$0xf]
        %v648 = vld [vmem:[%s517 + $0x1c] sm:$0xf]
        %v649 = vld [vmem:[%s517 + $0x20] sm:$0xf]
        %v650 = vld [vmem:[%s517 + $0x24] sm:$0xf]
        %v651 = vld [vmem:[%s517 + $0x28] sm:$0xf]
        %v652 = vld [vmem:[%s517 + $0x2c] sm:$0xf]
        %v653 = vld [vmem:[%s517 + $0x30] sm:$0xf]
        %v654 = vld [vmem:[%s517 + $0x34] sm:$0xf]
        %v655 = vld [vmem:[%s517 + $0x38] sm:$0xf]
        %v656 = vld [vmem:[%s517 + $0x3c] sm:$0xf]
        %v689 = vunpack.c.l.b16 %v609
        %v690 = vunpack.c.l.b16 %v610
        %v691 = vunpack.c.l.b16 %v611
        %v692 = vunpack.c.l.b16 %v612
        %v693 = vunpack.c.l.b16 %v613
        %v694 = vunpack.c.l.b16 %v614
        %v695 = vunpack.c.l.b16 %v615
        %v696 = vunpack.c.l.b16 %v616
        %v697 = vunpack.c.l.b16 %v617
        %v698 = vunpack.c.l.b16 %v618
        %v699 = vunpack.c.l.b16 %v619
        %v700 = vunpack.c.l.b16 %v620
        %v701 = vunpack.c.l.b16 %v621
        %v702 = vunpack.c.l.b16 %v622
        %v703 = vunpack.c.l.b16 %v623
        %v704 = vunpack.c.l.b16 %v624
        %v705 = vunpack.c.l.b16 %v625
        %v706 = vunpack.c.l.b16 %v626
        %v707 = vunpack.c.l.b16 %v627
        %v708 = vunpack.c.l.b16 %v628
        %v709 = vunpack.c.l.b16 %v629
        %v710 = vunpack.c.l.b16 %v630
        %v711 = vunpack.c.l.b16 %v631
        %v712 = vunpack.c.l.b16 %v632
        %v713 = vunpack.c.l.b16 %v633
        %v714 = vunpack.c.l.b16 %v634
        %v715 = vunpack.c.l.b16 %v635
        %v716 = vunpack.c.l.b16 %v636
        %v717 = vunpack.c.l.b16 %v637
        %v718 = vunpack.c.l.b16 %v638
        %v719 = vunpack.c.l.b16 %v639
        %v720 = vunpack.c.l.b16 %v640
        %v721 = vpack.c.b16 %v690, %v689
        %v722 = vpack.c.b16 %v692, %v691
        %v723 = vpack.c.b16 %v694, %v693
        %v724 = vpack.c.b16 %v696, %v695
        %v725 = vpack.c.b16 %v698, %v697
        %v726 = vpack.c.b16 %v700, %v699
        %v727 = vpack.c.b16 %v702, %v701
        %v728 = vpack.c.b16 %v704, %v703
        %v729 = vpack.c.b16 %v706, %v705
        %v730 = vpack.c.b16 %v708, %v707
        %v731 = vpack.c.b16 %v710, %v709
        %v732 = vpack.c.b16 %v712, %v711
        %v733 = vpack.c.b16 %v714, %v713
        %v734 = vpack.c.b16 %v716, %v715
        %v735 = vpack.c.b16 %v718, %v717
        %v736 = vpack.c.b16 %v720, %v719
        %v769 = vunpack.c.l.b16 %v641
        %v770 = vunpack.c.l.b16 %v642
        %v771 = vunpack.c.l.b16 %v643
        %v772 = vunpack.c.l.b16 %v644
        %v773 = vunpack.c.l.b16 %v645
        %v774 = vunpack.c.l.b16 %v646
        %v775 = vunpack.c.l.b16 %v647
        %v776 = vunpack.c.l.b16 %v648
        %v777 = vunpack.c.l.b16 %v649
        %v778 = vunpack.c.l.b16 %v650
        %v779 = vunpack.c.l.b16 %v651
        %v780 = vunpack.c.l.b16 %v652
        %v781 = vunpack.c.l.b16 %v653
        %v782 = vunpack.c.l.b16 %v654
        %v783 = vunpack.c.l.b16 %v655
        %v784 = vunpack.c.l.b16 %v656
        %v785 = vpack.c.b16 %v770, %v769
        %v786 = vpack.c.b16 %v772, %v771
        %v787 = vpack.c.b16 %v774, %v773
        %v788 = vpack.c.b16 %v776, %v775
        %v789 = vpack.c.b16 %v778, %v777
        %v790 = vpack.c.b16 %v780, %v779
        %v791 = vpack.c.b16 %v782, %v781
        %v792 = vpack.c.b16 %v784, %v783
        %801 = vmatprep.subr.bf16.mxu0 0
        %802 = vmatpush1.bf16.msra.mxu0 %v785
        %803 = vmatprep.subr.bf16.mxu0 0
        %804 = vmatpush1.bf16.msra.mxu0 %v786
        %805 = vmatprep.subr.bf16.mxu0 0
        %806 = vmatpush1.bf16.msra.mxu0 %v787
        %807 = vmatprep.subr.bf16.mxu0 0
        %808 = vmatpush1.bf16.msra.mxu0 %v788
        %809 = vmatprep.subr.bf16.mxu0 0
        %810 = vmatpush1.bf16.msra.mxu0 %v789
        %811 = vmatprep.subr.bf16.mxu0 0
        %812 = vmatpush1.bf16.msra.mxu0 %v790
        %813 = vmatprep.subr.bf16.mxu0 0
        %814 = vmatpush1.bf16.msra.mxu0 %v791
        %815 = vmatprep.subr.bf16.mxu0 0
        %816 = vmatpush1.bf16.msra.mxu0 %v792
        %817 = vmatprep.subr.bf16.mxu0 0
        %818 = vmatpush1.bf16.msra.mxu0 0
        %819 = vmatprep.subr.bf16.mxu0 0
        %820 = vmatpush1.bf16.msra.mxu0 0
        %821 = vmatprep.subr.bf16.mxu0 0
        %822 = vmatpush1.bf16.msra.mxu0 0
        %823 = vmatprep.subr.bf16.mxu0 0
        %824 = vmatpush1.bf16.msra.mxu0 0
        %825 = vmatprep.subr.bf16.mxu0 0
        %826 = vmatpush1.bf16.msra.mxu0 0
        %827 = vmatprep.subr.bf16.mxu0 0
        %828 = vmatpush1.bf16.msra.mxu0 0
        %829 = vmatprep.subr.bf16.mxu0 0
        %830 = vmatpush1.bf16.msra.mxu0 0
        %831 = vmatprep.subr.bf16.mxu0 0
        %832 = vmatpush1.bf16.msra.mxu0 0
        %833 = vmatprep.mubr.bf16.mxu0 0
        %834 = vmatmul.mubr.bf16.gmra.mrb[0].mxu0 %v721
        %v835 = vpop.f32.mrb[0].mxu0
        %v836 = vadd.f32 0.0, %v835
        %v837 = vpop.f32.mrb[0].mxu0
        %v838 = vpop.f32.mrb[0].mxu0
        %v839 = vadd.f32 0.0, %v838
        %v840 = vpop.f32.mrb[0].mxu0
        %841 = vmatprep.mubr.bf16.mxu0 0
        %842 = vmatmul.mubr.bf16.gmra.mrb[0].mxu0 %v722
        %v843 = vpop.f32.mrb[0].mxu0
        %v844 = vadd.f32 0.0, %v843
        %v845 = vpop.f32.mrb[0].mxu0
        %v846 = vpop.f32.mrb[0].mxu0
        %v847 = vadd.f32 0.0, %v846
        %v848 = vpop.f32.mrb[0].mxu0
        %849 = vmatprep.mubr.bf16.mxu0 0
        %850 = vmatmul.mubr.bf16.gmra.mrb[0].mxu0 %v723
        %v851 = vpop.f32.mrb[0].mxu0
        %v852 = vadd.f32 0.0, %v851
        %v853 = vpop.f32.mrb[0].mxu0
        %v854 = vpop.f32.mrb[0].mxu0
        %v855 = vadd.f32 0.0, %v854
        %v856 = vpop.f32.mrb[0].mxu0
        %857 = vmatprep.mubr.bf16.mxu0 0
        %858 = vmatmul.mubr.bf16.gmra.mrb[0].mxu0 %v724
        %v859 = vpop.f32.mrb[0].mxu0
        %v860 = vadd.f32 0.0, %v859
        %v861 = vpop.f32.mrb[0].mxu0
        %v862 = vpop.f32.mrb[0].mxu0
        %v863 = vadd.f32 0.0, %v862
        %v864 = vpop.f32.mrb[0].mxu0
        %865 = vmatprep.mubr.bf16.mxu0 0
        %866 = vmatmul.mubr.bf16.gmra.mrb[0].mxu0 %v725
        %v867 = vpop.f32.mrb[0].mxu0
        %v868 = vadd.f32 0.0, %v867
        %v869 = vpop.f32.mrb[0].mxu0
        %v870 = vpop.f32.mrb[0].mxu0
        %v871 = vadd.f32 0.0, %v870
        %v872 = vpop.f32.mrb[0].mxu0
        %873 = vmatprep.mubr.bf16.mxu0 0
        %874 = vmatmul.mubr.bf16.gmra.mrb[0].mxu0 %v726
        %v875 = vpop.f32.mrb[0].mxu0
        %v876 = vadd.f32 0.0, %v875
        %v877 = vpop.f32.mrb[0].mxu0
        %v878 = vpop.f32.mrb[0].mxu0
        %v879 = vadd.f32 0.0, %v878
        %v880 = vpop.f32.mrb[0].mxu0
        %881 = vmatprep.mubr.bf16.mxu0 0
        %882 = vmatmul.mubr.bf16.gmra.mrb[0].mxu0 %v727
        %v883 = vpop.f32.mrb[0].mxu0
        %v884 = vadd.f32 0.0, %v883
        %v885 = vpop.f32.mrb[0].mxu0
        %v886 = vpop.f32.mrb[0].mxu0
        %v887 = vadd.f32 0.0, %v886
        %v888 = vpop.f32.mrb[0].mxu0
        %889 = vmatprep.mubr.bf16.mxu0 0
        %890 = vmatmul.mubr.bf16.gmra.mrb[0].mxu0 %v728
        %v891 = vpop.f32.mrb[0].mxu0
        %v892 = vadd.f32 0.0, %v891
        %v893 = vpop.f32.mrb[0].mxu0
        %v894 = vpop.f32.mrb[0].mxu0
        %v895 = vadd.f32 0.0, %v894
        %v896 = vpop.f32.mrb[0].mxu0
        %897 = vmatprep.mubr.bf16.mxu0 0
        %898 = vmatmul.mubr.bf16.gmra.mrb[0].mxu0 %v729
        %v899 = vpop.f32.mrb[0].mxu0
        %v900 = vadd.f32 0.0, %v899
        %v901 = vpop.f32.mrb[0].mxu0
        %v902 = vpop.f32.mrb[0].mxu0
        %v903 = vadd.f32 0.0, %v902
        %v904 = vpop.f32.mrb[0].mxu0
        %905 = vmatprep.mubr.bf16.mxu0 0
        %906 = vmatmul.mubr.bf16.gmra.mrb[0].mxu0 %v730
        %v907 = vpop.f32.mrb[0].mxu0
        %v908 = vadd.f32 0.0, %v907
        %v909 = vpop.f32.mrb[0].mxu0
        %v910 = vpop.f32.mrb[0].mxu0
        %v911 = vadd.f32 0.0, %v910
        %v912 = vpop.f32.mrb[0].mxu0
        %913 = vmatprep.mubr.bf16.mxu0 0
        %914 = vmatmul.mubr.bf16.gmra.mrb[0].mxu0 %v731
        %v915 = vpop.f32.mrb[0].mxu0
        %v916 = vadd.f32 0.0, %v915
        %v917 = vpop.f32.mrb[0].mxu0
        %v918 = vpop.f32.mrb[0].mxu0
        %v919 = vadd.f32 0.0, %v918
        %v920 = vpop.f32.mrb[0].mxu0
        %921 = vmatprep.mubr.bf16.mxu0 0
        %922 = vmatmul.mubr.bf16.gmra.mrb[0].mxu0 %v732
        %v923 = vpop.f32.mrb[0].mxu0
        %v924 = vadd.f32 0.0, %v923
        %v925 = vpop.f32.mrb[0].mxu0
        %v926 = vpop.f32.mrb[0].mxu0
        %v927 = vadd.f32 0.0, %v926
        %v928 = vpop.f32.mrb[0].mxu0
        %929 = vmatprep.mubr.bf16.mxu0 0
        %930 = vmatmul.mubr.bf16.gmra.mrb[0].mxu0 %v733
        %v931 = vpop.f32.mrb[0].mxu0
        %v932 = vadd.f32 0.0, %v931
        %v933 = vpop.f32.mrb[0].mxu0
        %v934 = vpop.f32.mrb[0].mxu0
        %v935 = vadd.f32 0.0, %v934
        %v936 = vpop.f32.mrb[0].mxu0
        %937 = vmatprep.mubr.bf16.mxu0 0
        %938 = vmatmul.mubr.bf16.gmra.mrb[0].mxu0 %v734
        %v939 = vpop.f32.mrb[0].mxu0
        %v940 = vadd.f32 0.0, %v939
        %v941 = vpop.f32.mrb[0].mxu0
        %v942 = vpop.f32.mrb[0].mxu0
        %v943 = vadd.f32 0.0, %v942
        %v944 = vpop.f32.mrb[0].mxu0
        %945 = vmatprep.mubr.bf16.mxu0 0
        %946 = vmatmul.mubr.bf16.gmra.mrb[0].mxu0 %v735
        %v947 = vpop.f32.mrb[0].mxu0
        %v948 = vadd.f32 0.0, %v947
        %v949 = vpop.f32.mrb[0].mxu0
        %v950 = vpop.f32.mrb[0].mxu0
        %v951 = vadd.f32 0.0, %v950
        %v952 = vpop.f32.mrb[0].mxu0
        %953 = vmatprep.mubr.bf16.mxu0 0
        %954 = vmatmul.mubr.bf16.gmra.mrb[0].mxu0 %v736
        %v955 = vpop.f32.mrb[0].mxu0
        %v956 = vadd.f32 0.0, %v955
        %v957 = vpop.f32.mrb[0].mxu0
        %v958 = vpop.f32.mrb[0].mxu0
        %v959 = vadd.f32 0.0, %v958
        %v960 = vpop.f32.mrb[0].mxu0
        %961 = vdwg.mxu0
        %v962 = vadd.f32 %v577, %v836
        %v963 = vadd.f32 %v578, %v839
        %v964 = vadd.f32 %v579, %v844
        %v965 = vadd.f32 %v580, %v847
        %v966 = vadd.f32 %v581, %v852
        %v967 = vadd.f32 %v582, %v855
        %v968 = vadd.f32 %v583, %v860
        %v969 = vadd.f32 %v584, %v863
        %v970 = vadd.f32 %v585, %v868
        %v971 = vadd.f32 %v586, %v871
        %v972 = vadd.f32 %v587, %v876
        %v973 = vadd.f32 %v588, %v879
        %v974 = vadd.f32 %v589, %v884
        %v975 = vadd.f32 %v590, %v887
        %v976 = vadd.f32 %v591, %v892
        %v977 = vadd.f32 %v592, %v895
        %v978 = vadd.f32 %v593, %v900
        %v979 = vadd.f32 %v594, %v903
        %v980 = vadd.f32 %v595, %v908
        %v981 = vadd.f32 %v596, %v911
        %v982 = vadd.f32 %v597, %v916
        %v983 = vadd.f32 %v598, %v919
        %v984 = vadd.f32 %v599, %v924
        %v985 = vadd.f32 %v600, %v927
        %v986 = vadd.f32 %v601, %v932
        %v987 = vadd.f32 %v602, %v935
        %v988 = vadd.f32 %v603, %v940
        %v989 = vadd.f32 %v604, %v943
        %v990 = vadd.f32 %v605, %v948
        %v991 = vadd.f32 %v606, %v951
        %v992 = vadd.f32 %v607, %v956
        %v993 = vadd.f32 %v608, %v959
        %994 = vst [vmem:[#allocation2] sm:$0xff] %v962
        %995 = vst [vmem:[#allocation2 + $0x8] sm:$0xff] %v963
        %996 = vst [vmem:[#allocation2 + $0x10] sm:$0xff] %v964
        %997 = vst [vmem:[#allocation2 + $0x18] sm:$0xff] %v965
        %998 = vst [vmem:[#allocation2 + $0x20] sm:$0xff] %v966
        %999 = vst [vmem:[#allocation2 + $0x28] sm:$0xff] %v967
        %1000 = vst [vmem:[#allocation2 + $0x30] sm:$0xff] %v968
        %1001 = vst [vmem:[#allocation2 + $0x38] sm:$0xff] %v969
        %1002 = vst [vmem:[#allocation2 + $0x40] sm:$0xff] %v970
        %1003 = vst [vmem:[#allocation2 + $0x48] sm:$0xff] %v971
        %1004 = vst [vmem:[#allocation2 + $0x50] sm:$0xff] %v972
        %1005 = vst [vmem:[#allocation2 + $0x58] sm:$0xff] %v973
        %1006 = vst [vmem:[#allocation2 + $0x60] sm:$0xff] %v974
        %1007 = vst [vmem:[#allocation2 + $0x68] sm:$0xff] %v975
        %1008 = vst [vmem:[#allocation2 + $0x70] sm:$0xff] %v976
        %1009 = vst [vmem:[#allocation2 + $0x78] sm:$0xff] %v977
        %1010 = vst [vmem:[#allocation2 + $0x80] sm:$0xff] %v978
        %1011 = vst [vmem:[#allocation2 + $0x88] sm:$0xff] %v979
        %1012 = vst [vmem:[#allocation2 + $0x90] sm:$0xff] %v980
        %1013 = vst [vmem:[#allocation2 + $0x98] sm:$0xff] %v981
        %1014 = vst [vmem:[#allocation2 + $0xa0] sm:$0xff] %v982
        %1015 = vst [vmem:[#allocation2 + $0xa8] sm:$0xff] %v983
        %1016 = vst [vmem:[#allocation2 + $0xb0] sm:$0xff] %v984
        %1017 = vst [vmem:[#allocation2 + $0xb8] sm:$0xff] %v985
        %1018 = vst [vmem:[#allocation2 + $0xc0] sm:$0xff] %v986
        %1019 = vst [vmem:[#allocation2 + $0xc8] sm:$0xff] %v987
        %1020 = vst [vmem:[#allocation2 + $0xd0] sm:$0xff] %v988
        %1021 = vst [vmem:[#allocation2 + $0xd8] sm:$0xff] %v989
        %1022 = vst [vmem:[#allocation2 + $0xe0] sm:$0xff] %v990
        %1023 = vst [vmem:[#allocation2 + $0xe8] sm:$0xff] %v991
        %1024 = vst [vmem:[#allocation2 + $0xf0] sm:$0xff] %v992
        %1025 = vst [vmem:[#allocation2 + $0xf8] sm:$0xff] %v993
        %p1026 = scmp.eq.s32.totalorder %s24, 8
        // Predicated region
        $region90: #{resnet_gcn_forward.11} parent=80 // pred_check
          %p1027 = pneg %p1026
        $region91: #{resnet_gcn_forward.11} parent=80 // pred_check_branch
          %1029 = sbr.rel (%p1027) target = $region93
        $region92: #{resnet_gcn_forward.11} parent=80 // pred_region
          %v1030 = vld [vmem:[#allocation2] sm:$0xff]
          %v1031 = vld [vmem:[#allocation2 + $0x8] sm:$0xff]
          %v1032 = vld [vmem:[#allocation2 + $0x10] sm:$0xff]
          %v1033 = vld [vmem:[#allocation2 + $0x18] sm:$0xff]
          %v1034 = vld [vmem:[#allocation2 + $0x20] sm:$0xff]
          %v1035 = vld [vmem:[#allocation2 + $0x28] sm:$0xff]
          %v1036 = vld [vmem:[#allocation2 + $0x30] sm:$0xff]
          %v1037 = vld [vmem:[#allocation2 + $0x38] sm:$0xff]
          %v1038 = vld [vmem:[#allocation2 + $0x40] sm:$0xff]
          %v1039 = vld [vmem:[#allocation2 + $0x48] sm:$0xff]
          %v1040 = vld [vmem:[#allocation2 + $0x50] sm:$0xff]
          %v1041 = vld [vmem:[#allocation2 + $0x58] sm:$0xff]
          %v1042 = vld [vmem:[#allocation2 + $0x60] sm:$0xff]
          %v1043 = vld [vmem:[#allocation2 + $0x68] sm:$0xff]
          %v1044 = vld [vmem:[#allocation2 + $0x70] sm:$0xff]
          %v1045 = vld [vmem:[#allocation2 + $0x78] sm:$0xff]
          %v1046 = vld [vmem:[#allocation2 + $0x80] sm:$0xff]
          %v1047 = vld [vmem:[#allocation2 + $0x88] sm:$0xff]
          %v1048 = vld [vmem:[#allocation2 + $0x90] sm:$0xff]
          %v1049 = vld [vmem:[#allocation2 + $0x98] sm:$0xff]
          %v1050 = vld [vmem:[#allocation2 + $0xa0] sm:$0xff]
          %v1051 = vld [vmem:[#allocation2 + $0xa8] sm:$0xff]
          %v1052 = vld [vmem:[#allocation2 + $0xb0] sm:$0xff]
          %v1053 = vld [vmem:[#allocation2 + $0xb8] sm:$0xff]
          %v1054 = vld [vmem:[#allocation2 + $0xc0] sm:$0xff]
          %v1055 = vld [vmem:[#allocation2 + $0xc8] sm:$0xff]
          %v1056 = vld [vmem:[#allocation2 + $0xd0] sm:$0xff]
          %v1057 = vld [vmem:[#allocation2 + $0xd8] sm:$0xff]
          %v1058 = vld [vmem:[#allocation2 + $0xe0] sm:$0xff]
          %v1059 = vld [vmem:[#allocation2 + $0xe8] sm:$0xff]
          %v1060 = vld [vmem:[#allocation2 + $0xf0] sm:$0xff]
          %v1061 = vld [vmem:[#allocation2 + $0xf8] sm:$0xff]
          %v1062 = vld [vmem:[%s521] sm:$0x1]
          %v1064 = vlaneseq
          %v1065 = vshrl.u32 %v1064, 7
          %v1066 = vsub.s32 0, %v1065
          %v1067 = vrot.slane %v1062, %v1066
          %v1069 = vmul.f32 %v1030, %v1067
          %v1070 = vmul.f32 %v1031, %v1067
          %v1071 = vmul.f32 %v1032, %v1067
          %v1072 = vmul.f32 %v1033, %v1067
          %v1073 = vmul.f32 %v1034, %v1067
          %v1074 = vmul.f32 %v1035, %v1067
          %v1075 = vmul.f32 %v1036, %v1067
          %v1076 = vmul.f32 %v1037, %v1067
          %v1077 = vmul.f32 %v1038, %v1067
          %v1078 = vmul.f32 %v1039, %v1067
          %v1079 = vmul.f32 %v1040, %v1067
          %v1080 = vmul.f32 %v1041, %v1067
          %v1081 = vmul.f32 %v1042, %v1067
          %v1082 = vmul.f32 %v1043, %v1067
          %v1083 = vmul.f32 %v1044, %v1067
          %v1084 = vmul.f32 %v1045, %v1067
          %v1085 = vmul.f32 %v1046, %v1067
          %v1086 = vmul.f32 %v1047, %v1067
          %v1087 = vmul.f32 %v1048, %v1067
          %v1088 = vmul.f32 %v1049, %v1067
          %v1089 = vmul.f32 %v1050, %v1067
          %v1090 = vmul.f32 %v1051, %v1067
          %v1091 = vmul.f32 %v1052, %v1067
          %v1092 = vmul.f32 %v1053, %v1067
          %v1093 = vmul.f32 %v1054, %v1067
          %v1094 = vmul.f32 %v1055, %v1067
          %v1095 = vmul.f32 %v1056, %v1067
          %v1096 = vmul.f32 %v1057, %v1067
          %v1097 = vmul.f32 %v1058, %v1067
          %v1098 = vmul.f32 %v1059, %v1067
          %v1099 = vmul.f32 %v1060, %v1067
          %v1100 = vmul.f32 %v1061, %v1067
          %v1101 = vld [vmem:[%s524] sm:$0x1]
          %v1103 = vlaneseq
          %v1104 = vshrl.u32 %v1103, 7
          %v1105 = vsub.s32 0, %v1104
          %v1106 = vrot.slane %v1101, %v1105
          %v1108 = vadd.f32 %v1069, %v1106
          %v1109 = vadd.f32 %v1070, %v1106
          %v1110 = vadd.f32 %v1071, %v1106
          %v1111 = vadd.f32 %v1072, %v1106
          %v1112 = vadd.f32 %v1073, %v1106
          %v1113 = vadd.f32 %v1074, %v1106
          %v1114 = vadd.f32 %v1075, %v1106
          %v1115 = vadd.f32 %v1076, %v1106
          %v1116 = vadd.f32 %v1077, %v1106
          %v1117 = vadd.f32 %v1078, %v1106
          %v1118 = vadd.f32 %v1079, %v1106
          %v1119 = vadd.f32 %v1080, %v1106
          %v1120 = vadd.f32 %v1081, %v1106
          %v1121 = vadd.f32 %v1082, %v1106
          %v1122 = vadd.f32 %v1083, %v1106
          %v1123 = vadd.f32 %v1084, %v1106
          %v1124 = vadd.f32 %v1085, %v1106
          %v1125 = vadd.f32 %v1086, %v1106
          %v1126 = vadd.f32 %v1087, %v1106
          %v1127 = vadd.f32 %v1088, %v1106
          %v1128 = vadd.f32 %v1089, %v1106
          %v1129 = vadd.f32 %v1090, %v1106
          %v1130 = vadd.f32 %v1091, %v1106
          %v1131 = vadd.f32 %v1092, %v1106
          %v1132 = vadd.f32 %v1093, %v1106
          %v1133 = vadd.f32 %v1094, %v1106
          %v1134 = vadd.f32 %v1095, %v1106
          %v1135 = vadd.f32 %v1096, %v1106
          %v1136 = vadd.f32 %v1097, %v1106
          %v1137 = vadd.f32 %v1098, %v1106
          %v1138 = vadd.f32 %v1099, %v1106
          %v1139 = vadd.f32 %v1100, %v1106
          %v1140 = vld [vmem:[%s527] sm:$0x1]
          %v1142 = vlaneseq
          %v1143 = vshrl.u32 %v1142, 7
          %v1144 = vsub.s32 0, %v1143
          %v1145 = vrot.slane %v1140, %v1144
          %v1147 = vmul.f32 %v1108, %v1145
          %v1148 = vmul.f32 %v1109, %v1145
          %v1149 = vmul.f32 %v1110, %v1145
          %v1150 = vmul.f32 %v1111, %v1145
          %v1151 = vmul.f32 %v1112, %v1145
          %v1152 = vmul.f32 %v1113, %v1145
          %v1153 = vmul.f32 %v1114, %v1145
          %v1154 = vmul.f32 %v1115, %v1145
          %v1155 = vmul.f32 %v1116, %v1145
          %v1156 = vmul.f32 %v1117, %v1145
          %v1157 = vmul.f32 %v1118, %v1145
          %v1158 = vmul.f32 %v1119, %v1145
          %v1159 = vmul.f32 %v1120, %v1145
          %v1160 = vmul.f32 %v1121, %v1145
          %v1161 = vmul.f32 %v1122, %v1145
          %v1162 = vmul.f32 %v1123, %v1145
          %v1163 = vmul.f32 %v1124, %v1145
          %v1164 = vmul.f32 %v1125, %v1145
          %v1165 = vmul.f32 %v1126, %v1145
          %v1166 = vmul.f32 %v1127, %v1145
          %v1167 = vmul.f32 %v1128, %v1145
          %v1168 = vmul.f32 %v1129, %v1145
          %v1169 = vmul.f32 %v1130, %v1145
          %v1170 = vmul.f32 %v1131, %v1145
          %v1171 = vmul.f32 %v1132, %v1145
          %v1172 = vmul.f32 %v1133, %v1145
          %v1173 = vmul.f32 %v1134, %v1145
          %v1174 = vmul.f32 %v1135, %v1145
          %v1175 = vmul.f32 %v1136, %v1145
          %v1176 = vmul.f32 %v1137, %v1145
          %v1177 = vmul.f32 %v1138, %v1145
          %v1178 = vmul.f32 %v1139, %v1145
          %v1179 = vld [vmem:[%s530] sm:$0x1]
          %v1181 = vlaneseq
          %v1182 = vshrl.u32 %v1181, 7
          %v1183 = vsub.s32 0, %v1182
          %v1184 = vrot.slane %v1179, %v1183
          %v1186 = vadd.f32 %v1147, %v1184
          %v1187 = vadd.f32 %v1148, %v1184
          %v1188 = vadd.f32 %v1149, %v1184
          %v1189 = vadd.f32 %v1150, %v1184
          %v1190 = vadd.f32 %v1151, %v1184
          %v1191 = vadd.f32 %v1152, %v1184
          %v1192 = vadd.f32 %v1153, %v1184
          %v1193 = vadd.f32 %v1154, %v1184
          %v1194 = vadd.f32 %v1155, %v1184
          %v1195 = vadd.f32 %v1156, %v1184
          %v1196 = vadd.f32 %v1157, %v1184
          %v1197 = vadd.f32 %v1158, %v1184
          %v1198 = vadd.f32 %v1159, %v1184
          %v1199 = vadd.f32 %v1160, %v1184
          %v1200 = vadd.f32 %v1161, %v1184
          %v1201 = vadd.f32 %v1162, %v1184
          %v1202 = vadd.f32 %v1163, %v1184
          %v1203 = vadd.f32 %v1164, %v1184
          %v1204 = vadd.f32 %v1165, %v1184
          %v1205 = vadd.f32 %v1166, %v1184
          %v1206 = vadd.f32 %v1167, %v1184
          %v1207 = vadd.f32 %v1168, %v1184
          %v1208 = vadd.f32 %v1169, %v1184
          %v1209 = vadd.f32 %v1170, %v1184
          %v1210 = vadd.f32 %v1171, %v1184
          %v1211 = vadd.f32 %v1172, %v1184
          %v1212 = vadd.f32 %v1173, %v1184
          %v1213 = vadd.f32 %v1174, %v1184
          %v1214 = vadd.f32 %v1175, %v1184
          %v1215 = vadd.f32 %v1176, %v1184
          %v1216 = vadd.f32 %v1177, %v1184
          %v1217 = vadd.f32 %v1178, %v1184
          %v1218 = vmax.f32 %v1186, 0.0
          %v1219 = vmax.f32 %v1187, 0.0
          %v1220 = vmax.f32 %v1188, 0.0
          %v1221 = vmax.f32 %v1189, 0.0
          %v1222 = vmax.f32 %v1190, 0.0
          %v1223 = vmax.f32 %v1191, 0.0
          %v1224 = vmax.f32 %v1192, 0.0
          %v1225 = vmax.f32 %v1193, 0.0
          %v1226 = vmax.f32 %v1194, 0.0
          %v1227 = vmax.f32 %v1195, 0.0
          %v1228 = vmax.f32 %v1196, 0.0
          %v1229 = vmax.f32 %v1197, 0.0
          %v1230 = vmax.f32 %v1198, 0.0
          %v1231 = vmax.f32 %v1199, 0.0
          %v1232 = vmax.f32 %v1200, 0.0
          %v1233 = vmax.f32 %v1201, 0.0
          %v1234 = vmax.f32 %v1202, 0.0
          %v1235 = vmax.f32 %v1203, 0.0
          %v1236 = vmax.f32 %v1204, 0.0
          %v1237 = vmax.f32 %v1205, 0.0
          %v1238 = vmax.f32 %v1206, 0.0
          %v1239 = vmax.f32 %v1207, 0.0
          %v1240 = vmax.f32 %v1208, 0.0
          %v1241 = vmax.f32 %v1209, 0.0
          %v1242 = vmax.f32 %v1210, 0.0
          %v1243 = vmax.f32 %v1211, 0.0
          %v1244 = vmax.f32 %v1212, 0.0
          %v1245 = vmax.f32 %v1213, 0.0
          %v1246 = vmax.f32 %v1214, 0.0
          %v1247 = vmax.f32 %v1215, 0.0
          %v1248 = vmax.f32 %v1216, 0.0
          %v1249 = vmax.f32 %v1217, 0.0
          %v1250 = vpack.c.bf16 %v1219, %v1218
          %v1251 = vpack.c.bf16 %v1221, %v1220
          %v1252 = vpack.c.bf16 %v1223, %v1222
          %v1253 = vpack.c.bf16 %v1225, %v1224
          %v1254 = vpack.c.bf16 %v1227, %v1226
          %v1255 = vpack.c.bf16 %v1229, %v1228
          %v1256 = vpack.c.bf16 %v1231, %v1230
          %v1257 = vpack.c.bf16 %v1233, %v1232
          %v1258 = vpack.c.bf16 %v1235, %v1234
          %v1259 = vpack.c.bf16 %v1237, %v1236
          %v1260 = vpack.c.bf16 %v1239, %v1238
          %v1261 = vpack.c.bf16 %v1241, %v1240
          %v1262 = vpack.c.bf16 %v1243, %v1242
          %v1263 = vpack.c.bf16 %v1245, %v1244
          %v1264 = vpack.c.bf16 %v1247, %v1246
          %v1265 = vpack.c.bf16 %v1249, %v1248
          %v1282 = vunpack.c.l.b16 %v1250
          %v1283 = vunpack.c.h.b16 %v1250
          %v1284 = vunpack.c.l.b16 %v1251
          %v1285 = vunpack.c.h.b16 %v1251
          %v1286 = vunpack.c.l.b16 %v1252
          %v1287 = vunpack.c.h.b16 %v1252
          %v1288 = vunpack.c.l.b16 %v1253
          %v1289 = vunpack.c.h.b16 %v1253
          %v1290 = vunpack.c.l.b16 %v1254
          %v1291 = vunpack.c.h.b16 %v1254
          %v1292 = vunpack.c.l.b16 %v1255
          %v1293 = vunpack.c.h.b16 %v1255
          %v1294 = vunpack.c.l.b16 %v1256
          %v1295 = vunpack.c.h.b16 %v1256
          %v1296 = vunpack.c.l.b16 %v1257
          %v1297 = vunpack.c.h.b16 %v1257
          %v1298 = vunpack.c.l.b16 %v1258
          %v1299 = vunpack.c.h.b16 %v1258
          %v1300 = vunpack.c.l.b16 %v1259
          %v1301 = vunpack.c.h.b16 %v1259
          %v1302 = vunpack.c.l.b16 %v1260
          %v1303 = vunpack.c.h.b16 %v1260
          %v1304 = vunpack.c.l.b16 %v1261
          %v1305 = vunpack.c.h.b16 %v1261
          %v1306 = vunpack.c.l.b16 %v1262
          %v1307 = vunpack.c.h.b16 %v1262
          %v1308 = vunpack.c.l.b16 %v1263
          %v1309 = vunpack.c.h.b16 %v1263
          %v1310 = vunpack.c.l.b16 %v1264
          %v1311 = vunpack.c.h.b16 %v1264
          %v1312 = vunpack.c.l.b16 %v1265
          %v1313 = vunpack.c.h.b16 %v1265
          %v1314 = vpack.c.b16 %v1282, %v1282
          %v1315 = vpack.c.b16 %v1283, %v1283
          %v1316 = vpack.c.b16 %v1284, %v1284
          %v1317 = vpack.c.b16 %v1285, %v1285
          %v1318 = vpack.c.b16 %v1286, %v1286
          %v1319 = vpack.c.b16 %v1287, %v1287
          %v1320 = vpack.c.b16 %v1288, %v1288
          %v1321 = vpack.c.b16 %v1289, %v1289
          %v1322 = vpack.c.b16 %v1290, %v1290
          %v1323 = vpack.c.b16 %v1291, %v1291
          %v1324 = vpack.c.b16 %v1292, %v1292
          %v1325 = vpack.c.b16 %v1293, %v1293
          %v1326 = vpack.c.b16 %v1294, %v1294
          %v1327 = vpack.c.b16 %v1295, %v1295
          %v1328 = vpack.c.b16 %v1296, %v1296
          %v1329 = vpack.c.b16 %v1297, %v1297
          %v1330 = vpack.c.b16 %v1298, %v1298
          %v1331 = vpack.c.b16 %v1299, %v1299
          %v1332 = vpack.c.b16 %v1300, %v1300
          %v1333 = vpack.c.b16 %v1301, %v1301
          %v1334 = vpack.c.b16 %v1302, %v1302
          %v1335 = vpack.c.b16 %v1303, %v1303
          %v1336 = vpack.c.b16 %v1304, %v1304
          %v1337 = vpack.c.b16 %v1305, %v1305
          %v1338 = vpack.c.b16 %v1306, %v1306
          %v1339 = vpack.c.b16 %v1307, %v1307
          %v1340 = vpack.c.b16 %v1308, %v1308
          %v1341 = vpack.c.b16 %v1309, %v1309
          %v1342 = vpack.c.b16 %v1310, %v1310
          %v1343 = vpack.c.b16 %v1311, %v1311
          %v1344 = vpack.c.b16 %v1312, %v1312
          %v1345 = vpack.c.b16 %v1313, %v1313
          %1378 = vst [vmem:[%s538] sm:$0xf] %v1314
          %1379 = vst [vmem:[%s538 + $0x4] sm:$0xf] %v1315
          %1380 = vst [vmem:[%s538 + $0x8] sm:$0xf] %v1316
          %1381 = vst [vmem:[%s538 + $0xc] sm:$0xf] %v1317
          %1382 = vst [vmem:[%s538 + $0x10] sm:$0xf] %v1318
          %1383 = vst [vmem:[%s538 + $0x14] sm:$0xf] %v1319
          %1384 = vst [vmem:[%s538 + $0x18] sm:$0xf] %v1320
          %1385 = vst [vmem:[%s538 + $0x1c] sm:$0xf] %v1321
          %1386 = vst [vmem:[%s538 + $0x20] sm:$0xf] %v1322
          %1387 = vst [vmem:[%s538 + $0x24] sm:$0xf] %v1323
          %1388 = vst [vmem:[%s538 + $0x28] sm:$0xf] %v1324
          %1389 = vst [vmem:[%s538 + $0x2c] sm:$0xf] %v1325
          %1390 = vst [vmem:[%s538 + $0x30] sm:$0xf] %v1326
          %1391 = vst [vmem:[%s538 + $0x34] sm:$0xf] %v1327
          %1392 = vst [vmem:[%s538 + $0x38] sm:$0xf] %v1328
          %1393 = vst [vmem:[%s538 + $0x3c] sm:$0xf] %v1329
          %1394 = vst [vmem:[%s538 + $0x40] sm:$0xf] %v1330
          %1395 = vst [vmem:[%s538 + $0x44] sm:$0xf] %v1331
          %1396 = vst [vmem:[%s538 + $0x48] sm:$0xf] %v1332
          %1397 = vst [vmem:[%s538 + $0x4c] sm:$0xf] %v1333
          %1398 = vst [vmem:[%s538 + $0x50] sm:$0xf] %v1334
          %1399 = vst [vmem:[%s538 + $0x54] sm:$0xf] %v1335
          %1400 = vst [vmem:[%s538 + $0x58] sm:$0xf] %v1336
          %1401 = vst [vmem:[%s538 + $0x5c] sm:$0xf] %v1337
          %1402 = vst [vmem:[%s538 + $0x60] sm:$0xf] %v1338
          %1403 = vst [vmem:[%s538 + $0x64] sm:$0xf] %v1339
          %1404 = vst [vmem:[%s538 + $0x68] sm:$0xf] %v1340
          %1405 = vst [vmem:[%s538 + $0x6c] sm:$0xf] %v1341
          %1406 = vst [vmem:[%s538 + $0x70] sm:$0xf] %v1342
          %1407 = vst [vmem:[%s538 + $0x74] sm:$0xf] %v1343
          %1408 = vst [vmem:[%s538 + $0x78] sm:$0xf] %v1344
          %1409 = vst [vmem:[%s538 + $0x7c] sm:$0xf] %v1345
        $region93: #{resnet_gcn_forward.11} parent=80 // pred_fallthru
          _
        %s1410 = smul.u32 32, %s22
        %p1411 = scmp.lt.s32.totalorder %s1410, 255
        %s1412 = scalar_select %p1411, %s1410, 255
        %p1413 = scmp.lt.s32.totalorder %s23, 0
        %s1414 = scalar_select %p1413, %s23, 0
        %s1415 = sadd.s32 %s1414, %s1412
        %s1416 = smul.addr %s1415, 4
        %s1417 = scalar_lea.vmem %s6, %s1416
        // Predicated region
        $region94: #{resnet_gcn_forward.11} parent=80 // pred_check
          %p1418 = pneg %p216
        $region95: #{resnet_gcn_forward.11} parent=80 // pred_check_branch
          %1420 = sbr.rel (%p1418) target = $region97
        $region96: #{resnet_gcn_forward.11} parent=80 // pred_region
          %s1421 = smul.u32 32, %s22
        $region97: #{resnet_gcn_forward.11} parent=80 // pred_fallthru
          _
      $region81: #{resnet_gcn_forward.11} parent=5 // pred_fallthru
        _
      %p1422 = scmp.le.s32.totalorder 2, %s12
      // Predicated region
      $region98: #{resnet_gcn_forward.11} parent=5 // pred_check
        %p1423 = pneg %p1422
      $region99: #{resnet_gcn_forward.11} parent=5 // pred_check_branch
        %1425 = sbr.rel (%p1423) target = $region101
      $region100: #{resnet_gcn_forward.11} parent=5 // pred_region
        %s1426 = ssub.s32 %s12, 2
        // Predicated region
        $region102: #{resnet_gcn_forward.11} parent=100 // pred_check
          %p1427 = pneg %p222
        $region103: #{resnet_gcn_forward.11} parent=100 // pred_check_branch
          %1429 = sbr.rel (%p1427) target = $region105
        $region104: #{resnet_gcn_forward.11} parent=100 // pred_region
          %s1430 = smul.u32 32, %s25
          %p1431 = scmp.lt.s32.totalorder %s1430, 255
          %s1432 = scalar_select %p1431, %s1430, 255
          %p1433 = scmp.lt.s32.totalorder %s26, 0
          %s1434 = scalar_select %p1433, %s26, 0
          %s1435 = sadd.s32 %s1434, %s1432
          %s1436 = smul.addr %s1435, 4
          %s1437 = scalar_lea.vmem %s6, %s1436
        $region105: #{resnet_gcn_forward.11} parent=100 // pred_fallthru
          _
      $region101: #{resnet_gcn_forward.11} parent=5 // pred_fallthru
        _
    $region6: #{resnet_gcn_forward.11} parent=1 // loop_footer
      %s16 = sadd.s32 1, %s12
    $region7: #{resnet_gcn_forward.11} parent=1 // loop_footer_branch
      %11 = sbr.rel target = $region3
    $region8: #{resnet_gcn_forward.11} parent=1 // loop_exit
      _

// kernel: resnet_gcn_forward.12
$region0: #{resnet_gcn_forward.12}
  #allocation0 [shape = 'u32[]', space=smem, size = 0x4, offset = 0x4, fixed_abs, tag = 'smem constant byte address 0x4 - core index']
  #allocation1 [shape = 'u32[144,128]{1,0:T(1,128)}', space=vmem, size = 0x12000, scoped, tag = 'internal scratch']
  #allocation2 [shape = 'f32[256,128]{1,0:T(8,128)}', space=vmem, size = 0x20000, scoped, tag = 'scratch operand']
  %s0 = inlined_call_operand.vmem [shape: bf16[2048,128], index: 0, kind: input, shape index: {}]
  %s1 = inlined_call_operand.vmem [shape: bf16[128,128], index: 1, kind: input, shape index: {}]
  %s2 = inlined_call_operand.vmem [shape: f32[1,128], index: 2, kind: input, shape index: {}]
  %s3 = inlined_call_operand.vmem [shape: f32[1,128], index: 3, kind: input, shape index: {}]
  %s4 = inlined_call_operand.vmem [shape: f32[1,128], index: 4, kind: input, shape index: {}]
  %s5 = inlined_call_operand.vmem [shape: f32[1,128], index: 5, kind: input, shape index: {}]
  %s6 = inlined_call_operand.vmem [shape: bf16[2048,128], index: 6, kind: input, shape index: {}]
  %s7 = inlined_call_operand.vmem [shape: bf16[2048,128], index: 7, kind: output, shape index: {}]
  %s8 = sld [smem:[#allocation0]]
  $region69: #{resnet_gcn_forward.12} parent=0
    _
  %s10 = ssub.s32 1, %s8
  %s11 = scalar_select 0, %s10, %s8
  loop: start=0, step=1, limit=10
  $region2: #{resnet_gcn_forward.12} parent=0 // loop_pre_header
    _
  $region3: #{resnet_gcn_forward.12} parent=0 // loop_header
    %s13 = sphi 0, %s17
    %p14 = scmp.ge.s32.totalorder %s13, 10
    %s20 = sphi 0, %s39
    %s21 = sphi 0, %s35
    %s22 = sphi 0, %s31
    %s23 = sphi 0, %s20
    %s24 = sphi 0, %s21
    %s25 = sphi 0, %s22
    %s26 = sphi 0, %s23
    %s27 = sphi 0, %s24
    %s28 = sphi 0, %s25
    %s44 = sphi 0, %s46
    %s47 = sphi 0, %s44
    %s48 = sphi 0, %s47
    %s64 = sphi 0, %s48
    %s72 = sphi 0, %s74
    %s75 = sphi 0, %s72
    %s76 = sphi 0, %s75
    %s92 = sphi 0, %s76
    %s98 = sphi 0, %s100
    %s101 = sphi 0, %s98
    %s102 = sphi 0, %s101
    %s118 = sphi 0, %s102
    %s124 = sphi 0, %s126
    %s127 = sphi 0, %s124
    %s128 = sphi 0, %s127
    %s144 = sphi 0, %s128
    %s150 = sphi 0, %s152
    %s153 = sphi 0, %s150
    %s154 = sphi 0, %s153
    %s170 = sphi 0, %s154
    %s176 = sphi 0, %s178
    %s179 = sphi 0, %s176
    %s180 = sphi 0, %s179
    %s196 = sphi 0, %s180
    %s204 = sphi 0, %s206
    %s207 = sphi 0, %s204
    %s208 = sphi 0, %s207
    %s224 = sphi 0, %s208
    %s232 = sphi 0, %s234
    %s235 = sphi 0, %s232
    %s236 = sphi 0, %s235
    %s252 = sphi 0, %s236
  $region4: #{resnet_gcn_forward.12} parent=0 // loop_header_branch
    %16 = sbr.rel (%p14) target = $region8
  $region5: #{resnet_gcn_forward.12} parent=0 // loop_body
    %s18 = ssub.s32 %s13, 1
    %s19 = ssub.s32 %s13, 2
    %s29 = sadd.s32 1, %s22
    %p30 = scmp.ge.s32.totalorder %s29, 1
    %s31 = scalar_select %p30, 0, %s29
    %s32 = sadd.s32 1, %s21
    %s33 = scalar_select %p30, %s32, %s21
    %p34 = scmp.ge.s32.totalorder %s33, 1
    %s35 = scalar_select %p34, 0, %s33
    %s36 = sadd.s32 1, %s20
    %s37 = scalar_select %p34, %s36, %s20
    %p38 = scmp.ge.s32.totalorder %s37, 8
    %s39 = scalar_select %p38, 0, %s37
    %s40 = ssub.s32 %s20, %s39
    %s41 = ssub.s32 %s22, %s31
    %s42 = sor.u32 %s40, %s41
    %p43 = scmp.eq.s32.totalorder %s42, 0
    %s45 = sadd.s32 %s44, 1
    %s46 = scalar_select %p43, %s44, %s45
    %p49 = pneg %p43
    %p50 = scmp.eq.s32.totalorder %s13, 7
    %p51 = por %p49, %p50
    %p52 = scmp.ne.s32.totalorder %s44, %s47
    %p53 = scmp.eq.s32.totalorder %s13, 0
    %p54 = por %p52, %p53
    %p55 = scmp.ne.s32.totalorder %s44, %s47
    %p56 = scmp.eq.s32.totalorder %s18, 7
    %p57 = por %p55, %p56
    %p58 = scmp.ne.s32.totalorder %s47, %s48
    %p59 = scmp.eq.s32.totalorder %s18, 0
    %p60 = por %p58, %p59
    %p61 = scmp.ne.s32.totalorder %s47, %s48
    %p62 = scmp.eq.s32.totalorder %s19, 7
    %p63 = por %p61, %p62
    %p65 = scmp.ne.s32.totalorder %s48, %s64
    %p66 = scmp.eq.s32.totalorder %s19, 0
    %p67 = por %p65, %p66
    %s68 = ssub.s32 %s22, %s31
    %s69 = ssub.s32 %s21, %s35
    %s70 = sor.u32 %s68, %s69
    %p71 = scmp.eq.s32.totalorder %s70, 0
    %s73 = sadd.s32 %s72, 1
    %s74 = scalar_select %p71, %s72, %s73
    %p77 = pneg %p71
    %p78 = scmp.eq.s32.totalorder %s13, 7
    %p79 = por %p77, %p78
    %p80 = scmp.ne.s32.totalorder %s72, %s75
    %p81 = scmp.eq.s32.totalorder %s13, 0
    %p82 = por %p80, %p81
    %p83 = scmp.ne.s32.totalorder %s72, %s75
    %p84 = scmp.eq.s32.totalorder %s18, 7
    %p85 = por %p83, %p84
    %p86 = scmp.ne.s32.totalorder %s75, %s76
    %p87 = scmp.eq.s32.totalorder %s18, 0
    %p88 = por %p86, %p87
    %p89 = scmp.ne.s32.totalorder %s75, %s76
    %p90 = scmp.eq.s32.totalorder %s19, 7
    %p91 = por %p89, %p90
    %p93 = scmp.ne.s32.totalorder %s76, %s92
    %p94 = scmp.eq.s32.totalorder %s19, 0
    %p95 = por %p93, %p94
    %s96 = ssub.s32 %s21, %s35
    %p97 = scmp.eq.s32.totalorder %s96, 0
    %s99 = sadd.s32 %s98, 1
    %s100 = scalar_select %p97, %s98, %s99
    %p103 = pneg %p97
    %p104 = scmp.eq.s32.totalorder %s13, 7
    %p105 = por %p103, %p104
    %p106 = scmp.ne.s32.totalorder %s98, %s101
    %p107 = scmp.eq.s32.totalorder %s13, 0
    %p108 = por %p106, %p107
    %p109 = scmp.ne.s32.totalorder %s98, %s101
    %p110 = scmp.eq.s32.totalorder %s18, 7
    %p111 = por %p109, %p110
    %p112 = scmp.ne.s32.totalorder %s101, %s102
    %p113 = scmp.eq.s32.totalorder %s18, 0
    %p114 = por %p112, %p113
    %p115 = scmp.ne.s32.totalorder %s101, %s102
    %p116 = scmp.eq.s32.totalorder %s19, 7
    %p117 = por %p115, %p116
    %p119 = scmp.ne.s32.totalorder %s102, %s118
    %p120 = scmp.eq.s32.totalorder %s19, 0
    %p121 = por %p119, %p120
    %s122 = ssub.s32 %s21, %s35
    %p123 = scmp.eq.s32.totalorder %s122, 0
    %s125 = sadd.s32 %s124, 1
    %s126 = scalar_select %p123, %s124, %s125
    %p129 = pneg %p123
    %p130 = scmp.eq.s32.totalorder %s13, 7
    %p131 = por %p129, %p130
    %p132 = scmp.ne.s32.totalorder %s124, %s127
    %p133 = scmp.eq.s32.totalorder %s13, 0
    %p134 = por %p132, %p133
    %p135 = scmp.ne.s32.totalorder %s124, %s127
    %p136 = scmp.eq.s32.totalorder %s18, 7
    %p137 = por %p135, %p136
    %p138 = scmp.ne.s32.totalorder %s127, %s128
    %p139 = scmp.eq.s32.totalorder %s18, 0
    %p140 = por %p138, %p139
    %p141 = scmp.ne.s32.totalorder %s127, %s128
    %p142 = scmp.eq.s32.totalorder %s19, 7
    %p143 = por %p141, %p142
    %p145 = scmp.ne.s32.totalorder %s128, %s144
    %p146 = scmp.eq.s32.totalorder %s19, 0
    %p147 = por %p145, %p146
    %s148 = ssub.s32 %s21, %s35
    %p149 = scmp.eq.s32.totalorder %s148, 0
    %s151 = sadd.s32 %s150, 1
    %s152 = scalar_select %p149, %s150, %s151
    %p155 = pneg %p149
    %p156 = scmp.eq.s32.totalorder %s13, 7
    %p157 = por %p155, %p156
    %p158 = scmp.ne.s32.totalorder %s150, %s153
    %p159 = scmp.eq.s32.totalorder %s13, 0
    %p160 = por %p158, %p159
    %p161 = scmp.ne.s32.totalorder %s150, %s153
    %p162 = scmp.eq.s32.totalorder %s18, 7
    %p163 = por %p161, %p162
    %p164 = scmp.ne.s32.totalorder %s153, %s154
    %p165 = scmp.eq.s32.totalorder %s18, 0
    %p166 = por %p164, %p165
    %p167 = scmp.ne.s32.totalorder %s153, %s154
    %p168 = scmp.eq.s32.totalorder %s19, 7
    %p169 = por %p167, %p168
    %p171 = scmp.ne.s32.totalorder %s154, %s170
    %p172 = scmp.eq.s32.totalorder %s19, 0
    %p173 = por %p171, %p172
    %s174 = ssub.s32 %s21, %s35
    %p175 = scmp.eq.s32.totalorder %s174, 0
    %s177 = sadd.s32 %s176, 1
    %s178 = scalar_select %p175, %s176, %s177
    %p181 = pneg %p175
    %p182 = scmp.eq.s32.totalorder %s13, 7
    %p183 = por %p181, %p182
    %p184 = scmp.ne.s32.totalorder %s176, %s179
    %p185 = scmp.eq.s32.totalorder %s13, 0
    %p186 = por %p184, %p185
    %p187 = scmp.ne.s32.totalorder %s176, %s179
    %p188 = scmp.eq.s32.totalorder %s18, 7
    %p189 = por %p187, %p188
    %p190 = scmp.ne.s32.totalorder %s179, %s180
    %p191 = scmp.eq.s32.totalorder %s18, 0
    %p192 = por %p190, %p191
    %p193 = scmp.ne.s32.totalorder %s179, %s180
    %p194 = scmp.eq.s32.totalorder %s19, 7
    %p195 = por %p193, %p194
    %p197 = scmp.ne.s32.totalorder %s180, %s196
    %p198 = scmp.eq.s32.totalorder %s19, 0
    %p199 = por %p197, %p198
    %s200 = ssub.s32 %s20, %s39
    %s201 = ssub.s32 %s21, %s35
    %s202 = sor.u32 %s200, %s201
    %p203 = scmp.eq.s32.totalorder %s202, 0
    %s205 = sadd.s32 %s204, 1
    %s206 = scalar_select %p203, %s204, %s205
    %p209 = pneg %p203
    %p210 = scmp.eq.s32.totalorder %s13, 7
    %p211 = por %p209, %p210
    %p212 = scmp.ne.s32.totalorder %s204, %s207
    %p213 = scmp.eq.s32.totalorder %s13, 0
    %p214 = por %p212, %p213
    %p215 = scmp.ne.s32.totalorder %s204, %s207
    %p216 = scmp.eq.s32.totalorder %s18, 7
    %p217 = por %p215, %p216
    %p218 = scmp.ne.s32.totalorder %s207, %s208
    %p219 = scmp.eq.s32.totalorder %s18, 0
    %p220 = por %p218, %p219
    %p221 = scmp.ne.s32.totalorder %s207, %s208
    %p222 = scmp.eq.s32.totalorder %s19, 7
    %p223 = por %p221, %p222
    %p225 = scmp.ne.s32.totalorder %s208, %s224
    %p226 = scmp.eq.s32.totalorder %s19, 0
    %p227 = por %p225, %p226
    %s228 = ssub.s32 %s20, %s39
    %s229 = ssub.s32 %s21, %s35
    %s230 = sor.u32 %s228, %s229
    %p231 = scmp.eq.s32.totalorder %s230, 0
    %s233 = sadd.s32 %s232, 1
    %s234 = scalar_select %p231, %s232, %s233
    %p237 = pneg %p231
    %p238 = scmp.eq.s32.totalorder %s13, 7
    %p239 = por %p237, %p238
    %p240 = scmp.ne.s32.totalorder %s232, %s235
    %p241 = scmp.eq.s32.totalorder %s13, 0
    %p242 = por %p240, %p241
    %p243 = scmp.ne.s32.totalorder %s232, %s235
    %p244 = scmp.eq.s32.totalorder %s18, 7
    %p245 = por %p243, %p244
    %p246 = scmp.ne.s32.totalorder %s235, %s236
    %p247 = scmp.eq.s32.totalorder %s18, 0
    %p248 = por %p246, %p247
    %p249 = scmp.ne.s32.totalorder %s235, %s236
    %p250 = scmp.eq.s32.totalorder %s19, 7
    %p251 = por %p249, %p250
    %p253 = scmp.ne.s32.totalorder %s236, %s252
    %p254 = scmp.eq.s32.totalorder %s19, 0
    %p255 = por %p253, %p254
    %p256 = scmp.le.s32.totalorder 1, %s13
    %p257 = scmp.lt.s32.totalorder %s13, 9
    %p258 = pnand %p256, %p257
    %p259 = pneg %p258
    // Predicated region
    $region9: #{resnet_gcn_forward.12} parent=5 // pred_check
      _
    $region10: #{resnet_gcn_forward.12} parent=5 // pred_check_branch
      %261 = sbr.rel (%p258) target = $region12
    $region11: #{resnet_gcn_forward.12} parent=5 // pred_region
      %s262 = ssub.s32 %s13, 1
      // Predicated region
      $region13: #{resnet_gcn_forward.12} parent=11 // pred_check
        %p263 = pneg %p88
      $region14: #{resnet_gcn_forward.12} parent=11 // pred_check_branch
        %265 = sbr.rel (%p263) target = $region16
      $region15: #{resnet_gcn_forward.12} parent=11 // pred_region
        %s266 = smul.u32 16, %s25
        %p267 = scmp.lt.s32.totalorder %s266, 15
        %s268 = scalar_select %p267, %s266, 15
        %p269 = scmp.lt.s32.totalorder %s24, 0
        %s270 = scalar_select %p269, %s24, 0
        %s271 = sadd.s32 %s270, %s268
        %s272 = smul.addr %s271, 4
        %s273 = scalar_lea.vmem %s1, %s272
        %s274 = smul.u32 16, %s25
      $region16: #{resnet_gcn_forward.12} parent=11 // pred_fallthru
        _
      // Predicated region
      $region17: #{resnet_gcn_forward.12} parent=11 // pred_check
        %p275 = pneg %p114
      $region18: #{resnet_gcn_forward.12} parent=11 // pred_check_branch
        %277 = sbr.rel (%p275) target = $region20
      $region19: #{resnet_gcn_forward.12} parent=11 // pred_region
        %p278 = scmp.lt.s32.totalorder %s24, 0
        %s279 = scalar_select %p278, %s24, 0
        %s280 = scalar_lea.vmem %s2, %s279
      $region20: #{resnet_gcn_forward.12} parent=11 // pred_fallthru
        _
      // Predicated region
      $region21: #{resnet_gcn_forward.12} parent=11 // pred_check
        %p281 = pneg %p140
      $region22: #{resnet_gcn_forward.12} parent=11 // pred_check_branch
        %283 = sbr.rel (%p281) target = $region24
      $region23: #{resnet_gcn_forward.12} parent=11 // pred_region
        %p284 = scmp.lt.s32.totalorder %s24, 0
        %s285 = scalar_select %p284, %s24, 0
        %s286 = scalar_lea.vmem %s3, %s285
      $region24: #{resnet_gcn_forward.12} parent=11 // pred_fallthru
        _
      // Predicated region
      $region25: #{resnet_gcn_forward.12} parent=11 // pred_check
        %p287 = pneg %p166
      $region26: #{resnet_gcn_forward.12} parent=11 // pred_check_branch
        %289 = sbr.rel (%p287) target = $region28
      $region27: #{resnet_gcn_forward.12} parent=11 // pred_region
        %p290 = scmp.lt.s32.totalorder %s24, 0
        %s291 = scalar_select %p290, %s24, 0
        %s292 = scalar_lea.vmem %s4, %s291
      $region28: #{resnet_gcn_forward.12} parent=11 // pred_fallthru
        _
      // Predicated region
      $region29: #{resnet_gcn_forward.12} parent=11 // pred_check
        %p293 = pneg %p192
      $region30: #{resnet_gcn_forward.12} parent=11 // pred_check_branch
        %295 = sbr.rel (%p293) target = $region32
      $region31: #{resnet_gcn_forward.12} parent=11 // pred_region
        %p296 = scmp.lt.s32.totalorder %s24, 0
        %s297 = scalar_select %p296, %s24, 0
        %s298 = scalar_lea.vmem %s5, %s297
      $region32: #{resnet_gcn_forward.12} parent=11 // pred_fallthru
        _
    $region12: #{resnet_gcn_forward.12} parent=5 // pred_fallthru
      _
    %p299 = scmp.lt.s32.totalorder %s13, 8
    // Predicated region
    $region33: #{resnet_gcn_forward.12} parent=5 // pred_check
      %p300 = pneg %p299
    $region34: #{resnet_gcn_forward.12} parent=5 // pred_check_branch
      %302 = sbr.rel (%p300) target = $region36
    $region35: #{resnet_gcn_forward.12} parent=5 // pred_region
      // Predicated region
      $region37: #{resnet_gcn_forward.12} parent=35 // pred_check
        %p303 = pneg %p54
      $region38: #{resnet_gcn_forward.12} parent=35 // pred_check_branch
        %305 = sbr.rel (%p303) target = $region40
      $region39: #{resnet_gcn_forward.12} parent=35 // pred_region
        %s306 = smul.u32 32, %s20
        %p307 = scmp.lt.s32.totalorder %s306, 255
        %s308 = scalar_select %p307, %s306, 255
        %p309 = scmp.lt.s32.totalorder %s22, 0
        %s310 = scalar_select %p309, %s22, 0
        %s311 = sadd.s32 %s310, %s308
        %s312 = smul.addr %s311, 4
        %s313 = scalar_lea.vmem %s0, %s312
        %s314 = smul.u32 32, %s20
      $region40: #{resnet_gcn_forward.12} parent=35 // pred_fallthru
        _
      // Predicated region
      $region41: #{resnet_gcn_forward.12} parent=35 // pred_check
        %p315 = pneg %p214
      $region42: #{resnet_gcn_forward.12} parent=35 // pred_check_branch
        %317 = sbr.rel (%p315) target = $region44
      $region43: #{resnet_gcn_forward.12} parent=35 // pred_region
        %s318 = smul.u32 32, %s20
        %p319 = scmp.lt.s32.totalorder %s318, 255
        %s320 = scalar_select %p319, %s318, 255
        %p321 = scmp.lt.s32.totalorder %s21, 0
        %s322 = scalar_select %p321, %s21, 0
        %s323 = sadd.s32 %s322, %s320
        %s324 = smul.addr %s323, 4
        %s325 = scalar_lea.vmem %s6, %s324
        %s326 = smul.u32 32, %s20
      $region44: #{resnet_gcn_forward.12} parent=35 // pred_fallthru
        _
    $region36: #{resnet_gcn_forward.12} parent=5 // pred_fallthru
      _
    %p327 = scmp.le.s32.totalorder 1, %s13
    %p328 = scmp.lt.s32.totalorder %s13, 9
    %p329 = pnand %p327, %p328
    %p330 = pneg %p329
    // Predicated region
    $region45: #{resnet_gcn_forward.12} parent=5 // pred_check
      _
    $region46: #{resnet_gcn_forward.12} parent=5 // pred_check_branch
      %332 = sbr.rel (%p329) target = $region48
    $region47: #{resnet_gcn_forward.12} parent=5 // pred_region
      %s333 = ssub.s32 %s13, 1
      %s334 = smul.u32 32, %s23
      %p335 = scmp.lt.s32.totalorder %s334, 255
      %s336 = scalar_select %p335, %s334, 255
      %p337 = scmp.lt.s32.totalorder %s25, 0
      %s338 = scalar_select %p337, %s25, 0
      %s339 = sadd.s32 %s338, %s336
      %s340 = smul.addr %s339, 4
      %s341 = scalar_lea.vmem %s0, %s340
      %p342 = pneg %p60
      %p343 = pneg %p57
      %s344 = smul.u32 16, %s25
      %p345 = scmp.lt.s32.totalorder %s344, 15
      %s346 = scalar_select %p345, %s344, 15
      %p347 = scmp.lt.s32.totalorder %s24, 0
      %s348 = scalar_select %p347, %s24, 0
      %s349 = sadd.s32 %s348, %s346
      %s350 = smul.addr %s349, 4
      %s351 = scalar_lea.vmem %s1, %s350
      %p352 = pneg %p88
      %p353 = pneg %p85
      %p354 = scmp.lt.s32.totalorder %s24, 0
      %s355 = scalar_select %p354, %s24, 0
      %s356 = scalar_lea.vmem %s2, %s355
      %p357 = pneg %p114
      %p358 = pneg %p111
      %p359 = scmp.lt.s32.totalorder %s24, 0
      %s360 = scalar_select %p359, %s24, 0
      %s361 = scalar_lea.vmem %s3, %s360
      %p362 = pneg %p140
      %p363 = pneg %p137
      %p364 = scmp.lt.s32.totalorder %s24, 0
      %s365 = scalar_select %p364, %s24, 0
      %s366 = scalar_lea.vmem %s4, %s365
      %p367 = pneg %p166
      %p368 = pneg %p163
      %p369 = scmp.lt.s32.totalorder %s24, 0
      %s370 = scalar_select %p369, %s24, 0
      %s371 = scalar_lea.vmem %s5, %s370
      %p372 = pneg %p192
      %p373 = pneg %p189
      %s374 = smul.u32 32, %s23
      %p375 = scmp.lt.s32.totalorder %s374, 255
      %s376 = scalar_select %p375, %s374, 255
      %p377 = scmp.lt.s32.totalorder %s24, 0
      %s378 = scalar_select %p377, %s24, 0
      %s379 = sadd.s32 %s378, %s376
      %s380 = smul.addr %s379, 4
      %s381 = scalar_lea.vmem %s6, %s380
      %p382 = pneg %p220
      %p383 = pneg %p217
      %p384 = pneg %p248
      %p385 = pneg %p245
      %s386 = smul.u32 32, %s23
      %p387 = scmp.lt.s32.totalorder %s386, 255
      %s388 = scalar_select %p387, %s386, 255
      %p389 = scmp.lt.s32.totalorder %s24, 0
      %s390 = scalar_select %p389, %s24, 0
      %s391 = sadd.s32 %s390, %s388
      %s392 = smul.addr %s391, 4
      %s393 = scalar_lea.vmem %s7, %s392
      %s394 = smul.u32 32, %s23
      %p395 = scmp.lt.s32.totalorder %s394, 255
      %s396 = scalar_select %p395, %s394, 255
      %p397 = scmp.lt.s32.totalorder %s25, 0
      %s398 = scalar_select %p397, %s25, 0
      %s399 = sadd.s32 %s398, %s396
      %s400 = smul.addr %s399, 4
      %s401 = scalar_lea.vmem %s0, %s400
      %s402 = smul.u32 32, %s23
      %s403 = smul.u32 16, %s25
      %p404 = scmp.lt.s32.totalorder %s403, 15
      %s405 = scalar_select %p404, %s403, 15
      %p406 = scmp.lt.s32.totalorder %s24, 0
      %s407 = scalar_select %p406, %s24, 0
      %s408 = sadd.s32 %s407, %s405
      %s409 = smul.addr %s408, 4
      %s410 = scalar_lea.vmem %s1, %s409
      %s411 = smul.u32 16, %s25
      %p412 = scmp.lt.s32.totalorder %s24, 0
      %s413 = scalar_select %p412, %s24, 0
      %s414 = scalar_lea.vmem %s2, %s413
      %p415 = scmp.lt.s32.totalorder %s24, 0
      %s416 = scalar_select %p415, %s24, 0
      %s417 = scalar_lea.vmem %s3, %s416
      %p418 = scmp.lt.s32.totalorder %s24, 0
      %s419 = scalar_select %p418, %s24, 0
      %s420 = scalar_lea.vmem %s4, %s419
      %p421 = scmp.lt.s32.totalorder %s24, 0
      %s422 = scalar_select %p421, %s24, 0
      %s423 = scalar_lea.vmem %s5, %s422
      %s424 = smul.u32 32, %s23
      %p425 = scmp.lt.s32.totalorder %s424, 255
      %s426 = scalar_select %p425, %s424, 255
      %p427 = scmp.lt.s32.totalorder %s24, 0
      %s428 = scalar_select %p427, %s24, 0
      %s429 = sadd.s32 %s428, %s426
      %s430 = smul.addr %s429, 4
      %s431 = scalar_lea.vmem %s6, %s430
      %s432 = smul.u32 32, %s23
      %s433 = smul.u32 32, %s23
      %p434 = scmp.lt.s32.totalorder %s433, 255
      %s435 = scalar_select %p434, %s433, 255
      %p436 = scmp.lt.s32.totalorder %s24, 0
      %s437 = scalar_select %p436, %s24, 0
      %s438 = sadd.s32 %s437, %s435
      %s439 = smul.addr %s438, 4
      %s440 = scalar_lea.vmem %s7, %s439
      %s441 = smul.u32 32, %s23
      %p443 = scmp.eq.s32.totalorder %s25, 0
      // Predicated region
      $region49: #{resnet_gcn_forward.12} parent=47 // pred_check
        %p444 = pneg %p443
      $region50: #{resnet_gcn_forward.12} parent=47 // pred_check_branch
        %446 = sbr.rel (%p444) target = $region52
      $region51: #{resnet_gcn_forward.12} parent=47 // pred_region
        %447 = vst [vmem:[#allocation2] sm:$0xff] 0.0
        %448 = vst [vmem:[#allocation2 + $0x8] sm:$0xff] 0.0
        %449 = vst [vmem:[#allocation2 + $0x10] sm:$0xff] 0.0
        %450 = vst [vmem:[#allocation2 + $0x18] sm:$0xff] 0.0
        %451 = vst [vmem:[#allocation2 + $0x20] sm:$0xff] 0.0
        %452 = vst [vmem:[#allocation2 + $0x28] sm:$0xff] 0.0
        %453 = vst [vmem:[#allocation2 + $0x30] sm:$0xff] 0.0
        %454 = vst [vmem:[#allocation2 + $0x38] sm:$0xff] 0.0
        %455 = vst [vmem:[#allocation2 + $0x40] sm:$0xff] 0.0
        %456 = vst [vmem:[#allocation2 + $0x48] sm:$0xff] 0.0
        %457 = vst [vmem:[#allocation2 + $0x50] sm:$0xff] 0.0
        %458 = vst [vmem:[#allocation2 + $0x58] sm:$0xff] 0.0
        %459 = vst [vmem:[#allocation2 + $0x60] sm:$0xff] 0.0
        %460 = vst [vmem:[#allocation2 + $0x68] sm:$0xff] 0.0
        %461 = vst [vmem:[#allocation2 + $0x70] sm:$0xff] 0.0
        %462 = vst [vmem:[#allocation2 + $0x78] sm:$0xff] 0.0
        %463 = vst [vmem:[#allocation2 + $0x80] sm:$0xff] 0.0
        %464 = vst [vmem:[#allocation2 + $0x88] sm:$0xff] 0.0
        %465 = vst [vmem:[#allocation2 + $0x90] sm:$0xff] 0.0
        %466 = vst [vmem:[#allocation2 + $0x98] sm:$0xff] 0.0
        %467 = vst [vmem:[#allocation2 + $0xa0] sm:$0xff] 0.0
        %468 = vst [vmem:[#allocation2 + $0xa8] sm:$0xff] 0.0
        %469 = vst [vmem:[#allocation2 + $0xb0] sm:$0xff] 0.0
        %470 = vst [vmem:[#allocation2 + $0xb8] sm:$0xff] 0.0
        %471 = vst [vmem:[#allocation2 + $0xc0] sm:$0xff] 0.0
        %472 = vst [vmem:[#allocation2 + $0xc8] sm:$0xff] 0.0
        %473 = vst [vmem:[#allocation2 + $0xd0] sm:$0xff] 0.0
        %474 = vst [vmem:[#allocation2 + $0xd8] sm:$0xff] 0.0
        %475 = vst [vmem:[#allocation2 + $0xe0] sm:$0xff] 0.0
        %476 = vst [vmem:[#allocation2 + $0xe8] sm:$0xff] 0.0
        %477 = vst [vmem:[#allocation2 + $0xf0] sm:$0xff] 0.0
        %478 = vst [vmem:[#allocation2 + $0xf8] sm:$0xff] 0.0
      $region52: #{resnet_gcn_forward.12} parent=47 // pred_fallthru
        _
      %v479 = vld [vmem:[#allocation2] sm:$0xff]
      %v480 = vld [vmem:[#allocation2 + $0x8] sm:$0xff]
      %v481 = vld [vmem:[#allocation2 + $0x10] sm:$0xff]
      %v482 = vld [vmem:[#allocation2 + $0x18] sm:$0xff]
      %v483 = vld [vmem:[#allocation2 + $0x20] sm:$0xff]
      %v484 = vld [vmem:[#allocation2 + $0x28] sm:$0xff]
      %v485 = vld [vmem:[#allocation2 + $0x30] sm:$0xff]
      %v486 = vld [vmem:[#allocation2 + $0x38] sm:$0xff]
      %v487 = vld [vmem:[#allocation2 + $0x40] sm:$0xff]
      %v488 = vld [vmem:[#allocation2 + $0x48] sm:$0xff]
      %v489 = vld [vmem:[#allocation2 + $0x50] sm:$0xff]
      %v490 = vld [vmem:[#allocation2 + $0x58] sm:$0xff]
      %v491 = vld [vmem:[#allocation2 + $0x60] sm:$0xff]
      %v492 = vld [vmem:[#allocation2 + $0x68] sm:$0xff]
      %v493 = vld [vmem:[#allocation2 + $0x70] sm:$0xff]
      %v494 = vld [vmem:[#allocation2 + $0x78] sm:$0xff]
      %v495 = vld [vmem:[#allocation2 + $0x80] sm:$0xff]
      %v496 = vld [vmem:[#allocation2 + $0x88] sm:$0xff]
      %v497 = vld [vmem:[#allocation2 + $0x90] sm:$0xff]
      %v498 = vld [vmem:[#allocation2 + $0x98] sm:$0xff]
      %v499 = vld [vmem:[#allocation2 + $0xa0] sm:$0xff]
      %v500 = vld [vmem:[#allocation2 + $0xa8] sm:$0xff]
      %v501 = vld [vmem:[#allocation2 + $0xb0] sm:$0xff]
      %v502 = vld [vmem:[#allocation2 + $0xb8] sm:$0xff]
      %v503 = vld [vmem:[#allocation2 + $0xc0] sm:$0xff]
      %v504 = vld [vmem:[#allocation2 + $0xc8] sm:$0xff]
      %v505 = vld [vmem:[#allocation2 + $0xd0] sm:$0xff]
      %v506 = vld [vmem:[#allocation2 + $0xd8] sm:$0xff]
      %v507 = vld [vmem:[#allocation2 + $0xe0] sm:$0xff]
      %v508 = vld [vmem:[#allocation2 + $0xe8] sm:$0xff]
      %v509 = vld [vmem:[#allocation2 + $0xf0] sm:$0xff]
      %v510 = vld [vmem:[#allocation2 + $0xf8] sm:$0xff]
      %v511 = vld [vmem:[%s401] sm:$0xf]
      %v512 = vld [vmem:[%s401 + $0x4] sm:$0xf]
      %v513 = vld [vmem:[%s401 + $0x8] sm:$0xf]
      %v514 = vld [vmem:[%s401 + $0xc] sm:$0xf]
      %v515 = vld [vmem:[%s401 + $0x10] sm:$0xf]
      %v516 = vld [vmem:[%s401 + $0x14] sm:$0xf]
      %v517 = vld [vmem:[%s401 + $0x18] sm:$0xf]
      %v518 = vld [vmem:[%s401 + $0x1c] sm:$0xf]
      %v519 = vld [vmem:[%s401 + $0x20] sm:$0xf]
      %v520 = vld [vmem:[%s401 + $0x24] sm:$0xf]
      %v521 = vld [vmem:[%s401 + $0x28] sm:$0xf]
      %v522 = vld [vmem:[%s401 + $0x2c] sm:$0xf]
      %v523 = vld [vmem:[%s401 + $0x30] sm:$0xf]
      %v524 = vld [vmem:[%s401 + $0x34] sm:$0xf]
      %v525 = vld [vmem:[%s401 + $0x38] sm:$0xf]
      %v526 = vld [vmem:[%s401 + $0x3c] sm:$0xf]
      %v527 = vld [vmem:[%s401 + $0x40] sm:$0xf]
      %v528 = vld [vmem:[%s401 + $0x44] sm:$0xf]
      %v529 = vld [vmem:[%s401 + $0x48] sm:$0xf]
      %v530 = vld [vmem:[%s401 + $0x4c] sm:$0xf]
      %v531 = vld [vmem:[%s401 + $0x50] sm:$0xf]
      %v532 = vld [vmem:[%s401 + $0x54] sm:$0xf]
      %v533 = vld [vmem:[%s401 + $0x58] sm:$0xf]
      %v534 = vld [vmem:[%s401 + $0x5c] sm:$0xf]
      %v535 = vld [vmem:[%s401 + $0x60] sm:$0xf]
      %v536 = vld [vmem:[%s401 + $0x64] sm:$0xf]
      %v537 = vld [vmem:[%s401 + $0x68] sm:$0xf]
      %v538 = vld [vmem:[%s401 + $0x6c] sm:$0xf]
      %v539 = vld [vmem:[%s401 + $0x70] sm:$0xf]
      %v540 = vld [vmem:[%s401 + $0x74] sm:$0xf]
      %v541 = vld [vmem:[%s401 + $0x78] sm:$0xf]
      %v542 = vld [vmem:[%s401 + $0x7c] sm:$0xf]
      %v543 = vld [vmem:[%s410] sm:$0xf]
      %v544 = vld [vmem:[%s410 + $0x4] sm:$0xf]
      %v545 = vld [vmem:[%s410 + $0x8] sm:$0xf]
      %v546 = vld [vmem:[%s410 + $0xc] sm:$0xf]
      %v547 = vld [vmem:[%s410 + $0x10] sm:$0xf]
      %v548 = vld [vmem:[%s410 + $0x14] sm:$0xf]
      %v549 = vld [vmem:[%s410 + $0x18] sm:$0xf]
      %v550 = vld [vmem:[%s410 + $0x1c] sm:$0xf]
      %v551 = vld [vmem:[%s410 + $0x20] sm:$0xf]
      %v552 = vld [vmem:[%s410 + $0x24] sm:$0xf]
      %v553 = vld [vmem:[%s410 + $0x28] sm:$0xf]
      %v554 = vld [vmem:[%s410 + $0x2c] sm:$0xf]
      %v555 = vld [vmem:[%s410 + $0x30] sm:$0xf]
      %v556 = vld [vmem:[%s410 + $0x34] sm:$0xf]
      %v557 = vld [vmem:[%s410 + $0x38] sm:$0xf]
      %v558 = vld [vmem:[%s410 + $0x3c] sm:$0xf]
      %v591 = vunpack.c.l.b16 %v511
      %v592 = vunpack.c.l.b16 %v512
      %v593 = vunpack.c.l.b16 %v513
      %v594 = vunpack.c.l.b16 %v514
      %v595 = vunpack.c.l.b16 %v515
      %v596 = vunpack.c.l.b16 %v516
      %v597 = vunpack.c.l.b16 %v517
      %v598 = vunpack.c.l.b16 %v518
      %v599 = vunpack.c.l.b16 %v519
      %v600 = vunpack.c.l.b16 %v520
      %v601 = vunpack.c.l.b16 %v521
      %v602 = vunpack.c.l.b16 %v522
      %v603 = vunpack.c.l.b16 %v523
      %v604 = vunpack.c.l.b16 %v524
      %v605 = vunpack.c.l.b16 %v525
      %v606 = vunpack.c.l.b16 %v526
      %v607 = vunpack.c.l.b16 %v527
      %v608 = vunpack.c.l.b16 %v528
      %v609 = vunpack.c.l.b16 %v529
      %v610 = vunpack.c.l.b16 %v530
      %v611 = vunpack.c.l.b16 %v531
      %v612 = vunpack.c.l.b16 %v532
      %v613 = vunpack.c.l.b16 %v533
      %v614 = vunpack.c.l.b16 %v534
      %v615 = vunpack.c.l.b16 %v535
      %v616 = vunpack.c.l.b16 %v536
      %v617 = vunpack.c.l.b16 %v537
      %v618 = vunpack.c.l.b16 %v538
      %v619 = vunpack.c.l.b16 %v539
      %v620 = vunpack.c.l.b16 %v540
      %v621 = vunpack.c.l.b16 %v541
      %v622 = vunpack.c.l.b16 %v542
      %v623 = vpack.c.b16 %v592, %v591
      %v624 = vpack.c.b16 %v594, %v593
      %v625 = vpack.c.b16 %v596, %v595
      %v626 = vpack.c.b16 %v598, %v597
      %v627 = vpack.c.b16 %v600, %v599
      %v628 = vpack.c.b16 %v602, %v601
      %v629 = vpack.c.b16 %v604, %v603
      %v630 = vpack.c.b16 %v606, %v605
      %v631 = vpack.c.b16 %v608, %v607
      %v632 = vpack.c.b16 %v610, %v609
      %v633 = vpack.c.b16 %v612, %v611
      %v634 = vpack.c.b16 %v614, %v613
      %v635 = vpack.c.b16 %v616, %v615
      %v636 = vpack.c.b16 %v618, %v617
      %v637 = vpack.c.b16 %v620, %v619
      %v638 = vpack.c.b16 %v622, %v621
      %v671 = vunpack.c.l.b16 %v543
      %v672 = vunpack.c.l.b16 %v544
      %v673 = vunpack.c.l.b16 %v545
      %v674 = vunpack.c.l.b16 %v546
      %v675 = vunpack.c.l.b16 %v547
      %v676 = vunpack.c.l.b16 %v548
      %v677 = vunpack.c.l.b16 %v549
      %v678 = vunpack.c.l.b16 %v550
      %v679 = vunpack.c.l.b16 %v551
      %v680 = vunpack.c.l.b16 %v552
      %v681 = vunpack.c.l.b16 %v553
      %v682 = vunpack.c.l.b16 %v554
      %v683 = vunpack.c.l.b16 %v555
      %v684 = vunpack.c.l.b16 %v556
      %v685 = vunpack.c.l.b16 %v557
      %v686 = vunpack.c.l.b16 %v558
      %v687 = vpack.c.b16 %v672, %v671
      %v688 = vpack.c.b16 %v674, %v673
      %v689 = vpack.c.b16 %v676, %v675
      %v690 = vpack.c.b16 %v678, %v677
      %v691 = vpack.c.b16 %v680, %v679
      %v692 = vpack.c.b16 %v682, %v681
      %v693 = vpack.c.b16 %v684, %v683
      %v694 = vpack.c.b16 %v686, %v685
      %703 = vmatprep.subr.bf16.mxu0 0
      %704 = vmatpush1.bf16.msra.mxu0 %v687
      %705 = vmatprep.subr.bf16.mxu0 0
      %706 = vmatpush1.bf16.msra.mxu0 %v688
      %707 = vmatprep.subr.bf16.mxu0 0
      %708 = vmatpush1.bf16.msra.mxu0 %v689
      %709 = vmatprep.subr.bf16.mxu0 0
      %710 = vmatpush1.bf16.msra.mxu0 %v690
      %711 = vmatprep.subr.bf16.mxu0 0
      %712 = vmatpush1.bf16.msra.mxu0 %v691
      %713 = vmatprep.subr.bf16.mxu0 0
      %714 = vmatpush1.bf16.msra.mxu0 %v692
      %715 = vmatprep.subr.bf16.mxu0 0
      %716 = vmatpush1.bf16.msra.mxu0 %v693
      %717 = vmatprep.subr.bf16.mxu0 0
      %718 = vmatpush1.bf16.msra.mxu0 %v694
      %719 = vmatprep.subr.bf16.mxu0 0
      %720 = vmatpush1.bf16.msra.mxu0 0
      %721 = vmatprep.subr.bf16.mxu0 0
      %722 = vmatpush1.bf16.msra.mxu0 0
      %723 = vmatprep.subr.bf16.mxu0 0
      %724 = vmatpush1.bf16.msra.mxu0 0
      %725 = vmatprep.subr.bf16.mxu0 0
      %726 = vmatpush1.bf16.msra.mxu0 0
      %727 = vmatprep.subr.bf16.mxu0 0
      %728 = vmatpush1.bf16.msra.mxu0 0
      %729 = vmatprep.subr.bf16.mxu0 0
      %730 = vmatpush1.bf16.msra.mxu0 0
      %731 = vmatprep.subr.bf16.mxu0 0
      %732 = vmatpush1.bf16.msra.mxu0 0
      %733 = vmatprep.subr.bf16.mxu0 0
      %734 = vmatpush1.bf16.msra.mxu0 0
      %735 = vmatprep.mubr.bf16.mxu0 0
      %736 = vmatmul.mubr.bf16.gmra.mrb[0].mxu0 %v623
      %v737 = vpop.f32.mrb[0].mxu0
      %v738 = vadd.f32 0.0, %v737
      %v739 = vpop.f32.mrb[0].mxu0
      %v740 = vpop.f32.mrb[0].mxu0
      %v741 = vadd.f32 0.0, %v740
      %v742 = vpop.f32.mrb[0].mxu0
      %743 = vmatprep.mubr.bf16.mxu0 0
      %744 = vmatmul.mubr.bf16.gmra.mrb[0].mxu0 %v624
      %v745 = vpop.f32.mrb[0].mxu0
      %v746 = vadd.f32 0.0, %v745
      %v747 = vpop.f32.mrb[0].mxu0
      %v748 = vpop.f32.mrb[0].mxu0
      %v749 = vadd.f32 0.0, %v748
      %v750 = vpop.f32.mrb[0].mxu0
      %751 = vmatprep.mubr.bf16.mxu0 0
      %752 = vmatmul.mubr.bf16.gmra.mrb[0].mxu0 %v625
      %v753 = vpop.f32.mrb[0].mxu0
      %v754 = vadd.f32 0.0, %v753
      %v755 = vpop.f32.mrb[0].mxu0
      %v756 = vpop.f32.mrb[0].mxu0
      %v757 = vadd.f32 0.0, %v756
      %v758 = vpop.f32.mrb[0].mxu0
      %759 = vmatprep.mubr.bf16.mxu0 0
      %760 = vmatmul.mubr.bf16.gmra.mrb[0].mxu0 %v626
      %v761 = vpop.f32.mrb[0].mxu0
      %v762 = vadd.f32 0.0, %v761
      %v763 = vpop.f32.mrb[0].mxu0
      %v764 = vpop.f32.mrb[0].mxu0
      %v765 = vadd.f32 0.0, %v764
      %v766 = vpop.f32.mrb[0].mxu0
      %767 = vmatprep.mubr.bf16.mxu0 0
      %768 = vmatmul.mubr.bf16.gmra.mrb[0].mxu0 %v627
      %v769 = vpop.f32.mrb[0].mxu0
      %v770 = vadd.f32 0.0, %v769
      %v771 = vpop.f32.mrb[0].mxu0
      %v772 = vpop.f32.mrb[0].mxu0
      %v773 = vadd.f32 0.0, %v772
      %v774 = vpop.f32.mrb[0].mxu0
      %775 = vmatprep.mubr.bf16.mxu0 0
      %776 = vmatmul.mubr.bf16.gmra.mrb[0].mxu0 %v628
      %v777 = vpop.f32.mrb[0].mxu0
      %v778 = vadd.f32 0.0, %v777
      %v779 = vpop.f32.mrb[0].mxu0
      %v780 = vpop.f32.mrb[0].mxu0
      %v781 = vadd.f32 0.0, %v780
      %v782 = vpop.f32.mrb[0].mxu0
      %783 = vmatprep.mubr.bf16.mxu0 0
      %784 = vmatmul.mubr.bf16.gmra.mrb[0].mxu0 %v629
      %v785 = vpop.f32.mrb[0].mxu0
      %v786 = vadd.f32 0.0, %v785
      %v787 = vpop.f32.mrb[0].mxu0
      %v788 = vpop.f32.mrb[0].mxu0
      %v789 = vadd.f32 0.0, %v788
      %v790 = vpop.f32.mrb[0].mxu0
      %791 = vmatprep.mubr.bf16.mxu0 0
      %792 = vmatmul.mubr.bf16.gmra.mrb[0].mxu0 %v630
      %v793 = vpop.f32.mrb[0].mxu0
      %v794 = vadd.f32 0.0, %v793
      %v795 = vpop.f32.mrb[0].mxu0
      %v796 = vpop.f32.mrb[0].mxu0
      %v797 = vadd.f32 0.0, %v796
      %v798 = vpop.f32.mrb[0].mxu0
      %799 = vmatprep.mubr.bf16.mxu0 0
      %800 = vmatmul.mubr.bf16.gmra.mrb[0].mxu0 %v631
      %v801 = vpop.f32.mrb[0].mxu0
      %v802 = vadd.f32 0.0, %v801
      %v803 = vpop.f32.mrb[0].mxu0
      %v804 = vpop.f32.mrb[0].mxu0
      %v805 = vadd.f32 0.0, %v804
      %v806 = vpop.f32.mrb[0].mxu0
      %807 = vmatprep.mubr.bf16.mxu0 0
      %808 = vmatmul.mubr.bf16.gmra.mrb[0].mxu0 %v632
      %v809 = vpop.f32.mrb[0].mxu0
      %v810 = vadd.f32 0.0, %v809
      %v811 = vpop.f32.mrb[0].mxu0
      %v812 = vpop.f32.mrb[0].mxu0
      %v813 = vadd.f32 0.0, %v812
      %v814 = vpop.f32.mrb[0].mxu0
      %815 = vmatprep.mubr.bf16.mxu0 0
      %816 = vmatmul.mubr.bf16.gmra.mrb[0].mxu0 %v633
      %v817 = vpop.f32.mrb[0].mxu0
      %v818 = vadd.f32 0.0, %v817
      %v819 = vpop.f32.mrb[0].mxu0
      %v820 = vpop.f32.mrb[0].mxu0
      %v821 = vadd.f32 0.0, %v820
      %v822 = vpop.f32.mrb[0].mxu0
      %823 = vmatprep.mubr.bf16.mxu0 0
      %824 = vmatmul.mubr.bf16.gmra.mrb[0].mxu0 %v634
      %v825 = vpop.f32.mrb[0].mxu0
      %v826 = vadd.f32 0.0, %v825
      %v827 = vpop.f32.mrb[0].mxu0
      %v828 = vpop.f32.mrb[0].mxu0
      %v829 = vadd.f32 0.0, %v828
      %v830 = vpop.f32.mrb[0].mxu0
      %831 = vmatprep.mubr.bf16.mxu0 0
      %832 = vmatmul.mubr.bf16.gmra.mrb[0].mxu0 %v635
      %v833 = vpop.f32.mrb[0].mxu0
      %v834 = vadd.f32 0.0, %v833
      %v835 = vpop.f32.mrb[0].mxu0
      %v836 = vpop.f32.mrb[0].mxu0
      %v837 = vadd.f32 0.0, %v836
      %v838 = vpop.f32.mrb[0].mxu0
      %839 = vmatprep.mubr.bf16.mxu0 0
      %840 = vmatmul.mubr.bf16.gmra.mrb[0].mxu0 %v636
      %v841 = vpop.f32.mrb[0].mxu0
      %v842 = vadd.f32 0.0, %v841
      %v843 = vpop.f32.mrb[0].mxu0
      %v844 = vpop.f32.mrb[0].mxu0
      %v845 = vadd.f32 0.0, %v844
      %v846 = vpop.f32.mrb[0].mxu0
      %847 = vmatprep.mubr.bf16.mxu0 0
      %848 = vmatmul.mubr.bf16.gmra.mrb[0].mxu0 %v637
      %v849 = vpop.f32.mrb[0].mxu0
      %v850 = vadd.f32 0.0, %v849
      %v851 = vpop.f32.mrb[0].mxu0
      %v852 = vpop.f32.mrb[0].mxu0
      %v853 = vadd.f32 0.0, %v852
      %v854 = vpop.f32.mrb[0].mxu0
      %855 = vmatprep.mubr.bf16.mxu0 0
      %856 = vmatmul.mubr.bf16.gmra.mrb[0].mxu0 %v638
      %v857 = vpop.f32.mrb[0].mxu0
      %v858 = vadd.f32 0.0, %v857
      %v859 = vpop.f32.mrb[0].mxu0
      %v860 = vpop.f32.mrb[0].mxu0
      %v861 = vadd.f32 0.0, %v860
      %v862 = vpop.f32.mrb[0].mxu0
      %863 = vdwg.mxu0
      %v864 = vadd.f32 %v479, %v738
      %v865 = vadd.f32 %v480, %v741
      %v866 = vadd.f32 %v481, %v746
      %v867 = vadd.f32 %v482, %v749
      %v868 = vadd.f32 %v483, %v754
      %v869 = vadd.f32 %v484, %v757
      %v870 = vadd.f32 %v485, %v762
      %v871 = vadd.f32 %v486, %v765
      %v872 = vadd.f32 %v487, %v770
      %v873 = vadd.f32 %v488, %v773
      %v874 = vadd.f32 %v489, %v778
      %v875 = vadd.f32 %v490, %v781
      %v876 = vadd.f32 %v491, %v786
      %v877 = vadd.f32 %v492, %v789
      %v878 = vadd.f32 %v493, %v794
      %v879 = vadd.f32 %v494, %v797
      %v880 = vadd.f32 %v495, %v802
      %v881 = vadd.f32 %v496, %v805
      %v882 = vadd.f32 %v497, %v810
      %v883 = vadd.f32 %v498, %v813
      %v884 = vadd.f32 %v499, %v818
      %v885 = vadd.f32 %v500, %v821
      %v886 = vadd.f32 %v501, %v826
      %v887 = vadd.f32 %v502, %v829
      %v888 = vadd.f32 %v503, %v834
      %v889 = vadd.f32 %v504, %v837
      %v890 = vadd.f32 %v505, %v842
      %v891 = vadd.f32 %v506, %v845
      %v892 = vadd.f32 %v507, %v850
      %v893 = vadd.f32 %v508, %v853
      %v894 = vadd.f32 %v509, %v858
      %v895 = vadd.f32 %v510, %v861
      %896 = vst [vmem:[#allocation2] sm:$0xff] %v864
      %897 = vst [vmem:[#allocation2 + $0x8] sm:$0xff] %v865
      %898 = vst [vmem:[#allocation2 + $0x10] sm:$0xff] %v866
      %899 = vst [vmem:[#allocation2 + $0x18] sm:$0xff] %v867
      %900 = vst [vmem:[#allocation2 + $0x20] sm:$0xff] %v868
      %901 = vst [vmem:[#allocation2 + $0x28] sm:$0xff] %v869
      %902 = vst [vmem:[#allocation2 + $0x30] sm:$0xff] %v870
      %903 = vst [vmem:[#allocation2 + $0x38] sm:$0xff] %v871
      %904 = vst [vmem:[#allocation2 + $0x40] sm:$0xff] %v872
      %905 = vst [vmem:[#allocation2 + $0x48] sm:$0xff] %v873
      %906 = vst [vmem:[#allocation2 + $0x50] sm:$0xff] %v874
      %907 = vst [vmem:[#allocation2 + $0x58] sm:$0xff] %v875
      %908 = vst [vmem:[#allocation2 + $0x60] sm:$0xff] %v876
      %909 = vst [vmem:[#allocation2 + $0x68] sm:$0xff] %v877
      %910 = vst [vmem:[#allocation2 + $0x70] sm:$0xff] %v878
      %911 = vst [vmem:[#allocation2 + $0x78] sm:$0xff] %v879
      %912 = vst [vmem:[#allocation2 + $0x80] sm:$0xff] %v880
      %913 = vst [vmem:[#allocation2 + $0x88] sm:$0xff] %v881
      %914 = vst [vmem:[#allocation2 + $0x90] sm:$0xff] %v882
      %915 = vst [vmem:[#allocation2 + $0x98] sm:$0xff] %v883
      %916 = vst [vmem:[#allocation2 + $0xa0] sm:$0xff] %v884
      %917 = vst [vmem:[#allocation2 + $0xa8] sm:$0xff] %v885
      %918 = vst [vmem:[#allocation2 + $0xb0] sm:$0xff] %v886
      %919 = vst [vmem:[#allocation2 + $0xb8] sm:$0xff] %v887
      %920 = vst [vmem:[#allocation2 + $0xc0] sm:$0xff] %v888
      %921 = vst [vmem:[#allocation2 + $0xc8] sm:$0xff] %v889
      %922 = vst [vmem:[#allocation2 + $0xd0] sm:$0xff] %v890
      %923 = vst [vmem:[#allocation2 + $0xd8] sm:$0xff] %v891
      %924 = vst [vmem:[#allocation2 + $0xe0] sm:$0xff] %v892
      %925 = vst [vmem:[#allocation2 + $0xe8] sm:$0xff] %v893
      %926 = vst [vmem:[#allocation2 + $0xf0] sm:$0xff] %v894
      %927 = vst [vmem:[#allocation2 + $0xf8] sm:$0xff] %v895
      // Predicated region
      $region53: #{resnet_gcn_forward.12} parent=47 // pred_check
        %p928 = pneg %p443
      $region54: #{resnet_gcn_forward.12} parent=47 // pred_check_branch
        %930 = sbr.rel (%p928) target = $region56
      $region55: #{resnet_gcn_forward.12} parent=47 // pred_region
        %v931 = vld [vmem:[#allocation2] sm:$0xff]
        %v932 = vld [vmem:[#allocation2 + $0x8] sm:$0xff]
        %v933 = vld [vmem:[#allocation2 + $0x10] sm:$0xff]
        %v934 = vld [vmem:[#allocation2 + $0x18] sm:$0xff]
        %v935 = vld [vmem:[#allocation2 + $0x20] sm:$0xff]
        %v936 = vld [vmem:[#allocation2 + $0x28] sm:$0xff]
        %v937 = vld [vmem:[#allocation2 + $0x30] sm:$0xff]
        %v938 = vld [vmem:[#allocation2 + $0x38] sm:$0xff]
        %v939 = vld [vmem:[#allocation2 + $0x40] sm:$0xff]
        %v940 = vld [vmem:[#allocation2 + $0x48] sm:$0xff]
        %v941 = vld [vmem:[#allocation2 + $0x50] sm:$0xff]
        %v942 = vld [vmem:[#allocation2 + $0x58] sm:$0xff]
        %v943 = vld [vmem:[#allocation2 + $0x60] sm:$0xff]
        %v944 = vld [vmem:[#allocation2 + $0x68] sm:$0xff]
        %v945 = vld [vmem:[#allocation2 + $0x70] sm:$0xff]
        %v946 = vld [vmem:[#allocation2 + $0x78] sm:$0xff]
        %v947 = vld [vmem:[#allocation2 + $0x80] sm:$0xff]
        %v948 = vld [vmem:[#allocation2 + $0x88] sm:$0xff]
        %v949 = vld [vmem:[#allocation2 + $0x90] sm:$0xff]
        %v950 = vld [vmem:[#allocation2 + $0x98] sm:$0xff]
        %v951 = vld [vmem:[#allocation2 + $0xa0] sm:$0xff]
        %v952 = vld [vmem:[#allocation2 + $0xa8] sm:$0xff]
        %v953 = vld [vmem:[#allocation2 + $0xb0] sm:$0xff]
        %v954 = vld [vmem:[#allocation2 + $0xb8] sm:$0xff]
        %v955 = vld [vmem:[#allocation2 + $0xc0] sm:$0xff]
        %v956 = vld [vmem:[#allocation2 + $0xc8] sm:$0xff]
        %v957 = vld [vmem:[#allocation2 + $0xd0] sm:$0xff]
        %v958 = vld [vmem:[#allocation2 + $0xd8] sm:$0xff]
        %v959 = vld [vmem:[#allocation2 + $0xe0] sm:$0xff]
        %v960 = vld [vmem:[#allocation2 + $0xe8] sm:$0xff]
        %v961 = vld [vmem:[#allocation2 + $0xf0] sm:$0xff]
        %v962 = vld [vmem:[#allocation2 + $0xf8] sm:$0xff]
        %v963 = vld [vmem:[%s414] sm:$0x1]
        %v965 = vlaneseq
        %v966 = vshrl.u32 %v965, 7
        %v967 = vsub.s32 0, %v966
        %v968 = vrot.slane %v963, %v967
        %v970 = vmul.f32 %v931, %v968
        %v971 = vmul.f32 %v932, %v968
        %v972 = vmul.f32 %v933, %v968
        %v973 = vmul.f32 %v934, %v968
        %v974 = vmul.f32 %v935, %v968
        %v975 = vmul.f32 %v936, %v968
        %v976 = vmul.f32 %v937, %v968
        %v977 = vmul.f32 %v938, %v968
        %v978 = vmul.f32 %v939, %v968
        %v979 = vmul.f32 %v940, %v968
        %v980 = vmul.f32 %v941, %v968
        %v981 = vmul.f32 %v942, %v968
        %v982 = vmul.f32 %v943, %v968
        %v983 = vmul.f32 %v944, %v968
        %v984 = vmul.f32 %v945, %v968
        %v985 = vmul.f32 %v946, %v968
        %v986 = vmul.f32 %v947, %v968
        %v987 = vmul.f32 %v948, %v968
        %v988 = vmul.f32 %v949, %v968
        %v989 = vmul.f32 %v950, %v968
        %v990 = vmul.f32 %v951, %v968
        %v991 = vmul.f32 %v952, %v968
        %v992 = vmul.f32 %v953, %v968
        %v993 = vmul.f32 %v954, %v968
        %v994 = vmul.f32 %v955, %v968
        %v995 = vmul.f32 %v956, %v968
        %v996 = vmul.f32 %v957, %v968
        %v997 = vmul.f32 %v958, %v968
        %v998 = vmul.f32 %v959, %v968
        %v999 = vmul.f32 %v960, %v968
        %v1000 = vmul.f32 %v961, %v968
        %v1001 = vmul.f32 %v962, %v968
        %v1002 = vld [vmem:[%s417] sm:$0x1]
        %v1004 = vlaneseq
        %v1005 = vshrl.u32 %v1004, 7
        %v1006 = vsub.s32 0, %v1005
        %v1007 = vrot.slane %v1002, %v1006
        %v1009 = vadd.f32 %v970, %v1007
        %v1010 = vadd.f32 %v971, %v1007
        %v1011 = vadd.f32 %v972, %v1007
        %v1012 = vadd.f32 %v973, %v1007
        %v1013 = vadd.f32 %v974, %v1007
        %v1014 = vadd.f32 %v975, %v1007
        %v1015 = vadd.f32 %v976, %v1007
        %v1016 = vadd.f32 %v977, %v1007
        %v1017 = vadd.f32 %v978, %v1007
        %v1018 = vadd.f32 %v979, %v1007
        %v1019 = vadd.f32 %v980, %v1007
        %v1020 = vadd.f32 %v981, %v1007
        %v1021 = vadd.f32 %v982, %v1007
        %v1022 = vadd.f32 %v983, %v1007
        %v1023 = vadd.f32 %v984, %v1007
        %v1024 = vadd.f32 %v985, %v1007
        %v1025 = vadd.f32 %v986, %v1007
        %v1026 = vadd.f32 %v987, %v1007
        %v1027 = vadd.f32 %v988, %v1007
        %v1028 = vadd.f32 %v989, %v1007
        %v1029 = vadd.f32 %v990, %v1007
        %v1030 = vadd.f32 %v991, %v1007
        %v1031 = vadd.f32 %v992, %v1007
        %v1032 = vadd.f32 %v993, %v1007
        %v1033 = vadd.f32 %v994, %v1007
        %v1034 = vadd.f32 %v995, %v1007
        %v1035 = vadd.f32 %v996, %v1007
        %v1036 = vadd.f32 %v997, %v1007
        %v1037 = vadd.f32 %v998, %v1007
        %v1038 = vadd.f32 %v999, %v1007
        %v1039 = vadd.f32 %v1000, %v1007
        %v1040 = vadd.f32 %v1001, %v1007
        %v1041 = vld [vmem:[%s420] sm:$0x1]
        %v1043 = vlaneseq
        %v1044 = vshrl.u32 %v1043, 7
        %v1045 = vsub.s32 0, %v1044
        %v1046 = vrot.slane %v1041, %v1045
        %v1048 = vmul.f32 %v1009, %v1046
        %v1049 = vmul.f32 %v1010, %v1046
        %v1050 = vmul.f32 %v1011, %v1046
        %v1051 = vmul.f32 %v1012, %v1046
        %v1052 = vmul.f32 %v1013, %v1046
        %v1053 = vmul.f32 %v1014, %v1046
        %v1054 = vmul.f32 %v1015, %v1046
        %v1055 = vmul.f32 %v1016, %v1046
        %v1056 = vmul.f32 %v1017, %v1046
        %v1057 = vmul.f32 %v1018, %v1046
        %v1058 = vmul.f32 %v1019, %v1046
        %v1059 = vmul.f32 %v1020, %v1046
        %v1060 = vmul.f32 %v1021, %v1046
        %v1061 = vmul.f32 %v1022, %v1046
        %v1062 = vmul.f32 %v1023, %v1046
        %v1063 = vmul.f32 %v1024, %v1046
        %v1064 = vmul.f32 %v1025, %v1046
        %v1065 = vmul.f32 %v1026, %v1046
        %v1066 = vmul.f32 %v1027, %v1046
        %v1067 = vmul.f32 %v1028, %v1046
        %v1068 = vmul.f32 %v1029, %v1046
        %v1069 = vmul.f32 %v1030, %v1046
        %v1070 = vmul.f32 %v1031, %v1046
        %v1071 = vmul.f32 %v1032, %v1046
        %v1072 = vmul.f32 %v1033, %v1046
        %v1073 = vmul.f32 %v1034, %v1046
        %v1074 = vmul.f32 %v1035, %v1046
        %v1075 = vmul.f32 %v1036, %v1046
        %v1076 = vmul.f32 %v1037, %v1046
        %v1077 = vmul.f32 %v1038, %v1046
        %v1078 = vmul.f32 %v1039, %v1046
        %v1079 = vmul.f32 %v1040, %v1046
        %v1080 = vld [vmem:[%s423] sm:$0x1]
        %v1082 = vlaneseq
        %v1083 = vshrl.u32 %v1082, 7
        %v1084 = vsub.s32 0, %v1083
        %v1085 = vrot.slane %v1080, %v1084
        %v1087 = vadd.f32 %v1048, %v1085
        %v1088 = vadd.f32 %v1049, %v1085
        %v1089 = vadd.f32 %v1050, %v1085
        %v1090 = vadd.f32 %v1051, %v1085
        %v1091 = vadd.f32 %v1052, %v1085
        %v1092 = vadd.f32 %v1053, %v1085
        %v1093 = vadd.f32 %v1054, %v1085
        %v1094 = vadd.f32 %v1055, %v1085
        %v1095 = vadd.f32 %v1056, %v1085
        %v1096 = vadd.f32 %v1057, %v1085
        %v1097 = vadd.f32 %v1058, %v1085
        %v1098 = vadd.f32 %v1059, %v1085
        %v1099 = vadd.f32 %v1060, %v1085
        %v1100 = vadd.f32 %v1061, %v1085
        %v1101 = vadd.f32 %v1062, %v1085
        %v1102 = vadd.f32 %v1063, %v1085
        %v1103 = vadd.f32 %v1064, %v1085
        %v1104 = vadd.f32 %v1065, %v1085
        %v1105 = vadd.f32 %v1066, %v1085
        %v1106 = vadd.f32 %v1067, %v1085
        %v1107 = vadd.f32 %v1068, %v1085
        %v1108 = vadd.f32 %v1069, %v1085
        %v1109 = vadd.f32 %v1070, %v1085
        %v1110 = vadd.f32 %v1071, %v1085
        %v1111 = vadd.f32 %v1072, %v1085
        %v1112 = vadd.f32 %v1073, %v1085
        %v1113 = vadd.f32 %v1074, %v1085
        %v1114 = vadd.f32 %v1075, %v1085
        %v1115 = vadd.f32 %v1076, %v1085
        %v1116 = vadd.f32 %v1077, %v1085
        %v1117 = vadd.f32 %v1078, %v1085
        %v1118 = vadd.f32 %v1079, %v1085
        %v1119 = vld [vmem:[%s431] sm:$0xf]
        %v1120 = vld [vmem:[%s431 + $0x4] sm:$0xf]
        %v1121 = vld [vmem:[%s431 + $0x8] sm:$0xf]
        %v1122 = vld [vmem:[%s431 + $0xc] sm:$0xf]
        %v1123 = vld [vmem:[%s431 + $0x10] sm:$0xf]
        %v1124 = vld [vmem:[%s431 + $0x14] sm:$0xf]
        %v1125 = vld [vmem:[%s431 + $0x18] sm:$0xf]
        %v1126 = vld [vmem:[%s431 + $0x1c] sm:$0xf]
        %v1127 = vld [vmem:[%s431 + $0x20] sm:$0xf]
        %v1128 = vld [vmem:[%s431 + $0x24] sm:$0xf]
        %v1129 = vld [vmem:[%s431 + $0x28] sm:$0xf]
        %v1130 = vld [vmem:[%s431 + $0x2c] sm:$0xf]
        %v1131 = vld [vmem:[%s431 + $0x30] sm:$0xf]
        %v1132 = vld [vmem:[%s431 + $0x34] sm:$0xf]
        %v1133 = vld [vmem:[%s431 + $0x38] sm:$0xf]
        %v1134 = vld [vmem:[%s431 + $0x3c] sm:$0xf]
        %v1135 = vld [vmem:[%s431 + $0x40] sm:$0xf]
        %v1136 = vld [vmem:[%s431 + $0x44] sm:$0xf]
        %v1137 = vld [vmem:[%s431 + $0x48] sm:$0xf]
        %v1138 = vld [vmem:[%s431 + $0x4c] sm:$0xf]
        %v1139 = vld [vmem:[%s431 + $0x50] sm:$0xf]
        %v1140 = vld [vmem:[%s431 + $0x54] sm:$0xf]
        %v1141 = vld [vmem:[%s431 + $0x58] sm:$0xf]
        %v1142 = vld [vmem:[%s431 + $0x5c] sm:$0xf]
        %v1143 = vld [vmem:[%s431 + $0x60] sm:$0xf]
        %v1144 = vld [vmem:[%s431 + $0x64] sm:$0xf]
        %v1145 = vld [vmem:[%s431 + $0x68] sm:$0xf]
        %v1146 = vld [vmem:[%s431 + $0x6c] sm:$0xf]
        %v1147 = vld [vmem:[%s431 + $0x70] sm:$0xf]
        %v1148 = vld [vmem:[%s431 + $0x74] sm:$0xf]
        %v1149 = vld [vmem:[%s431 + $0x78] sm:$0xf]
        %v1150 = vld [vmem:[%s431 + $0x7c] sm:$0xf]
        %v1151 = vunpack.c.l.bf16 %v1119
        %v1152 = vunpack.c.l.bf16 %v1120
        %v1153 = vunpack.c.l.bf16 %v1121
        %v1154 = vunpack.c.l.bf16 %v1122
        %v1155 = vunpack.c.l.bf16 %v1123
        %v1156 = vunpack.c.l.bf16 %v1124
        %v1157 = vunpack.c.l.bf16 %v1125
        %v1158 = vunpack.c.l.bf16 %v1126
        %v1159 = vunpack.c.l.bf16 %v1127
        %v1160 = vunpack.c.l.bf16 %v1128
        %v1161 = vunpack.c.l.bf16 %v1129
        %v1162 = vunpack.c.l.bf16 %v1130
        %v1163 = vunpack.c.l.bf16 %v1131
        %v1164 = vunpack.c.l.bf16 %v1132
        %v1165 = vunpack.c.l.bf16 %v1133
        %v1166 = vunpack.c.l.bf16 %v1134
        %v1167 = vunpack.c.l.bf16 %v1135
        %v1168 = vunpack.c.l.bf16 %v1136
        %v1169 = vunpack.c.l.bf16 %v1137
        %v1170 = vunpack.c.l.bf16 %v1138
        %v1171 = vunpack.c.l.bf16 %v1139
        %v1172 = vunpack.c.l.bf16 %v1140
        %v1173 = vunpack.c.l.bf16 %v1141
        %v1174 = vunpack.c.l.bf16 %v1142
        %v1175 = vunpack.c.l.bf16 %v1143
        %v1176 = vunpack.c.l.bf16 %v1144
        %v1177 = vunpack.c.l.bf16 %v1145
        %v1178 = vunpack.c.l.bf16 %v1146
        %v1179 = vunpack.c.l.bf16 %v1147
        %v1180 = vunpack.c.l.bf16 %v1148
        %v1181 = vunpack.c.l.bf16 %v1149
        %v1182 = vunpack.c.l.bf16 %v1150
        %v1183 = vadd.f32 %v1087, %v1151
        %v1184 = vadd.f32 %v1088, %v1152
        %v1185 = vadd.f32 %v1089, %v1153
        %v1186 = vadd.f32 %v1090, %v1154
        %v1187 = vadd.f32 %v1091, %v1155
        %v1188 = vadd.f32 %v1092, %v1156
        %v1189 = vadd.f32 %v1093, %v1157
        %v1190 = vadd.f32 %v1094, %v1158
        %v1191 = vadd.f32 %v1095, %v1159
        %v1192 = vadd.f32 %v1096, %v1160
        %v1193 = vadd.f32 %v1097, %v1161
        %v1194 = vadd.f32 %v1098, %v1162
        %v1195 = vadd.f32 %v1099, %v1163
        %v1196 = vadd.f32 %v1100, %v1164
        %v1197 = vadd.f32 %v1101, %v1165
        %v1198 = vadd.f32 %v1102, %v1166
        %v1199 = vadd.f32 %v1103, %v1167
        %v1200 = vadd.f32 %v1104, %v1168
        %v1201 = vadd.f32 %v1105, %v1169
        %v1202 = vadd.f32 %v1106, %v1170
        %v1203 = vadd.f32 %v1107, %v1171
        %v1204 = vadd.f32 %v1108, %v1172
        %v1205 = vadd.f32 %v1109, %v1173
        %v1206 = vadd.f32 %v1110, %v1174
        %v1207 = vadd.f32 %v1111, %v1175
        %v1208 = vadd.f32 %v1112, %v1176
        %v1209 = vadd.f32 %v1113, %v1177
        %v1210 = vadd.f32 %v1114, %v1178
        %v1211 = vadd.f32 %v1115, %v1179
        %v1212 = vadd.f32 %v1116, %v1180
        %v1213 = vadd.f32 %v1117, %v1181
        %v1214 = vadd.f32 %v1118, %v1182
        %v1215 = vmax.f32 %v1183, 0.0
        %v1216 = vmax.f32 %v1184, 0.0
        %v1217 = vmax.f32 %v1185, 0.0
        %v1218 = vmax.f32 %v1186, 0.0
        %v1219 = vmax.f32 %v1187, 0.0
        %v1220 = vmax.f32 %v1188, 0.0
        %v1221 = vmax.f32 %v1189, 0.0
        %v1222 = vmax.f32 %v1190, 0.0
        %v1223 = vmax.f32 %v1191, 0.0
        %v1224 = vmax.f32 %v1192, 0.0
        %v1225 = vmax.f32 %v1193, 0.0
        %v1226 = vmax.f32 %v1194, 0.0
        %v1227 = vmax.f32 %v1195, 0.0
        %v1228 = vmax.f32 %v1196, 0.0
        %v1229 = vmax.f32 %v1197, 0.0
        %v1230 = vmax.f32 %v1198, 0.0
        %v1231 = vmax.f32 %v1199, 0.0
        %v1232 = vmax.f32 %v1200, 0.0
        %v1233 = vmax.f32 %v1201, 0.0
        %v1234 = vmax.f32 %v1202, 0.0
        %v1235 = vmax.f32 %v1203, 0.0
        %v1236 = vmax.f32 %v1204, 0.0
        %v1237 = vmax.f32 %v1205, 0.0
        %v1238 = vmax.f32 %v1206, 0.0
        %v1239 = vmax.f32 %v1207, 0.0
        %v1240 = vmax.f32 %v1208, 0.0
        %v1241 = vmax.f32 %v1209, 0.0
        %v1242 = vmax.f32 %v1210, 0.0
        %v1243 = vmax.f32 %v1211, 0.0
        %v1244 = vmax.f32 %v1212, 0.0
        %v1245 = vmax.f32 %v1213, 0.0
        %v1246 = vmax.f32 %v1214, 0.0
        %v1247 = vpack.c.bf16 %v1216, %v1215
        %v1248 = vpack.c.bf16 %v1218, %v1217
        %v1249 = vpack.c.bf16 %v1220, %v1219
        %v1250 = vpack.c.bf16 %v1222, %v1221
        %v1251 = vpack.c.bf16 %v1224, %v1223
        %v1252 = vpack.c.bf16 %v1226, %v1225
        %v1253 = vpack.c.bf16 %v1228, %v1227
        %v1254 = vpack.c.bf16 %v1230, %v1229
        %v1255 = vpack.c.bf16 %v1232, %v1231
        %v1256 = vpack.c.bf16 %v1234, %v1233
        %v1257 = vpack.c.bf16 %v1236, %v1235
        %v1258 = vpack.c.bf16 %v1238, %v1237
        %v1259 = vpack.c.bf16 %v1240, %v1239
        %v1260 = vpack.c.bf16 %v1242, %v1241
        %v1261 = vpack.c.bf16 %v1244, %v1243
        %v1262 = vpack.c.bf16 %v1246, %v1245
        %v1279 = vunpack.c.l.b16 %v1247
        %v1280 = vunpack.c.h.b16 %v1247
        %v1281 = vunpack.c.l.b16 %v1248
        %v1282 = vunpack.c.h.b16 %v1248
        %v1283 = vunpack.c.l.b16 %v1249
        %v1284 = vunpack.c.h.b16 %v1249
        %v1285 = vunpack.c.l.b16 %v1250
        %v1286 = vunpack.c.h.b16 %v1250
        %v1287 = vunpack.c.l.b16 %v1251
        %v1288 = vunpack.c.h.b16 %v1251
        %v1289 = vunpack.c.l.b16 %v1252
        %v1290 = vunpack.c.h.b16 %v1252
        %v1291 = vunpack.c.l.b16 %v1253
        %v1292 = vunpack.c.h.b16 %v1253
        %v1293 = vunpack.c.l.b16 %v1254
        %v1294 = vunpack.c.h.b16 %v1254
        %v1295 = vunpack.c.l.b16 %v1255
        %v1296 = vunpack.c.h.b16 %v1255
        %v1297 = vunpack.c.l.b16 %v1256
        %v1298 = vunpack.c.h.b16 %v1256
        %v1299 = vunpack.c.l.b16 %v1257
        %v1300 = vunpack.c.h.b16 %v1257
        %v1301 = vunpack.c.l.b16 %v1258
        %v1302 = vunpack.c.h.b16 %v1258
        %v1303 = vunpack.c.l.b16 %v1259
        %v1304 = vunpack.c.h.b16 %v1259
        %v1305 = vunpack.c.l.b16 %v1260
        %v1306 = vunpack.c.h.b16 %v1260
        %v1307 = vunpack.c.l.b16 %v1261
        %v1308 = vunpack.c.h.b16 %v1261
        %v1309 = vunpack.c.l.b16 %v1262
        %v1310 = vunpack.c.h.b16 %v1262
        %v1311 = vpack.c.b16 %v1279, %v1279
        %v1312 = vpack.c.b16 %v1280, %v1280
        %v1313 = vpack.c.b16 %v1281, %v1281
        %v1314 = vpack.c.b16 %v1282, %v1282
        %v1315 = vpack.c.b16 %v1283, %v1283
        %v1316 = vpack.c.b16 %v1284, %v1284
        %v1317 = vpack.c.b16 %v1285, %v1285
        %v1318 = vpack.c.b16 %v1286, %v1286
        %v1319 = vpack.c.b16 %v1287, %v1287
        %v1320 = vpack.c.b16 %v1288, %v1288
        %v1321 = vpack.c.b16 %v1289, %v1289
        %v1322 = vpack.c.b16 %v1290, %v1290
        %v1323 = vpack.c.b16 %v1291, %v1291
        %v1324 = vpack.c.b16 %v1292, %v1292
        %v1325 = vpack.c.b16 %v1293, %v1293
        %v1326 = vpack.c.b16 %v1294, %v1294
        %v1327 = vpack.c.b16 %v1295, %v1295
        %v1328 = vpack.c.b16 %v1296, %v1296
        %v1329 = vpack.c.b16 %v1297, %v1297
        %v1330 = vpack.c.b16 %v1298, %v1298
        %v1331 = vpack.c.b16 %v1299, %v1299
        %v1332 = vpack.c.b16 %v1300, %v1300
        %v1333 = vpack.c.b16 %v1301, %v1301
        %v1334 = vpack.c.b16 %v1302, %v1302
        %v1335 = vpack.c.b16 %v1303, %v1303
        %v1336 = vpack.c.b16 %v1304, %v1304
        %v1337 = vpack.c.b16 %v1305, %v1305
        %v1338 = vpack.c.b16 %v1306, %v1306
        %v1339 = vpack.c.b16 %v1307, %v1307
        %v1340 = vpack.c.b16 %v1308, %v1308
        %v1341 = vpack.c.b16 %v1309, %v1309
        %v1342 = vpack.c.b16 %v1310, %v1310
        %1375 = vst [vmem:[%s440] sm:$0xf] %v1311
        %1376 = vst [vmem:[%s440 + $0x4] sm:$0xf] %v1312
        %1377 = vst [vmem:[%s440 + $0x8] sm:$0xf] %v1313
        %1378 = vst [vmem:[%s440 + $0xc] sm:$0xf] %v1314
        %1379 = vst [vmem:[%s440 + $0x10] sm:$0xf] %v1315
        %1380 = vst [vmem:[%s440 + $0x14] sm:$0xf] %v1316
        %1381 = vst [vmem:[%s440 + $0x18] sm:$0xf] %v1317
        %1382 = vst [vmem:[%s440 + $0x1c] sm:$0xf] %v1318
        %1383 = vst [vmem:[%s440 + $0x20] sm:$0xf] %v1319
        %1384 = vst [vmem:[%s440 + $0x24] sm:$0xf] %v1320
        %1385 = vst [vmem:[%s440 + $0x28] sm:$0xf] %v1321
        %1386 = vst [vmem:[%s440 + $0x2c] sm:$0xf] %v1322
        %1387 = vst [vmem:[%s440 + $0x30] sm:$0xf] %v1323
        %1388 = vst [vmem:[%s440 + $0x34] sm:$0xf] %v1324
        %1389 = vst [vmem:[%s440 + $0x38] sm:$0xf] %v1325
        %1390 = vst [vmem:[%s440 + $0x3c] sm:$0xf] %v1326
        %1391 = vst [vmem:[%s440 + $0x40] sm:$0xf] %v1327
        %1392 = vst [vmem:[%s440 + $0x44] sm:$0xf] %v1328
        %1393 = vst [vmem:[%s440 + $0x48] sm:$0xf] %v1329
        %1394 = vst [vmem:[%s440 + $0x4c] sm:$0xf] %v1330
        %1395 = vst [vmem:[%s440 + $0x50] sm:$0xf] %v1331
        %1396 = vst [vmem:[%s440 + $0x54] sm:$0xf] %v1332
        %1397 = vst [vmem:[%s440 + $0x58] sm:$0xf] %v1333
        %1398 = vst [vmem:[%s440 + $0x5c] sm:$0xf] %v1334
        %1399 = vst [vmem:[%s440 + $0x60] sm:$0xf] %v1335
        %1400 = vst [vmem:[%s440 + $0x64] sm:$0xf] %v1336
        %1401 = vst [vmem:[%s440 + $0x68] sm:$0xf] %v1337
        %1402 = vst [vmem:[%s440 + $0x6c] sm:$0xf] %v1338
        %1403 = vst [vmem:[%s440 + $0x70] sm:$0xf] %v1339
        %1404 = vst [vmem:[%s440 + $0x74] sm:$0xf] %v1340
        %1405 = vst [vmem:[%s440 + $0x78] sm:$0xf] %v1341
        %1406 = vst [vmem:[%s440 + $0x7c] sm:$0xf] %v1342
      $region56: #{resnet_gcn_forward.12} parent=47 // pred_fallthru
        _
      %s1407 = smul.u32 32, %s23
      %p1408 = scmp.lt.s32.totalorder %s1407, 255
      %s1409 = scalar_select %p1408, %s1407, 255
      %p1410 = scmp.lt.s32.totalorder %s24, 0
      %s1411 = scalar_select %p1410, %s24, 0
      %s1412 = sadd.s32 %s1411, %s1409
      %s1413 = smul.addr %s1412, 4
      %s1414 = scalar_lea.vmem %s7, %s1413
      // Predicated region
      $region57: #{resnet_gcn_forward.12} parent=47 // pred_check
        %p1415 = pneg %p245
      $region58: #{resnet_gcn_forward.12} parent=47 // pred_check_branch
        %1417 = sbr.rel (%p1415) target = $region60
      $region59: #{resnet_gcn_forward.12} parent=47 // pred_region
        %s1418 = smul.u32 32, %s23
      $region60: #{resnet_gcn_forward.12} parent=47 // pred_fallthru
        _
    $region48: #{resnet_gcn_forward.12} parent=5 // pred_fallthru
      _
    %p1419 = scmp.le.s32.totalorder 2, %s13
    // Predicated region
    $region61: #{resnet_gcn_forward.12} parent=5 // pred_check
      %p1420 = pneg %p1419
    $region62: #{resnet_gcn_forward.12} parent=5 // pred_check_branch
      %1422 = sbr.rel (%p1420) target = $region64
    $region63: #{resnet_gcn_forward.12} parent=5 // pred_region
      %s1423 = ssub.s32 %s13, 2
      // Predicated region
      $region65: #{resnet_gcn_forward.12} parent=63 // pred_check
        %p1424 = pneg %p251
      $region66: #{resnet_gcn_forward.12} parent=63 // pred_check_branch
        %1426 = sbr.rel (%p1424) target = $region68
      $region67: #{resnet_gcn_forward.12} parent=63 // pred_region
        %s1427 = smul.u32 32, %s26
        %p1428 = scmp.lt.s32.totalorder %s1427, 255
        %s1429 = scalar_select %p1428, %s1427, 255
        %p1430 = scmp.lt.s32.totalorder %s27, 0
        %s1431 = scalar_select %p1430, %s27, 0
        %s1432 = sadd.s32 %s1431, %s1429
        %s1433 = smul.addr %s1432, 4
        %s1434 = scalar_lea.vmem %s7, %s1433
      $region68: #{resnet_gcn_forward.12} parent=63 // pred_fallthru
        _
    $region64: #{resnet_gcn_forward.12} parent=5 // pred_fallthru
      _
  $region6: #{resnet_gcn_forward.12} parent=0 // loop_footer
    %s17 = sadd.s32 1, %s13
  $region7: #{resnet_gcn_forward.12} parent=0 // loop_footer_branch
    %12 = sbr.rel target = $region3
  $region8: #{resnet_gcn_forward.12} parent=0 // loop_exit
    _

// kernel: resnet_gcn_forward.13
$region0: #{resnet_gcn_forward.13}
  #allocation0 [shape = 'u32[]', space=smem, size = 0x4, offset = 0x4, fixed_abs, tag = 'smem constant byte address 0x4 - core index']
  #allocation1 [shape = 'u32[144,128]{1,0:T(1,128)}', space=vmem, size = 0x12000, scoped, tag = 'internal scratch']
  %s0 = inlined_call_operand.vmem [shape: bf16[2048,128], index: 0, kind: input, shape index: {}]
  %s1 = inlined_call_operand.vmem [shape: bf16[8,128], index: 1, kind: output, shape index: {}]
  %s2 = sld [smem:[#allocation0]]
  $region14: #{resnet_gcn_forward.13} parent=0
    _
  %s4 = ssub.s32 1, %s2
  %s5 = scalar_select 0, %s4, %s2
  // Predicated region
  $region2: #{resnet_gcn_forward.13} parent=0 // pred_check
    _
  $region3: #{resnet_gcn_forward.13} parent=0 // pred_check_branch
    %7 = sbr.rel (0) target = $region5
  $region4: #{resnet_gcn_forward.13} parent=0 // pred_region
    _
  $region5: #{resnet_gcn_forward.13} parent=0 // pred_fallthru
    _
  %v8 = vld [vmem:[%s0] sm:$0xf]
  %v9 = vld [vmem:[%s0 + $0x4] sm:$0xf]
  %v10 = vld [vmem:[%s0 + $0x8] sm:$0xf]
  %v11 = vld [vmem:[%s0 + $0xc] sm:$0xf]
  %v12 = vld [vmem:[%s0 + $0x10] sm:$0xf]
  %v13 = vld [vmem:[%s0 + $0x14] sm:$0xf]
  %v14 = vld [vmem:[%s0 + $0x18] sm:$0xf]
  %v15 = vld [vmem:[%s0 + $0x1c] sm:$0xf]
  %v16 = vld [vmem:[%s0 + $0x20] sm:$0xf]
  %v17 = vld [vmem:[%s0 + $0x24] sm:$0xf]
  %v18 = vld [vmem:[%s0 + $0x28] sm:$0xf]
  %v19 = vld [vmem:[%s0 + $0x2c] sm:$0xf]
  %v20 = vld [vmem:[%s0 + $0x30] sm:$0xf]
  %v21 = vld [vmem:[%s0 + $0x34] sm:$0xf]
  %v22 = vld [vmem:[%s0 + $0x38] sm:$0xf]
  %v23 = vld [vmem:[%s0 + $0x3c] sm:$0xf]
  %v24 = vld [vmem:[%s0 + $0x40] sm:$0xf]
  %v25 = vld [vmem:[%s0 + $0x44] sm:$0xf]
  %v26 = vld [vmem:[%s0 + $0x48] sm:$0xf]
  %v27 = vld [vmem:[%s0 + $0x4c] sm:$0xf]
  %v28 = vld [vmem:[%s0 + $0x50] sm:$0xf]
  %v29 = vld [vmem:[%s0 + $0x54] sm:$0xf]
  %v30 = vld [vmem:[%s0 + $0x58] sm:$0xf]
  %v31 = vld [vmem:[%s0 + $0x5c] sm:$0xf]
  %v32 = vld [vmem:[%s0 + $0x60] sm:$0xf]
  %v33 = vld [vmem:[%s0 + $0x64] sm:$0xf]
  %v34 = vld [vmem:[%s0 + $0x68] sm:$0xf]
  %v35 = vld [vmem:[%s0 + $0x6c] sm:$0xf]
  %v36 = vld [vmem:[%s0 + $0x70] sm:$0xf]
  %v37 = vld [vmem:[%s0 + $0x74] sm:$0xf]
  %v38 = vld [vmem:[%s0 + $0x78] sm:$0xf]
  %v39 = vld [vmem:[%s0 + $0x7c] sm:$0xf]
  %v40 = vunpack.c.l.bf16 %v8
  %v41 = vunpack.c.l.bf16 %v9
  %v42 = vunpack.c.l.bf16 %v10
  %v43 = vunpack.c.l.bf16 %v11
  %v44 = vunpack.c.l.bf16 %v12
  %v45 = vunpack.c.l.bf16 %v13
  %v46 = vunpack.c.l.bf16 %v14
  %v47 = vunpack.c.l.bf16 %v15
  %v48 = vunpack.c.l.bf16 %v16
  %v49 = vunpack.c.l.bf16 %v17
  %v50 = vunpack.c.l.bf16 %v18
  %v51 = vunpack.c.l.bf16 %v19
  %v52 = vunpack.c.l.bf16 %v20
  %v53 = vunpack.c.l.bf16 %v21
  %v54 = vunpack.c.l.bf16 %v22
  %v55 = vunpack.c.l.bf16 %v23
  %v56 = vunpack.c.l.bf16 %v24
  %v57 = vunpack.c.l.bf16 %v25
  %v58 = vunpack.c.l.bf16 %v26
  %v59 = vunpack.c.l.bf16 %v27
  %v60 = vunpack.c.l.bf16 %v28
  %v61 = vunpack.c.l.bf16 %v29
  %v62 = vunpack.c.l.bf16 %v30
  %v63 = vunpack.c.l.bf16 %v31
  %v64 = vunpack.c.l.bf16 %v32
  %v65 = vunpack.c.l.bf16 %v33
  %v66 = vunpack.c.l.bf16 %v34
  %v67 = vunpack.c.l.bf16 %v35
  %v68 = vunpack.c.l.bf16 %v36
  %v69 = vunpack.c.l.bf16 %v37
  %v70 = vunpack.c.l.bf16 %v38
  %v71 = vunpack.c.l.bf16 %v39
  %v72 = vadd.f32 %v40, %v41
  %v73 = vadd.f32 %v72, %v42
  %v74 = vadd.f32 %v73, %v43
  %v75 = vadd.f32 %v74, %v44
  %v76 = vadd.f32 %v75, %v45
  %v77 = vadd.f32 %v76, %v46
  %v78 = vadd.f32 %v77, %v47
  %v79 = vadd.f32 %v78, %v48
  %v80 = vadd.f32 %v79, %v49
  %v81 = vadd.f32 %v80, %v50
  %v82 = vadd.f32 %v81, %v51
  %v83 = vadd.f32 %v82, %v52
  %v84 = vadd.f32 %v83, %v53
  %v85 = vadd.f32 %v84, %v54
  %v86 = vadd.f32 %v85, %v55
  %v87 = vadd.f32 %v86, %v56
  %v88 = vadd.f32 %v87, %v57
  %v89 = vadd.f32 %v88, %v58
  %v90 = vadd.f32 %v89, %v59
  %v91 = vadd.f32 %v90, %v60
  %v92 = vadd.f32 %v91, %v61
  %v93 = vadd.f32 %v92, %v62
  %v94 = vadd.f32 %v93, %v63
  %v95 = vadd.f32 %v94, %v64
  %v96 = vadd.f32 %v95, %v65
  %v97 = vadd.f32 %v96, %v66
  %v98 = vadd.f32 %v97, %v67
  %v99 = vadd.f32 %v98, %v68
  %v100 = vadd.f32 %v99, %v69
  %v101 = vadd.f32 %v100, %v70
  %v102 = vadd.f32 %v101, %v71
  %v103 = vrot.slane %v102, 4
  %v104 = vadd.f32 %v102, %v103
  %v105 = vrot.slane %v104, 2
  %v106 = vadd.f32 %v104, %v105
  %v107 = vrot.slane %v106, 1
  %v108 = vadd.f32 %v106, %v107
  %v109 = vmul.f32 %v108, 0.00390625
  %v110 = vpack.c.bf16 %v109, %v109
  %vm111 = vcmask 1040384
  %vm112 = vsmask.f32 256
  %vm113 = vmand %vm111, %vm112
  %v114 = vld [vmem:[%s1] sm:$0x1]
  %v115 = vsel %vm113, %v110, %v114
  %116 = vst [vmem:[%s1] sm:$0x1] %v115
  %v117 = vld [vmem:[%s0 + $0x80] sm:$0xf]
  %v118 = vld [vmem:[%s0 + $0x84] sm:$0xf]
  %v119 = vld [vmem:[%s0 + $0x88] sm:$0xf]
  %v120 = vld [vmem:[%s0 + $0x8c] sm:$0xf]
  %v121 = vld [vmem:[%s0 + $0x90] sm:$0xf]
  %v122 = vld [vmem:[%s0 + $0x94] sm:$0xf]
  %v123 = vld [vmem:[%s0 + $0x98] sm:$0xf]
  %v124 = vld [vmem:[%s0 + $0x9c] sm:$0xf]
  %v125 = vld [vmem:[%s0 + $0xa0] sm:$0xf]
  %v126 = vld [vmem:[%s0 + $0xa4] sm:$0xf]
  %v127 = vld [vmem:[%s0 + $0xa8] sm:$0xf]
  %v128 = vld [vmem:[%s0 + $0xac] sm:$0xf]
  %v129 = vld [vmem:[%s0 + $0xb0] sm:$0xf]
  %v130 = vld [vmem:[%s0 + $0xb4] sm:$0xf]
  %v131 = vld [vmem:[%s0 + $0xb8] sm:$0xf]
  %v132 = vld [vmem:[%s0 + $0xbc] sm:$0xf]
  %v133 = vld [vmem:[%s0 + $0xc0] sm:$0xf]
  %v134 = vld [vmem:[%s0 + $0xc4] sm:$0xf]
  %v135 = vld [vmem:[%s0 + $0xc8] sm:$0xf]
  %v136 = vld [vmem:[%s0 + $0xcc] sm:$0xf]
  %v137 = vld [vmem:[%s0 + $0xd0] sm:$0xf]
  %v138 = vld [vmem:[%s0 + $0xd4] sm:$0xf]
  %v139 = vld [vmem:[%s0 + $0xd8] sm:$0xf]
  %v140 = vld [vmem:[%s0 + $0xdc] sm:$0xf]
  %v141 = vld [vmem:[%s0 + $0xe0] sm:$0xf]
  %v142 = vld [vmem:[%s0 + $0xe4] sm:$0xf]
  %v143 = vld [vmem:[%s0 + $0xe8] sm:$0xf]
  %v144 = vld [vmem:[%s0 + $0xec] sm:$0xf]
  %v145 = vld [vmem:[%s0 + $0xf0] sm:$0xf]
  %v146 = vld [vmem:[%s0 + $0xf4] sm:$0xf]
  %v147 = vld [vmem:[%s0 + $0xf8] sm:$0xf]
  %v148 = vld [vmem:[%s0 + $0xfc] sm:$0xf]
  %v149 = vunpack.c.l.bf16 %v117
  %v150 = vunpack.c.l.bf16 %v118
  %v151 = vunpack.c.l.bf16 %v119
  %v152 = vunpack.c.l.bf16 %v120
  %v153 = vunpack.c.l.bf16 %v121
  %v154 = vunpack.c.l.bf16 %v122
  %v155 = vunpack.c.l.bf16 %v123
  %v156 = vunpack.c.l.bf16 %v124
  %v157 = vunpack.c.l.bf16 %v125
  %v158 = vunpack.c.l.bf16 %v126
  %v159 = vunpack.c.l.bf16 %v127
  %v160 = vunpack.c.l.bf16 %v128
  %v161 = vunpack.c.l.bf16 %v129
  %v162 = vunpack.c.l.bf16 %v130
  %v163 = vunpack.c.l.bf16 %v131
  %v164 = vunpack.c.l.bf16 %v132
  %v165 = vunpack.c.l.bf16 %v133
  %v166 = vunpack.c.l.bf16 %v134
  %v167 = vunpack.c.l.bf16 %v135
  %v168 = vunpack.c.l.bf16 %v136
  %v169 = vunpack.c.l.bf16 %v137
  %v170 = vunpack.c.l.bf16 %v138
  %v171 = vunpack.c.l.bf16 %v139
  %v172 = vunpack.c.l.bf16 %v140
  %v173 = vunpack.c.l.bf16 %v141
  %v174 = vunpack.c.l.bf16 %v142
  %v175 = vunpack.c.l.bf16 %v143
  %v176 = vunpack.c.l.bf16 %v144
  %v177 = vunpack.c.l.bf16 %v145
  %v178 = vunpack.c.l.bf16 %v146
  %v179 = vunpack.c.l.bf16 %v147
  %v180 = vunpack.c.l.bf16 %v148
  %v181 = vadd.f32 %v149, %v150
  %v182 = vadd.f32 %v181, %v151
  %v183 = vadd.f32 %v182, %v152
  %v184 = vadd.f32 %v183, %v153
  %v185 = vadd.f32 %v184, %v154
  %v186 = vadd.f32 %v185, %v155
  %v187 = vadd.f32 %v186, %v156
  %v188 = vadd.f32 %v187, %v157
  %v189 = vadd.f32 %v188, %v158
  %v190 = vadd.f32 %v189, %v159
  %v191 = vadd.f32 %v190, %v160
  %v192 = vadd.f32 %v191, %v161
  %v193 = vadd.f32 %v192, %v162
  %v194 = vadd.f32 %v193, %v163
  %v195 = vadd.f32 %v194, %v164
  %v196 = vadd.f32 %v195, %v165
  %v197 = vadd.f32 %v196, %v166
  %v198 = vadd.f32 %v197, %v167
  %v199 = vadd.f32 %v198, %v168
  %v200 = vadd.f32 %v199, %v169
  %v201 = vadd.f32 %v200, %v170
  %v202 = vadd.f32 %v201, %v171
  %v203 = vadd.f32 %v202, %v172
  %v204 = vadd.f32 %v203, %v173
  %v205 = vadd.f32 %v204, %v174
  %v206 = vadd.f32 %v205, %v175
  %v207 = vadd.f32 %v206, %v176
  %v208 = vadd.f32 %v207, %v177
  %v209 = vadd.f32 %v208, %v178
  %v210 = vadd.f32 %v209, %v179
  %v211 = vadd.f32 %v210, %v180
  %v212 = vrot.slane %v211, 4
  %v213 = vadd.f32 %v211, %v212
  %v214 = vrot.slane %v213, 2
  %v215 = vadd.f32 %v213, %v214
  %v216 = vrot.slane %v215, 1
  %v217 = vadd.f32 %v215, %v216
  %v218 = vmul.f32 %v217, 0.00390625
  %v219 = vpack.c.bf16 %v218, %v218
  %vm220 = vsmask.f32 7938
  %vm221 = vmand %vm111, %vm220
  %v222 = vld [vmem:[%s1] sm:$0x1]
  %v223 = vsel %vm221, %v219, %v222
  %224 = vst [vmem:[%s1] sm:$0x1] %v223
  %v225 = vld [vmem:[%s0 + $0x100] sm:$0xf]
  %v226 = vld [vmem:[%s0 + $0x104] sm:$0xf]
  %v227 = vld [vmem:[%s0 + $0x108] sm:$0xf]
  %v228 = vld [vmem:[%s0 + $0x10c] sm:$0xf]
  %v229 = vld [vmem:[%s0 + $0x110] sm:$0xf]
  %v230 = vld [vmem:[%s0 + $0x114] sm:$0xf]
  %v231 = vld [vmem:[%s0 + $0x118] sm:$0xf]
  %v232 = vld [vmem:[%s0 + $0x11c] sm:$0xf]
  %v233 = vld [vmem:[%s0 + $0x120] sm:$0xf]
  %v234 = vld [vmem:[%s0 + $0x124] sm:$0xf]
  %v235 = vld [vmem:[%s0 + $0x128] sm:$0xf]
  %v236 = vld [vmem:[%s0 + $0x12c] sm:$0xf]
  %v237 = vld [vmem:[%s0 + $0x130] sm:$0xf]
  %v238 = vld [vmem:[%s0 + $0x134] sm:$0xf]
  %v239 = vld [vmem:[%s0 + $0x138] sm:$0xf]
  %v240 = vld [vmem:[%s0 + $0x13c] sm:$0xf]
  %v241 = vld [vmem:[%s0 + $0x140] sm:$0xf]
  %v242 = vld [vmem:[%s0 + $0x144] sm:$0xf]
  %v243 = vld [vmem:[%s0 + $0x148] sm:$0xf]
  %v244 = vld [vmem:[%s0 + $0x14c] sm:$0xf]
  %v245 = vld [vmem:[%s0 + $0x150] sm:$0xf]
  %v246 = vld [vmem:[%s0 + $0x154] sm:$0xf]
  %v247 = vld [vmem:[%s0 + $0x158] sm:$0xf]
  %v248 = vld [vmem:[%s0 + $0x15c] sm:$0xf]
  %v249 = vld [vmem:[%s0 + $0x160] sm:$0xf]
  %v250 = vld [vmem:[%s0 + $0x164] sm:$0xf]
  %v251 = vld [vmem:[%s0 + $0x168] sm:$0xf]
  %v252 = vld [vmem:[%s0 + $0x16c] sm:$0xf]
  %v253 = vld [vmem:[%s0 + $0x170] sm:$0xf]
  %v254 = vld [vmem:[%s0 + $0x174] sm:$0xf]
  %v255 = vld [vmem:[%s0 + $0x178] sm:$0xf]
  %v256 = vld [vmem:[%s0 + $0x17c] sm:$0xf]
  %v257 = vunpack.c.l.bf16 %v225
  %v258 = vunpack.c.l.bf16 %v226
  %v259 = vunpack.c.l.bf16 %v227
  %v260 = vunpack.c.l.bf16 %v228
  %v261 = vunpack.c.l.bf16 %v229
  %v262 = vunpack.c.l.bf16 %v230
  %v263 = vunpack.c.l.bf16 %v231
  %v264 = vunpack.c.l.bf16 %v232
  %v265 = vunpack.c.l.bf16 %v233
  %v266 = vunpack.c.l.bf16 %v234
  %v267 = vunpack.c.l.bf16 %v235
  %v268 = vunpack.c.l.bf16 %v236
  %v269 = vunpack.c.l.bf16 %v237
  %v270 = vunpack.c.l.bf16 %v238
  %v271 = vunpack.c.l.bf16 %v239
  %v272 = vunpack.c.l.bf16 %v240
  %v273 = vunpack.c.l.bf16 %v241
  %v274 = vunpack.c.l.bf16 %v242
  %v275 = vunpack.c.l.bf16 %v243
  %v276 = vunpack.c.l.bf16 %v244
  %v277 = vunpack.c.l.bf16 %v245
  %v278 = vunpack.c.l.bf16 %v246
  %v279 = vunpack.c.l.bf16 %v247
  %v280 = vunpack.c.l.bf16 %v248
  %v281 = vunpack.c.l.bf16 %v249
  %v282 = vunpack.c.l.bf16 %v250
  %v283 = vunpack.c.l.bf16 %v251
  %v284 = vunpack.c.l.bf16 %v252
  %v285 = vunpack.c.l.bf16 %v253
  %v286 = vunpack.c.l.bf16 %v254
  %v287 = vunpack.c.l.bf16 %v255
  %v288 = vunpack.c.l.bf16 %v256
  %v289 = vadd.f32 %v257, %v258
  %v290 = vadd.f32 %v289, %v259
  %v291 = vadd.f32 %v290, %v260
  %v292 = vadd.f32 %v291, %v261
  %v293 = vadd.f32 %v292, %v262
  %v294 = vadd.f32 %v293, %v263
  %v295 = vadd.f32 %v294, %v264
  %v296 = vadd.f32 %v295, %v265
  %v297 = vadd.f32 %v296, %v266
  %v298 = vadd.f32 %v297, %v267
  %v299 = vadd.f32 %v298, %v268
  %v300 = vadd.f32 %v299, %v269
  %v301 = vadd.f32 %v300, %v270
  %v302 = vadd.f32 %v301, %v271
  %v303 = vadd.f32 %v302, %v272
  %v304 = vadd.f32 %v303, %v273
  %v305 = vadd.f32 %v304, %v274
  %v306 = vadd.f32 %v305, %v275
  %v307 = vadd.f32 %v306, %v276
  %v308 = vadd.f32 %v307, %v277
  %v309 = vadd.f32 %v308, %v278
  %v310 = vadd.f32 %v309, %v279
  %v311 = vadd.f32 %v310, %v280
  %v312 = vadd.f32 %v311, %v281
  %v313 = vadd.f32 %v312, %v282
  %v314 = vadd.f32 %v313, %v283
  %v315 = vadd.f32 %v314, %v284
  %v316 = vadd.f32 %v315, %v285
  %v317 = vadd.f32 %v316, %v286
  %v318 = vadd.f32 %v317, %v287
  %v319 = vadd.f32 %v318, %v288
  %v320 = vrot.slane %v319, 4
  %v321 = vadd.f32 %v319, %v320
  %v322 = vrot.slane %v321, 2
  %v323 = vadd.f32 %v321, %v322
  %v324 = vrot.slane %v323, 1
  %v325 = vadd.f32 %v323, %v324
  %v326 = vmul.f32 %v325, 0.00390625
  %v327 = vpack.c.bf16 %v326, %v326
  %vm328 = vcmask 1041409
  %vm329 = vsmask.f32 1280
  %vm330 = vmand %vm328, %vm329
  %v331 = vld [vmem:[%s1] sm:$0x2]
  %v332 = vsel %vm330, %v327, %v331
  %333 = vst [vmem:[%s1] sm:$0x2] %v332
  %v334 = vld [vmem:[%s0 + $0x180] sm:$0xf]
  %v335 = vld [vmem:[%s0 + $0x184] sm:$0xf]
  %v336 = vld [vmem:[%s0 + $0x188] sm:$0xf]
  %v337 = vld [vmem:[%s0 + $0x18c] sm:$0xf]
  %v338 = vld [vmem:[%s0 + $0x190] sm:$0xf]
  %v339 = vld [vmem:[%s0 + $0x194] sm:$0xf]
  %v340 = vld [vmem:[%s0 + $0x198] sm:$0xf]
  %v341 = vld [vmem:[%s0 + $0x19c] sm:$0xf]
  %v342 = vld [vmem:[%s0 + $0x1a0] sm:$0xf]
  %v343 = vld [vmem:[%s0 + $0x1a4] sm:$0xf]
  %v344 = vld [vmem:[%s0 + $0x1a8] sm:$0xf]
  %v345 = vld [vmem:[%s0 + $0x1ac] sm:$0xf]
  %v346 = vld [vmem:[%s0 + $0x1b0] sm:$0xf]
  %v347 = vld [vmem:[%s0 + $0x1b4] sm:$0xf]
  %v348 = vld [vmem:[%s0 + $0x1b8] sm:$0xf]
  %v349 = vld [vmem:[%s0 + $0x1bc] sm:$0xf]
  %v350 = vld [vmem:[%s0 + $0x1c0] sm:$0xf]
  %v351 = vld [vmem:[%s0 + $0x1c4] sm:$0xf]
  %v352 = vld [vmem:[%s0 + $0x1c8] sm:$0xf]
  %v353 = vld [vmem:[%s0 + $0x1cc] sm:$0xf]
  %v354 = vld [vmem:[%s0 + $0x1d0] sm:$0xf]
  %v355 = vld [vmem:[%s0 + $0x1d4] sm:$0xf]
  %v356 = vld [vmem:[%s0 + $0x1d8] sm:$0xf]
  %v357 = vld [vmem:[%s0 + $0x1dc] sm:$0xf]
  %v358 = vld [vmem:[%s0 + $0x1e0] sm:$0xf]
  %v359 = vld [vmem:[%s0 + $0x1e4] sm:$0xf]
  %v360 = vld [vmem:[%s0 + $0x1e8] sm:$0xf]
  %v361 = vld [vmem:[%s0 + $0x1ec] sm:$0xf]
  %v362 = vld [vmem:[%s0 + $0x1f0] sm:$0xf]
  %v363 = vld [vmem:[%s0 + $0x1f4] sm:$0xf]
  %v364 = vld [vmem:[%s0 + $0x1f8] sm:$0xf]
  %v365 = vld [vmem:[%s0 + $0x1fc] sm:$0xf]
  %v366 = vunpack.c.l.bf16 %v334
  %v367 = vunpack.c.l.bf16 %v335
  %v368 = vunpack.c.l.bf16 %v336
  %v369 = vunpack.c.l.bf16 %v337
  %v370 = vunpack.c.l.bf16 %v338
  %v371 = vunpack.c.l.bf16 %v339
  %v372 = vunpack.c.l.bf16 %v340
  %v373 = vunpack.c.l.bf16 %v341
  %v374 = vunpack.c.l.bf16 %v342
  %v375 = vunpack.c.l.bf16 %v343
  %v376 = vunpack.c.l.bf16 %v344
  %v377 = vunpack.c.l.bf16 %v345
  %v378 = vunpack.c.l.bf16 %v346
  %v379 = vunpack.c.l.bf16 %v347
  %v380 = vunpack.c.l.bf16 %v348
  %v381 = vunpack.c.l.bf16 %v349
  %v382 = vunpack.c.l.bf16 %v350
  %v383 = vunpack.c.l.bf16 %v351
  %v384 = vunpack.c.l.bf16 %v352
  %v385 = vunpack.c.l.bf16 %v353
  %v386 = vunpack.c.l.bf16 %v354
  %v387 = vunpack.c.l.bf16 %v355
  %v388 = vunpack.c.l.bf16 %v356
  %v389 = vunpack.c.l.bf16 %v357
  %v390 = vunpack.c.l.bf16 %v358
  %v391 = vunpack.c.l.bf16 %v359
  %v392 = vunpack.c.l.bf16 %v360
  %v393 = vunpack.c.l.bf16 %v361
  %v394 = vunpack.c.l.bf16 %v362
  %v395 = vunpack.c.l.bf16 %v363
  %v396 = vunpack.c.l.bf16 %v364
  %v397 = vunpack.c.l.bf16 %v365
  %v398 = vadd.f32 %v366, %v367
  %v399 = vadd.f32 %v398, %v368
  %v400 = vadd.f32 %v399, %v369
  %v401 = vadd.f32 %v400, %v370
  %v402 = vadd.f32 %v401, %v371
  %v403 = vadd.f32 %v402, %v372
  %v404 = vadd.f32 %v403, %v373
  %v405 = vadd.f32 %v404, %v374
  %v406 = vadd.f32 %v405, %v375
  %v407 = vadd.f32 %v406, %v376
  %v408 = vadd.f32 %v407, %v377
  %v409 = vadd.f32 %v408, %v378
  %v410 = vadd.f32 %v409, %v379
  %v411 = vadd.f32 %v410, %v380
  %v412 = vadd.f32 %v411, %v381
  %v413 = vadd.f32 %v412, %v382
  %v414 = vadd.f32 %v413, %v383
  %v415 = vadd.f32 %v414, %v384
  %v416 = vadd.f32 %v415, %v385
  %v417 = vadd.f32 %v416, %v386
  %v418 = vadd.f32 %v417, %v387
  %v419 = vadd.f32 %v418, %v388
  %v420 = vadd.f32 %v419, %v389
  %v421 = vadd.f32 %v420, %v390
  %v422 = vadd.f32 %v421, %v391
  %v423 = vadd.f32 %v422, %v392
  %v424 = vadd.f32 %v423, %v393
  %v425 = vadd.f32 %v424, %v394
  %v426 = vadd.f32 %v425, %v395
  %v427 = vadd.f32 %v426, %v396
  %v428 = vadd.f32 %v427, %v397
  %v429 = vrot.slane %v428, 4
  %v430 = vadd.f32 %v428, %v429
  %v431 = vrot.slane %v430, 2
  %v432 = vadd.f32 %v430, %v431
  %v433 = vrot.slane %v432, 1
  %v434 = vadd.f32 %v432, %v433
  %v435 = vmul.f32 %v434, 0.00390625
  %v436 = vpack.c.bf16 %v435, %v435
  %vm437 = vsmask.f32 7942
  %vm438 = vmand %vm328, %vm437
  %v439 = vld [vmem:[%s1] sm:$0x2]
  %v440 = vsel %vm438, %v436, %v439
  %441 = vst [vmem:[%s1] sm:$0x2] %v440
  %v442 = vld [vmem:[%s0 + $0x200] sm:$0xf]
  %v443 = vld [vmem:[%s0 + $0x204] sm:$0xf]
  %v444 = vld [vmem:[%s0 + $0x208] sm:$0xf]
  %v445 = vld [vmem:[%s0 + $0x20c] sm:$0xf]
  %v446 = vld [vmem:[%s0 + $0x210] sm:$0xf]
  %v447 = vld [vmem:[%s0 + $0x214] sm:$0xf]
  %v448 = vld [vmem:[%s0 + $0x218] sm:$0xf]
  %v449 = vld [vmem:[%s0 + $0x21c] sm:$0xf]
  %v450 = vld [vmem:[%s0 + $0x220] sm:$0xf]
  %v451 = vld [vmem:[%s0 + $0x224] sm:$0xf]
  %v452 = vld [vmem:[%s0 + $0x228] sm:$0xf]
  %v453 = vld [vmem:[%s0 + $0x22c] sm:$0xf]
  %v454 = vld [vmem:[%s0 + $0x230] sm:$0xf]
  %v455 = vld [vmem:[%s0 + $0x234] sm:$0xf]
  %v456 = vld [vmem:[%s0 + $0x238] sm:$0xf]
  %v457 = vld [vmem:[%s0 + $0x23c] sm:$0xf]
  %v458 = vld [vmem:[%s0 + $0x240] sm:$0xf]
  %v459 = vld [vmem:[%s0 + $0x244] sm:$0xf]
  %v460 = vld [vmem:[%s0 + $0x248] sm:$0xf]
  %v461 = vld [vmem:[%s0 + $0x24c] sm:$0xf]
  %v462 = vld [vmem:[%s0 + $0x250] sm:$0xf]
  %v463 = vld [vmem:[%s0 + $0x254] sm:$0xf]
  %v464 = vld [vmem:[%s0 + $0x258] sm:$0xf]
  %v465 = vld [vmem:[%s0 + $0x25c] sm:$0xf]
  %v466 = vld [vmem:[%s0 + $0x260] sm:$0xf]
  %v467 = vld [vmem:[%s0 + $0x264] sm:$0xf]
  %v468 = vld [vmem:[%s0 + $0x268] sm:$0xf]
  %v469 = vld [vmem:[%s0 + $0x26c] sm:$0xf]
  %v470 = vld [vmem:[%s0 + $0x270] sm:$0xf]
  %v471 = vld [vmem:[%s0 + $0x274] sm:$0xf]
  %v472 = vld [vmem:[%s0 + $0x278] sm:$0xf]
  %v473 = vld [vmem:[%s0 + $0x27c] sm:$0xf]
  %v474 = vunpack.c.l.bf16 %v442
  %v475 = vunpack.c.l.bf16 %v443
  %v476 = vunpack.c.l.bf16 %v444
  %v477 = vunpack.c.l.bf16 %v445
  %v478 = vunpack.c.l.bf16 %v446
  %v479 = vunpack.c.l.bf16 %v447
  %v480 = vunpack.c.l.bf16 %v448
  %v481 = vunpack.c.l.bf16 %v449
  %v482 = vunpack.c.l.bf16 %v450
  %v483 = vunpack.c.l.bf16 %v451
  %v484 = vunpack.c.l.bf16 %v452
  %v485 = vunpack.c.l.bf16 %v453
  %v486 = vunpack.c.l.bf16 %v454
  %v487 = vunpack.c.l.bf16 %v455
  %v488 = vunpack.c.l.bf16 %v456
  %v489 = vunpack.c.l.bf16 %v457
  %v490 = vunpack.c.l.bf16 %v458
  %v491 = vunpack.c.l.bf16 %v459
  %v492 = vunpack.c.l.bf16 %v460
  %v493 = vunpack.c.l.bf16 %v461
  %v494 = vunpack.c.l.bf16 %v462
  %v495 = vunpack.c.l.bf16 %v463
  %v496 = vunpack.c.l.bf16 %v464
  %v497 = vunpack.c.l.bf16 %v465
  %v498 = vunpack.c.l.bf16 %v466
  %v499 = vunpack.c.l.bf16 %v467
  %v500 = vunpack.c.l.bf16 %v468
  %v501 = vunpack.c.l.bf16 %v469
  %v502 = vunpack.c.l.bf16 %v470
  %v503 = vunpack.c.l.bf16 %v471
  %v504 = vunpack.c.l.bf16 %v472
  %v505 = vunpack.c.l.bf16 %v473
  %v506 = vadd.f32 %v474, %v475
  %v507 = vadd.f32 %v506, %v476
  %v508 = vadd.f32 %v507, %v477
  %v509 = vadd.f32 %v508, %v478
  %v510 = vadd.f32 %v509, %v479
  %v511 = vadd.f32 %v510, %v480
  %v512 = vadd.f32 %v511, %v481
  %v513 = vadd.f32 %v512, %v482
  %v514 = vadd.f32 %v513, %v483
  %v515 = vadd.f32 %v514, %v484
  %v516 = vadd.f32 %v515, %v485
  %v517 = vadd.f32 %v516, %v486
  %v518 = vadd.f32 %v517, %v487
  %v519 = vadd.f32 %v518, %v488
  %v520 = vadd.f32 %v519, %v489
  %v521 = vadd.f32 %v520, %v490
  %v522 = vadd.f32 %v521, %v491
  %v523 = vadd.f32 %v522, %v492
  %v524 = vadd.f32 %v523, %v493
  %v525 = vadd.f32 %v524, %v494
  %v526 = vadd.f32 %v525, %v495
  %v527 = vadd.f32 %v526, %v496
  %v528 = vadd.f32 %v527, %v497
  %v529 = vadd.f32 %v528, %v498
  %v530 = vadd.f32 %v529, %v499
  %v531 = vadd.f32 %v530, %v500
  %v532 = vadd.f32 %v531, %v501
  %v533 = vadd.f32 %v532, %v502
  %v534 = vadd.f32 %v533, %v503
  %v535 = vadd.f32 %v534, %v504
  %v536 = vadd.f32 %v535, %v505
  %v537 = vrot.slane %v536, 4
  %v538 = vadd.f32 %v536, %v537
  %v539 = vrot.slane %v538, 2
  %v540 = vadd.f32 %v538, %v539
  %v541 = vrot.slane %v540, 1
  %v542 = vadd.f32 %v540, %v541
  %v543 = vmul.f32 %v542, 0.00390625
  %v544 = vpack.c.bf16 %v543, %v543
  %vm545 = vcmask 1042434
  %vm546 = vsmask.f32 2304
  %vm547 = vmand %vm545, %vm546
  %v548 = vld [vmem:[%s1] sm:$0x4]
  %v549 = vsel %vm547, %v544, %v548
  %550 = vst [vmem:[%s1] sm:$0x4] %v549
  %v551 = vld [vmem:[%s0 + $0x280] sm:$0xf]
  %v552 = vld [vmem:[%s0 + $0x284] sm:$0xf]
  %v553 = vld [vmem:[%s0 + $0x288] sm:$0xf]
  %v554 = vld [vmem:[%s0 + $0x28c] sm:$0xf]
  %v555 = vld [vmem:[%s0 + $0x290] sm:$0xf]
  %v556 = vld [vmem:[%s0 + $0x294] sm:$0xf]
  %v557 = vld [vmem:[%s0 + $0x298] sm:$0xf]
  %v558 = vld [vmem:[%s0 + $0x29c] sm:$0xf]
  %v559 = vld [vmem:[%s0 + $0x2a0] sm:$0xf]
  %v560 = vld [vmem:[%s0 + $0x2a4] sm:$0xf]
  %v561 = vld [vmem:[%s0 + $0x2a8] sm:$0xf]
  %v562 = vld [vmem:[%s0 + $0x2ac] sm:$0xf]
  %v563 = vld [vmem:[%s0 + $0x2b0] sm:$0xf]
  %v564 = vld [vmem:[%s0 + $0x2b4] sm:$0xf]
  %v565 = vld [vmem:[%s0 + $0x2b8] sm:$0xf]
  %v566 = vld [vmem:[%s0 + $0x2bc] sm:$0xf]
  %v567 = vld [vmem:[%s0 + $0x2c0] sm:$0xf]
  %v568 = vld [vmem:[%s0 + $0x2c4] sm:$0xf]
  %v569 = vld [vmem:[%s0 + $0x2c8] sm:$0xf]
  %v570 = vld [vmem:[%s0 + $0x2cc] sm:$0xf]
  %v571 = vld [vmem:[%s0 + $0x2d0] sm:$0xf]
  %v572 = vld [vmem:[%s0 + $0x2d4] sm:$0xf]
  %v573 = vld [vmem:[%s0 + $0x2d8] sm:$0xf]
  %v574 = vld [vmem:[%s0 + $0x2dc] sm:$0xf]
  %v575 = vld [vmem:[%s0 + $0x2e0] sm:$0xf]
  %v576 = vld [vmem:[%s0 + $0x2e4] sm:$0xf]
  %v577 = vld [vmem:[%s0 + $0x2e8] sm:$0xf]
  %v578 = vld [vmem:[%s0 + $0x2ec] sm:$0xf]
  %v579 = vld [vmem:[%s0 + $0x2f0] sm:$0xf]
  %v580 = vld [vmem:[%s0 + $0x2f4] sm:$0xf]
  %v581 = vld [vmem:[%s0 + $0x2f8] sm:$0xf]
  %v582 = vld [vmem:[%s0 + $0x2fc] sm:$0xf]
  %v583 = vunpack.c.l.bf16 %v551
  %v584 = vunpack.c.l.bf16 %v552
  %v585 = vunpack.c.l.bf16 %v553
  %v586 = vunpack.c.l.bf16 %v554
  %v587 = vunpack.c.l.bf16 %v555
  %v588 = vunpack.c.l.bf16 %v556
  %v589 = vunpack.c.l.bf16 %v557
  %v590 = vunpack.c.l.bf16 %v558
  %v591 = vunpack.c.l.bf16 %v559
  %v592 = vunpack.c.l.bf16 %v560
  %v593 = vunpack.c.l.bf16 %v561
  %v594 = vunpack.c.l.bf16 %v562
  %v595 = vunpack.c.l.bf16 %v563
  %v596 = vunpack.c.l.bf16 %v564
  %v597 = vunpack.c.l.bf16 %v565
  %v598 = vunpack.c.l.bf16 %v566
  %v599 = vunpack.c.l.bf16 %v567
  %v600 = vunpack.c.l.bf16 %v568
  %v601 = vunpack.c.l.bf16 %v569
  %v602 = vunpack.c.l.bf16 %v570
  %v603 = vunpack.c.l.bf16 %v571
  %v604 = vunpack.c.l.bf16 %v572
  %v605 = vunpack.c.l.bf16 %v573
  %v606 = vunpack.c.l.bf16 %v574
  %v607 = vunpack.c.l.bf16 %v575
  %v608 = vunpack.c.l.bf16 %v576
  %v609 = vunpack.c.l.bf16 %v577
  %v610 = vunpack.c.l.bf16 %v578
  %v611 = vunpack.c.l.bf16 %v579
  %v612 = vunpack.c.l.bf16 %v580
  %v613 = vunpack.c.l.bf16 %v581
  %v614 = vunpack.c.l.bf16 %v582
  %v615 = vadd.f32 %v583, %v584
  %v616 = vadd.f32 %v615, %v585
  %v617 = vadd.f32 %v616, %v586
  %v618 = vadd.f32 %v617, %v587
  %v619 = vadd.f32 %v618, %v588
  %v620 = vadd.f32 %v619, %v589
  %v621 = vadd.f32 %v620, %v590
  %v622 = vadd.f32 %v621, %v591
  %v623 = vadd.f32 %v622, %v592
  %v624 = vadd.f32 %v623, %v593
  %v625 = vadd.f32 %v624, %v594
  %v626 = vadd.f32 %v625, %v595
  %v627 = vadd.f32 %v626, %v596
  %v628 = vadd.f32 %v627, %v597
  %v629 = vadd.f32 %v628, %v598
  %v630 = vadd.f32 %v629, %v599
  %v631 = vadd.f32 %v630, %v600
  %v632 = vadd.f32 %v631, %v601
  %v633 = vadd.f32 %v632, %v602
  %v634 = vadd.f32 %v633, %v603
  %v635 = vadd.f32 %v634, %v604
  %v636 = vadd.f32 %v635, %v605
  %v637 = vadd.f32 %v636, %v606
  %v638 = vadd.f32 %v637, %v607
  %v639 = vadd.f32 %v638, %v608
  %v640 = vadd.f32 %v639, %v609
  %v641 = vadd.f32 %v640, %v610
  %v642 = vadd.f32 %v641, %v611
  %v643 = vadd.f32 %v642, %v612
  %v644 = vadd.f32 %v643, %v613
  %v645 = vadd.f32 %v644, %v614
  %v646 = vrot.slane %v645, 4
  %v647 = vadd.f32 %v645, %v646
  %v648 = vrot.slane %v647, 2
  %v649 = vadd.f32 %v647, %v648
  %v650 = vrot.slane %v649, 1
  %v651 = vadd.f32 %v649, %v650
  %v652 = vmul.f32 %v651, 0.00390625
  %v653 = vpack.c.bf16 %v652, %v652
  %vm654 = vsmask.f32 7946
  %vm655 = vmand %vm545, %vm654
  %v656 = vld [vmem:[%s1] sm:$0x4]
  %v657 = vsel %vm655, %v653, %v656
  %658 = vst [vmem:[%s1] sm:$0x4] %v657
  %v659 = vld [vmem:[%s0 + $0x300] sm:$0xf]
  %v660 = vld [vmem:[%s0 + $0x304] sm:$0xf]
  %v661 = vld [vmem:[%s0 + $0x308] sm:$0xf]
  %v662 = vld [vmem:[%s0 + $0x30c] sm:$0xf]
  %v663 = vld [vmem:[%s0 + $0x310] sm:$0xf]
  %v664 = vld [vmem:[%s0 + $0x314] sm:$0xf]
  %v665 = vld [vmem:[%s0 + $0x318] sm:$0xf]
  %v666 = vld [vmem:[%s0 + $0x31c] sm:$0xf]
  %v667 = vld [vmem:[%s0 + $0x320] sm:$0xf]
  %v668 = vld [vmem:[%s0 + $0x324] sm:$0xf]
  %v669 = vld [vmem:[%s0 + $0x328] sm:$0xf]
  %v670 = vld [vmem:[%s0 + $0x32c] sm:$0xf]
  %v671 = vld [vmem:[%s0 + $0x330] sm:$0xf]
  %v672 = vld [vmem:[%s0 + $0x334] sm:$0xf]
  %v673 = vld [vmem:[%s0 + $0x338] sm:$0xf]
  %v674 = vld [vmem:[%s0 + $0x33c] sm:$0xf]
  %v675 = vld [vmem:[%s0 + $0x340] sm:$0xf]
  %v676 = vld [vmem:[%s0 + $0x344] sm:$0xf]
  %v677 = vld [vmem:[%s0 + $0x348] sm:$0xf]
  %v678 = vld [vmem:[%s0 + $0x34c] sm:$0xf]
  %v679 = vld [vmem:[%s0 + $0x350] sm:$0xf]
  %v680 = vld [vmem:[%s0 + $0x354] sm:$0xf]
  %v681 = vld [vmem:[%s0 + $0x358] sm:$0xf]
  %v682 = vld [vmem:[%s0 + $0x35c] sm:$0xf]
  %v683 = vld [vmem:[%s0 + $0x360] sm:$0xf]
  %v684 = vld [vmem:[%s0 + $0x364] sm:$0xf]
  %v685 = vld [vmem:[%s0 + $0x368] sm:$0xf]
  %v686 = vld [vmem:[%s0 + $0x36c] sm:$0xf]
  %v687 = vld [vmem:[%s0 + $0x370] sm:$0xf]
  %v688 = vld [vmem:[%s0 + $0x374] sm:$0xf]
  %v689 = vld [vmem:[%s0 + $0x378] sm:$0xf]
  %v690 = vld [vmem:[%s0 + $0x37c] sm:$0xf]
  %v691 = vunpack.c.l.bf16 %v659
  %v692 = vunpack.c.l.bf16 %v660
  %v693 = vunpack.c.l.bf16 %v661
  %v694 = vunpack.c.l.bf16 %v662
  %v695 = vunpack.c.l.bf16 %v663
  %v696 = vunpack.c.l.bf16 %v664
  %v697 = vunpack.c.l.bf16 %v665
  %v698 = vunpack.c.l.bf16 %v666
  %v699 = vunpack.c.l.bf16 %v667
  %v700 = vunpack.c.l.bf16 %v668
  %v701 = vunpack.c.l.bf16 %v669
  %v702 = vunpack.c.l.bf16 %v670
  %v703 = vunpack.c.l.bf16 %v671
  %v704 = vunpack.c.l.bf16 %v672
  %v705 = vunpack.c.l.bf16 %v673
  %v706 = vunpack.c.l.bf16 %v674
  %v707 = vunpack.c.l.bf16 %v675
  %v708 = vunpack.c.l.bf16 %v676
  %v709 = vunpack.c.l.bf16 %v677
  %v710 = vunpack.c.l.bf16 %v678
  %v711 = vunpack.c.l.bf16 %v679
  %v712 = vunpack.c.l.bf16 %v680
  %v713 = vunpack.c.l.bf16 %v681
  %v714 = vunpack.c.l.bf16 %v682
  %v715 = vunpack.c.l.bf16 %v683
  %v716 = vunpack.c.l.bf16 %v684
  %v717 = vunpack.c.l.bf16 %v685
  %v718 = vunpack.c.l.bf16 %v686
  %v719 = vunpack.c.l.bf16 %v687
  %v720 = vunpack.c.l.bf16 %v688
  %v721 = vunpack.c.l.bf16 %v689
  %v722 = vunpack.c.l.bf16 %v690
  %v723 = vadd.f32 %v691, %v692
  %v724 = vadd.f32 %v723, %v693
  %v725 = vadd.f32 %v724, %v694
  %v726 = vadd.f32 %v725, %v695
  %v727 = vadd.f32 %v726, %v696
  %v728 = vadd.f32 %v727, %v697
  %v729 = vadd.f32 %v728, %v698
  %v730 = vadd.f32 %v729, %v699
  %v731 = vadd.f32 %v730, %v700
  %v732 = vadd.f32 %v731, %v701
  %v733 = vadd.f32 %v732, %v702
  %v734 = vadd.f32 %v733, %v703
  %v735 = vadd.f32 %v734, %v704
  %v736 = vadd.f32 %v735, %v705
  %v737 = vadd.f32 %v736, %v706
  %v738 = vadd.f32 %v737, %v707
  %v739 = vadd.f32 %v738, %v708
  %v740 = vadd.f32 %v739, %v709
  %v741 = vadd.f32 %v740, %v710
  %v742 = vadd.f32 %v741, %v711
  %v743 = vadd.f32 %v742, %v712
  %v744 = vadd.f32 %v743, %v713
  %v745 = vadd.f32 %v744, %v714
  %v746 = vadd.f32 %v745, %v715
  %v747 = vadd.f32 %v746, %v716
  %v748 = vadd.f32 %v747, %v717
  %v749 = vadd.f32 %v748, %v718
  %v750 = vadd.f32 %v749, %v719
  %v751 = vadd.f32 %v750, %v720
  %v752 = vadd.f32 %v751, %v721
  %v753 = vadd.f32 %v752, %v722
  %v754 = vrot.slane %v753, 4
  %v755 = vadd.f32 %v753, %v754
  %v756 = vrot.slane %v755, 2
  %v757 = vadd.f32 %v755, %v756
  %v758 = vrot.slane %v757, 1
  %v759 = vadd.f32 %v757, %v758
  %v760 = vmul.f32 %v759, 0.00390625
  %v761 = vpack.c.bf16 %v760, %v760
  %vm762 = vcmask 1043459
  %vm763 = vsmask.f32 3328
  %vm764 = vmand %vm762, %vm763
  %v765 = vld [vmem:[%s1] sm:$0x8]
  %v766 = vsel %vm764, %v761, %v765
  %767 = vst [vmem:[%s1] sm:$0x8] %v766
  %v768 = vld [vmem:[%s0 + $0x380] sm:$0xf]
  %v769 = vld [vmem:[%s0 + $0x384] sm:$0xf]
  %v770 = vld [vmem:[%s0 + $0x388] sm:$0xf]
  %v771 = vld [vmem:[%s0 + $0x38c] sm:$0xf]
  %v772 = vld [vmem:[%s0 + $0x390] sm:$0xf]
  %v773 = vld [vmem:[%s0 + $0x394] sm:$0xf]
  %v774 = vld [vmem:[%s0 + $0x398] sm:$0xf]
  %v775 = vld [vmem:[%s0 + $0x39c] sm:$0xf]
  %v776 = vld [vmem:[%s0 + $0x3a0] sm:$0xf]
  %v777 = vld [vmem:[%s0 + $0x3a4] sm:$0xf]
  %v778 = vld [vmem:[%s0 + $0x3a8] sm:$0xf]
  %v779 = vld [vmem:[%s0 + $0x3ac] sm:$0xf]
  %v780 = vld [vmem:[%s0 + $0x3b0] sm:$0xf]
  %v781 = vld [vmem:[%s0 + $0x3b4] sm:$0xf]
  %v782 = vld [vmem:[%s0 + $0x3b8] sm:$0xf]
  %v783 = vld [vmem:[%s0 + $0x3bc] sm:$0xf]
  %v784 = vld [vmem:[%s0 + $0x3c0] sm:$0xf]
  %v785 = vld [vmem:[%s0 + $0x3c4] sm:$0xf]
  %v786 = vld [vmem:[%s0 + $0x3c8] sm:$0xf]
  %v787 = vld [vmem:[%s0 + $0x3cc] sm:$0xf]
  %v788 = vld [vmem:[%s0 + $0x3d0] sm:$0xf]
  %v789 = vld [vmem:[%s0 + $0x3d4] sm:$0xf]
  %v790 = vld [vmem:[%s0 + $0x3d8] sm:$0xf]
  %v791 = vld [vmem:[%s0 + $0x3dc] sm:$0xf]
  %v792 = vld [vmem:[%s0 + $0x3e0] sm:$0xf]
  %v793 = vld [vmem:[%s0 + $0x3e4] sm:$0xf]
  %v794 = vld [vmem:[%s0 + $0x3e8] sm:$0xf]
  %v795 = vld [vmem:[%s0 + $0x3ec] sm:$0xf]
  %v796 = vld [vmem:[%s0 + $0x3f0] sm:$0xf]
  %v797 = vld [vmem:[%s0 + $0x3f4] sm:$0xf]
  %v798 = vld [vmem:[%s0 + $0x3f8] sm:$0xf]
  %v799 = vld [vmem:[%s0 + $0x3fc] sm:$0xf]
  %v800 = vunpack.c.l.bf16 %v768
  %v801 = vunpack.c.l.bf16 %v769
  %v802 = vunpack.c.l.bf16 %v770
  %v803 = vunpack.c.l.bf16 %v771
  %v804 = vunpack.c.l.bf16 %v772
  %v805 = vunpack.c.l.bf16 %v773
  %v806 = vunpack.c.l.bf16 %v774
  %v807 = vunpack.c.l.bf16 %v775
  %v808 = vunpack.c.l.bf16 %v776
  %v809 = vunpack.c.l.bf16 %v777
  %v810 = vunpack.c.l.bf16 %v778
  %v811 = vunpack.c.l.bf16 %v779
  %v812 = vunpack.c.l.bf16 %v780
  %v813 = vunpack.c.l.bf16 %v781
  %v814 = vunpack.c.l.bf16 %v782
  %v815 = vunpack.c.l.bf16 %v783
  %v816 = vunpack.c.l.bf16 %v784
  %v817 = vunpack.c.l.bf16 %v785
  %v818 = vunpack.c.l.bf16 %v786
  %v819 = vunpack.c.l.bf16 %v787
  %v820 = vunpack.c.l.bf16 %v788
  %v821 = vunpack.c.l.bf16 %v789
  %v822 = vunpack.c.l.bf16 %v790
  %v823 = vunpack.c.l.bf16 %v791
  %v824 = vunpack.c.l.bf16 %v792
  %v825 = vunpack.c.l.bf16 %v793
  %v826 = vunpack.c.l.bf16 %v794
  %v827 = vunpack.c.l.bf16 %v795
  %v828 = vunpack.c.l.bf16 %v796
  %v829 = vunpack.c.l.bf16 %v797
  %v830 = vunpack.c.l.bf16 %v798
  %v831 = vunpack.c.l.bf16 %v799
  %v832 = vadd.f32 %v800, %v801
  %v833 = vadd.f32 %v832, %v802
  %v834 = vadd.f32 %v833, %v803
  %v835 = vadd.f32 %v834, %v804
  %v836 = vadd.f32 %v835, %v805
  %v837 = vadd.f32 %v836, %v806
  %v838 = vadd.f32 %v837, %v807
  %v839 = vadd.f32 %v838, %v808
  %v840 = vadd.f32 %v839, %v809
  %v841 = vadd.f32 %v840, %v810
  %v842 = vadd.f32 %v841, %v811
  %v843 = vadd.f32 %v842, %v812
  %v844 = vadd.f32 %v843, %v813
  %v845 = vadd.f32 %v844, %v814
  %v846 = vadd.f32 %v845, %v815
  %v847 = vadd.f32 %v846, %v816
  %v848 = vadd.f32 %v847, %v817
  %v849 = vadd.f32 %v848, %v818
  %v850 = vadd.f32 %v849, %v819
  %v851 = vadd.f32 %v850, %v820
  %v852 = vadd.f32 %v851, %v821
  %v853 = vadd.f32 %v852, %v822
  %v854 = vadd.f32 %v853, %v823
  %v855 = vadd.f32 %v854, %v824
  %v856 = vadd.f32 %v855, %v825
  %v857 = vadd.f32 %v856, %v826
  %v858 = vadd.f32 %v857, %v827
  %v859 = vadd.f32 %v858, %v828
  %v860 = vadd.f32 %v859, %v829
  %v861 = vadd.f32 %v860, %v830
  %v862 = vadd.f32 %v861, %v831
  %v863 = vrot.slane %v862, 4
  %v864 = vadd.f32 %v862, %v863
  %v865 = vrot.slane %v864, 2
  %v866 = vadd.f32 %v864, %v865
  %v867 = vrot.slane %v866, 1
  %v868 = vadd.f32 %v866, %v867
  %v869 = vmul.f32 %v868, 0.00390625
  %v870 = vpack.c.bf16 %v869, %v869
  %vm871 = vsmask.f32 7950
  %vm872 = vmand %vm762, %vm871
  %v873 = vld [vmem:[%s1] sm:$0x8]
  %v874 = vsel %vm872, %v870, %v873
  %875 = vst [vmem:[%s1] sm:$0x8] %v874
  // Predicated region
  $region6: #{resnet_gcn_forward.13} parent=0 // pred_check
    _
  $region7: #{resnet_gcn_forward.13} parent=0 // pred_check_branch
    %877 = sbr.rel (0) target = $region9
  $region8: #{resnet_gcn_forward.13} parent=0 // pred_region
    _
  $region9: #{resnet_gcn_forward.13} parent=0 // pred_fallthru
    _
  // Predicated region
  $region10: #{resnet_gcn_forward.13} parent=0 // pred_check
    _
  $region11: #{resnet_gcn_forward.13} parent=0 // pred_check_branch
    %879 = sbr.rel (0) target = $region13
  $region12: #{resnet_gcn_forward.13} parent=0 // pred_region
    _
  $region13: #{resnet_gcn_forward.13} parent=0 // pred_fallthru
    _

// kernel: resnet_gcn_forward.14
$region0: #{resnet_gcn_forward.14}
  #allocation0 [shape = 'u32[]', space=smem, size = 0x4, offset = 0x4, fixed_abs, tag = 'smem constant byte address 0x4 - core index']
  #allocation1 [shape = 'u32[144,128]{1,0:T(1,128)}', space=vmem, size = 0x12000, scoped, tag = 'internal scratch']
  %s0 = inlined_call_operand.vmem [shape: f32[8,8], index: 0, kind: input, shape index: {}]
  %s1 = inlined_call_operand.vmem [shape: bf16[8,128], index: 1, kind: input, shape index: {}]
  %s2 = inlined_call_operand.vmem [shape: bf16[128,128], index: 2, kind: input, shape index: {}]
  %s3 = inlined_call_operand.vmem [shape: f32[1,128], index: 3, kind: input, shape index: {}]
  %s4 = inlined_call_operand.vmem [shape: f32[1,128], index: 4, kind: input, shape index: {}]
  %s5 = inlined_call_operand.vmem [shape: f32[1,128], index: 5, kind: input, shape index: {}]
  %s6 = inlined_call_operand.vmem [shape: bf16[8,128], index: 6, kind: output, shape index: {}]
  %s7 = sld [smem:[#allocation0]]
  $region34: #{resnet_gcn_forward.14} parent=0
    _
  %s9 = ssub.s32 1, %s7
  %s10 = scalar_select 0, %s9, %s7
  // Predicated region
  $region2: #{resnet_gcn_forward.14} parent=0 // pred_check
    _
  $region3: #{resnet_gcn_forward.14} parent=0 // pred_check_branch
    %12 = sbr.rel (0) target = $region5
  $region4: #{resnet_gcn_forward.14} parent=0 // pred_region
    _
  $region5: #{resnet_gcn_forward.14} parent=0 // pred_fallthru
    _
  // Predicated region
  $region6: #{resnet_gcn_forward.14} parent=0 // pred_check
    _
  $region7: #{resnet_gcn_forward.14} parent=0 // pred_check_branch
    %14 = sbr.rel (0) target = $region9
  $region8: #{resnet_gcn_forward.14} parent=0 // pred_region
    _
  $region9: #{resnet_gcn_forward.14} parent=0 // pred_fallthru
    _
  // Predicated region
  $region10: #{resnet_gcn_forward.14} parent=0 // pred_check
    _
  $region11: #{resnet_gcn_forward.14} parent=0 // pred_check_branch
    %16 = sbr.rel (0) target = $region13
  $region12: #{resnet_gcn_forward.14} parent=0 // pred_region
    _
  $region13: #{resnet_gcn_forward.14} parent=0 // pred_fallthru
    _
  // Predicated region
  $region14: #{resnet_gcn_forward.14} parent=0 // pred_check
    _
  $region15: #{resnet_gcn_forward.14} parent=0 // pred_check_branch
    %18 = sbr.rel (0) target = $region17
  $region16: #{resnet_gcn_forward.14} parent=0 // pred_region
    _
  $region17: #{resnet_gcn_forward.14} parent=0 // pred_fallthru
    _
  // Predicated region
  $region18: #{resnet_gcn_forward.14} parent=0 // pred_check
    _
  $region19: #{resnet_gcn_forward.14} parent=0 // pred_check_branch
    %20 = sbr.rel (0) target = $region21
  $region20: #{resnet_gcn_forward.14} parent=0 // pred_region
    _
  $region21: #{resnet_gcn_forward.14} parent=0 // pred_fallthru
    _
  // Predicated region
  $region22: #{resnet_gcn_forward.14} parent=0 // pred_check
    _
  $region23: #{resnet_gcn_forward.14} parent=0 // pred_check_branch
    %22 = sbr.rel (0) target = $region25
  $region24: #{resnet_gcn_forward.14} parent=0 // pred_region
    _
  $region25: #{resnet_gcn_forward.14} parent=0 // pred_fallthru
    _
  %v24 = vld [vmem:[%s1] sm:$0xf]
  %v25 = vld [vmem:[%s2] sm:$0xf]
  %v26 = vld [vmem:[%s2 + $0x4] sm:$0xf]
  %v27 = vld [vmem:[%s2 + $0x8] sm:$0xf]
  %v28 = vld [vmem:[%s2 + $0xc] sm:$0xf]
  %v29 = vld [vmem:[%s2 + $0x10] sm:$0xf]
  %v30 = vld [vmem:[%s2 + $0x14] sm:$0xf]
  %v31 = vld [vmem:[%s2 + $0x18] sm:$0xf]
  %v32 = vld [vmem:[%s2 + $0x1c] sm:$0xf]
  %v33 = vld [vmem:[%s2 + $0x20] sm:$0xf]
  %v34 = vld [vmem:[%s2 + $0x24] sm:$0xf]
  %v35 = vld [vmem:[%s2 + $0x28] sm:$0xf]
  %v36 = vld [vmem:[%s2 + $0x2c] sm:$0xf]
  %v37 = vld [vmem:[%s2 + $0x30] sm:$0xf]
  %v38 = vld [vmem:[%s2 + $0x34] sm:$0xf]
  %v39 = vld [vmem:[%s2 + $0x38] sm:$0xf]
  %v40 = vld [vmem:[%s2 + $0x3c] sm:$0xf]
  %v57 = vunpack.c.l.b16 %v25
  %v58 = vunpack.c.l.b16 %v26
  %v59 = vunpack.c.l.b16 %v27
  %v60 = vunpack.c.l.b16 %v28
  %v61 = vunpack.c.l.b16 %v29
  %v62 = vunpack.c.l.b16 %v30
  %v63 = vunpack.c.l.b16 %v31
  %v64 = vunpack.c.l.b16 %v32
  %v65 = vunpack.c.l.b16 %v33
  %v66 = vunpack.c.l.b16 %v34
  %v67 = vunpack.c.l.b16 %v35
  %v68 = vunpack.c.l.b16 %v36
  %v69 = vunpack.c.l.b16 %v37
  %v70 = vunpack.c.l.b16 %v38
  %v71 = vunpack.c.l.b16 %v39
  %v72 = vunpack.c.l.b16 %v40
  %v73 = vpack.c.b16 %v58, %v57
  %v74 = vpack.c.b16 %v60, %v59
  %v75 = vpack.c.b16 %v62, %v61
  %v76 = vpack.c.b16 %v64, %v63
  %v77 = vpack.c.b16 %v66, %v65
  %v78 = vpack.c.b16 %v68, %v67
  %v79 = vpack.c.b16 %v70, %v69
  %v80 = vpack.c.b16 %v72, %v71
  %89 = vmatprep.subr.bf16.mxu0 0
  %90 = vmatpush1.bf16.msra.mxu0 %v73
  %91 = vmatprep.subr.bf16.mxu0 0
  %92 = vmatpush1.bf16.msra.mxu0 %v74
  %93 = vmatprep.subr.bf16.mxu0 0
  %94 = vmatpush1.bf16.msra.mxu0 %v75
  %95 = vmatprep.subr.bf16.mxu0 0
  %96 = vmatpush1.bf16.msra.mxu0 %v76
  %97 = vmatprep.subr.bf16.mxu0 0
  %98 = vmatpush1.bf16.msra.mxu0 %v77
  %99 = vmatprep.subr.bf16.mxu0 0
  %100 = vmatpush1.bf16.msra.mxu0 %v78
  %101 = vmatprep.subr.bf16.mxu0 0
  %102 = vmatpush1.bf16.msra.mxu0 %v79
  %103 = vmatprep.subr.bf16.mxu0 0
  %104 = vmatpush1.bf16.msra.mxu0 %v80
  %105 = vmatprep.subr.bf16.mxu0 0
  %106 = vmatpush1.bf16.msra.mxu0 0
  %107 = vmatprep.subr.bf16.mxu0 0
  %108 = vmatpush1.bf16.msra.mxu0 0
  %109 = vmatprep.subr.bf16.mxu0 0
  %110 = vmatpush1.bf16.msra.mxu0 0
  %111 = vmatprep.subr.bf16.mxu0 0
  %112 = vmatpush1.bf16.msra.mxu0 0
  %113 = vmatprep.subr.bf16.mxu0 0
  %114 = vmatpush1.bf16.msra.mxu0 0
  %115 = vmatprep.subr.bf16.mxu0 0
  %116 = vmatpush1.bf16.msra.mxu0 0
  %117 = vmatprep.subr.bf16.mxu0 0
  %118 = vmatpush1.bf16.msra.mxu0 0
  %119 = vmatprep.subr.bf16.mxu0 0
  %120 = vmatpush1.bf16.msra.mxu0 0
  %121 = vmatprep.mubr.bf16.mxu0 0
  %122 = vmatmul.mubr.bf16.gmra.mrb[0].mxu0 %v24
  %v123 = vpop.f32.mrb[0].mxu0
  %v124 = vadd.f32 0.0, %v123
  %v125 = vpop.f32.mrb[0].mxu0
  %v126 = vpop.f32.mrb[0].mxu0
  %v127 = vpop.f32.mrb[0].mxu0
  %128 = vdwg.mxu0
  %v129 = vld [vmem:[%s0] sm:$0xff]
  %v130 = vld [vmem:[%s3] sm:$0x1]
  %v132 = vlaneseq
  %v133 = vshrl.u32 %v132, 7
  %v134 = vsub.s32 0, %v133
  %v135 = vrot.slane %v130, %v134
  %vm137 = vcmask 64512
  %v139 = vsel %vm137, %v129, 0
  %141 = vmatprep.subr.mxu0 0.0
  %142 = vmatpush1.msra.mxu0 %v124
  %143 = vmatprep.subr.mxu0 0.0
  %144 = vmatpush1.msra.mxu0 0.0
  %145 = vmatprep.subr.mxu0 0.0
  %146 = vmatpush1.msra.mxu0 0.0
  %147 = vmatprep.subr.mxu0 0.0
  %148 = vmatpush1.msra.mxu0 0.0
  %149 = vmatprep.subr.mxu0 0.0
  %150 = vmatpush1.msra.mxu0 0.0
  %151 = vmatprep.subr.mxu0 0.0
  %152 = vmatpush1.msra.mxu0 0.0
  %153 = vmatprep.subr.mxu0 0.0
  %154 = vmatpush1.msra.mxu0 0.0
  %155 = vmatprep.subr.mxu0 0.0
  %156 = vmatpush1.msra.mxu0 0.0
  %157 = vmatprep.subr.mxu0 0.0
  %158 = vmatpush1.msra.mxu0 0.0
  %159 = vmatprep.subr.mxu0 0.0
  %160 = vmatpush1.msra.mxu0 0.0
  %161 = vmatprep.subr.mxu0 0.0
  %162 = vmatpush1.msra.mxu0 0.0
  %163 = vmatprep.subr.mxu0 0.0
  %164 = vmatpush1.msra.mxu0 0.0
  %165 = vmatprep.subr.mxu0 0.0
  %166 = vmatpush1.msra.mxu0 0.0
  %167 = vmatprep.subr.mxu0 0.0
  %168 = vmatpush1.msra.mxu0 0.0
  %169 = vmatprep.subr.mxu0 0.0
  %170 = vmatpush1.msra.mxu0 0.0
  %171 = vmatprep.subr.mxu0 0.0
  %172 = vmatpush1.msra.mxu0 0.0
  %173 = vmatprep.subr.mxu0 0.0
  %174 = vmatpush1.msra.mxu0 0.0
  %175 = vmatprep.subr.mxu0 0.0
  %176 = vmatpush1.msra.mxu0 0.0
  %177 = vmatprep.subr.mxu0 0.0
  %178 = vmatpush1.msra.mxu0 0.0
  %179 = vmatprep.subr.mxu0 0.0
  %180 = vmatpush1.msra.mxu0 0.0
  %181 = vmatprep.subr.mxu0 0.0
  %182 = vmatpush1.msra.mxu0 0.0
  %183 = vmatprep.subr.mxu0 0.0
  %184 = vmatpush1.msra.mxu0 0.0
  %185 = vmatprep.subr.mxu0 0.0
  %186 = vmatpush1.msra.mxu0 0.0
  %187 = vmatprep.subr.mxu0 0.0
  %188 = vmatpush1.msra.mxu0 0.0
  %189 = vmatprep.subr.mxu0 0.0
  %190 = vmatpush1.msra.mxu0 0.0
  %191 = vmatprep.subr.mxu0 0.0
  %192 = vmatpush1.msra.mxu0 0.0
  %193 = vmatprep.subr.mxu0 0.0
  %194 = vmatpush1.msra.mxu0 0.0
  %195 = vmatprep.subr.mxu0 0.0
  %196 = vmatpush1.msra.mxu0 0.0
  %197 = vmatprep.subr.mxu0 0.0
  %198 = vmatpush1.msra.mxu0 0.0
  %199 = vmatprep.subr.mxu0 0.0
  %200 = vmatpush1.msra.mxu0 0.0
  %201 = vmatprep.subr.mxu0 0.0
  %202 = vmatpush1.msra.mxu0 0.0
  %203 = vmatprep.subr.mxu0 0.0
  %204 = vmatpush1.msra.mxu0 0.0
  %205 = vmatprep.mubr.f32.mxu0 0.0
  %206 = vmatmul.mubr.f32.gmra.mrb[0].mxu0 %v139
  %v207 = vpop.f32.mrb[0].mxu0
  %v208 = vadd.f32 %v135, %v207
  %v209 = vpop.f32.mrb[0].mxu0
  %210 = vdwg.mxu0
  %v211 = vmax.f32 %v208, 0.0
  %v212 = vld [vmem:[%s4] sm:$0x1]
  %v214 = vlaneseq
  %v215 = vshrl.u32 %v214, 7
  %v216 = vsub.s32 0, %v215
  %v217 = vrot.slane %v212, %v216
  %v219 = vmul.f32 %v211, %v217
  %v220 = vld [vmem:[%s5] sm:$0x1]
  %v222 = vlaneseq
  %v223 = vshrl.u32 %v222, 7
  %v224 = vsub.s32 0, %v223
  %v225 = vrot.slane %v220, %v224
  %v227 = vadd.f32 %v219, %v225
  %v228 = vpack.c.bf16 %v227, %v227
  %229 = vst [vmem:[%s6] sm:$0xf] %v228
  // Predicated region
  $region26: #{resnet_gcn_forward.14} parent=0 // pred_check
    _
  $region27: #{resnet_gcn_forward.14} parent=0 // pred_check_branch
    %231 = sbr.rel (0) target = $region29
  $region28: #{resnet_gcn_forward.14} parent=0 // pred_region
    _
  $region29: #{resnet_gcn_forward.14} parent=0 // pred_fallthru
    _
  // Predicated region
  $region30: #{resnet_gcn_forward.14} parent=0 // pred_check
    _
  $region31: #{resnet_gcn_forward.14} parent=0 // pred_check_branch
    %233 = sbr.rel (0) target = $region33
  $region32: #{resnet_gcn_forward.14} parent=0 // pred_region
    _
  $region33: #{resnet_gcn_forward.14} parent=0 // pred_fallthru
    _

// kernel: resnet_gcn_forward.17
$region0: #{resnet_gcn_forward.17}
  #allocation0 [shape = 'u32[]', space=smem, size = 0x4, offset = 0x4, fixed_abs, tag = 'smem constant byte address 0x4 - core index']
  #allocation1 [shape = 'u32[144,128]{1,0:T(1,128)}', space=vmem, size = 0x12000, scoped, tag = 'internal scratch']
  %s0 = inlined_call_operand.vmem [shape: f32[2,8], index: 0, kind: input, shape index: {}]
  %s1 = inlined_call_operand.vmem [shape: bf16[8,128], index: 1, kind: input, shape index: {}]
  %s2 = inlined_call_operand.vmem [shape: bf16[128,128], index: 2, kind: input, shape index: {}]
  %s3 = inlined_call_operand.vmem [shape: f32[1,128], index: 3, kind: input, shape index: {}]
  %s4 = inlined_call_operand.vmem [shape: f32[1,128], index: 4, kind: input, shape index: {}]
  %s5 = inlined_call_operand.vmem [shape: f32[1,128], index: 5, kind: input, shape index: {}]
  %s6 = inlined_call_operand.hbm [shape: f32[2,128], index: 6, kind: output, shape index: {}]
  %s7 = sld [smem:[#allocation0]]
  $region34: #{resnet_gcn_forward.17} parent=0
    _
  %s9 = ssub.s32 1, %s7
  %s10 = scalar_select 0, %s9, %s7
  $region1: #{resnet_gcn_forward.17} parent=0
    #allocation2 [shape = 'u8[1024]{0}', space=vmem, size = 0x400, scoped, tag = 'output window, operand 0, single buffered']
    #allocation3 [shape = 's32[1]{0}', space=sflag, size = 0x4, scoped, tag = 'scoped memory for resnet_gcn_forward.17']
    %11 = vsyncpa [#allocation3], 0
    // Predicated region
    $region2: #{resnet_gcn_forward.17} parent=1 // pred_check
      _
    $region3: #{resnet_gcn_forward.17} parent=1 // pred_check_branch
      %13 = sbr.rel (0) target = $region5
    $region4: #{resnet_gcn_forward.17} parent=1 // pred_region
      _
    $region5: #{resnet_gcn_forward.17} parent=1 // pred_fallthru
      _
    // Predicated region
    $region6: #{resnet_gcn_forward.17} parent=1 // pred_check
      _
    $region7: #{resnet_gcn_forward.17} parent=1 // pred_check_branch
      %15 = sbr.rel (0) target = $region9
    $region8: #{resnet_gcn_forward.17} parent=1 // pred_region
      _
    $region9: #{resnet_gcn_forward.17} parent=1 // pred_fallthru
      _
    // Predicated region
    $region10: #{resnet_gcn_forward.17} parent=1 // pred_check
      _
    $region11: #{resnet_gcn_forward.17} parent=1 // pred_check_branch
      %17 = sbr.rel (0) target = $region13
    $region12: #{resnet_gcn_forward.17} parent=1 // pred_region
      _
    $region13: #{resnet_gcn_forward.17} parent=1 // pred_fallthru
      _
    // Predicated region
    $region14: #{resnet_gcn_forward.17} parent=1 // pred_check
      _
    $region15: #{resnet_gcn_forward.17} parent=1 // pred_check_branch
      %19 = sbr.rel (0) target = $region17
    $region16: #{resnet_gcn_forward.17} parent=1 // pred_region
      _
    $region17: #{resnet_gcn_forward.17} parent=1 // pred_fallthru
      _
    // Predicated region
    $region18: #{resnet_gcn_forward.17} parent=1 // pred_check
      _
    $region19: #{resnet_gcn_forward.17} parent=1 // pred_check_branch
      %21 = sbr.rel (0) target = $region21
    $region20: #{resnet_gcn_forward.17} parent=1 // pred_region
      _
    $region21: #{resnet_gcn_forward.17} parent=1 // pred_fallthru
      _
    // Predicated region
    $region22: #{resnet_gcn_forward.17} parent=1 // pred_check
      _
    $region23: #{resnet_gcn_forward.17} parent=1 // pred_check_branch
      %23 = sbr.rel (0) target = $region25
    $region24: #{resnet_gcn_forward.17} parent=1 // pred_region
      _
    $region25: #{resnet_gcn_forward.17} parent=1 // pred_fallthru
      _
    %v25 = vld [vmem:[%s1] sm:$0xf]
    %v26 = vld [vmem:[%s2] sm:$0xf]
    %v27 = vld [vmem:[%s2 + $0x4] sm:$0xf]
    %v28 = vld [vmem:[%s2 + $0x8] sm:$0xf]
    %v29 = vld [vmem:[%s2 + $0xc] sm:$0xf]
    %v30 = vld [vmem:[%s2 + $0x10] sm:$0xf]
    %v31 = vld [vmem:[%s2 + $0x14] sm:$0xf]
    %v32 = vld [vmem:[%s2 + $0x18] sm:$0xf]
    %v33 = vld [vmem:[%s2 + $0x1c] sm:$0xf]
    %v34 = vld [vmem:[%s2 + $0x20] sm:$0xf]
    %v35 = vld [vmem:[%s2 + $0x24] sm:$0xf]
    %v36 = vld [vmem:[%s2 + $0x28] sm:$0xf]
    %v37 = vld [vmem:[%s2 + $0x2c] sm:$0xf]
    %v38 = vld [vmem:[%s2 + $0x30] sm:$0xf]
    %v39 = vld [vmem:[%s2 + $0x34] sm:$0xf]
    %v40 = vld [vmem:[%s2 + $0x38] sm:$0xf]
    %v41 = vld [vmem:[%s2 + $0x3c] sm:$0xf]
    %v58 = vunpack.c.l.b16 %v26
    %v59 = vunpack.c.l.b16 %v27
    %v60 = vunpack.c.l.b16 %v28
    %v61 = vunpack.c.l.b16 %v29
    %v62 = vunpack.c.l.b16 %v30
    %v63 = vunpack.c.l.b16 %v31
    %v64 = vunpack.c.l.b16 %v32
    %v65 = vunpack.c.l.b16 %v33
    %v66 = vunpack.c.l.b16 %v34
    %v67 = vunpack.c.l.b16 %v35
    %v68 = vunpack.c.l.b16 %v36
    %v69 = vunpack.c.l.b16 %v37
    %v70 = vunpack.c.l.b16 %v38
    %v71 = vunpack.c.l.b16 %v39
    %v72 = vunpack.c.l.b16 %v40
    %v73 = vunpack.c.l.b16 %v41
    %v74 = vpack.c.b16 %v59, %v58
    %v75 = vpack.c.b16 %v61, %v60
    %v76 = vpack.c.b16 %v63, %v62
    %v77 = vpack.c.b16 %v65, %v64
    %v78 = vpack.c.b16 %v67, %v66
    %v79 = vpack.c.b16 %v69, %v68
    %v80 = vpack.c.b16 %v71, %v70
    %v81 = vpack.c.b16 %v73, %v72
    %90 = vmatprep.subr.bf16.mxu0 0
    %91 = vmatpush1.bf16.msra.mxu0 %v74
    %92 = vmatprep.subr.bf16.mxu0 0
    %93 = vmatpush1.bf16.msra.mxu0 %v75
    %94 = vmatprep.subr.bf16.mxu0 0
    %95 = vmatpush1.bf16.msra.mxu0 %v76
    %96 = vmatprep.subr.bf16.mxu0 0
    %97 = vmatpush1.bf16.msra.mxu0 %v77
    %98 = vmatprep.subr.bf16.mxu0 0
    %99 = vmatpush1.bf16.msra.mxu0 %v78
    %100 = vmatprep.subr.bf16.mxu0 0
    %101 = vmatpush1.bf16.msra.mxu0 %v79
    %102 = vmatprep.subr.bf16.mxu0 0
    %103 = vmatpush1.bf16.msra.mxu0 %v80
    %104 = vmatprep.subr.bf16.mxu0 0
    %105 = vmatpush1.bf16.msra.mxu0 %v81
    %106 = vmatprep.subr.bf16.mxu0 0
    %107 = vmatpush1.bf16.msra.mxu0 0
    %108 = vmatprep.subr.bf16.mxu0 0
    %109 = vmatpush1.bf16.msra.mxu0 0
    %110 = vmatprep.subr.bf16.mxu0 0
    %111 = vmatpush1.bf16.msra.mxu0 0
    %112 = vmatprep.subr.bf16.mxu0 0
    %113 = vmatpush1.bf16.msra.mxu0 0
    %114 = vmatprep.subr.bf16.mxu0 0
    %115 = vmatpush1.bf16.msra.mxu0 0
    %116 = vmatprep.subr.bf16.mxu0 0
    %117 = vmatpush1.bf16.msra.mxu0 0
    %118 = vmatprep.subr.bf16.mxu0 0
    %119 = vmatpush1.bf16.msra.mxu0 0
    %120 = vmatprep.subr.bf16.mxu0 0
    %121 = vmatpush1.bf16.msra.mxu0 0
    %122 = vmatprep.mubr.bf16.mxu0 0
    %123 = vmatmul.mubr.bf16.gmra.mrb[0].mxu0 %v25
    %v124 = vpop.f32.mrb[0].mxu0
    %v125 = vadd.f32 0.0, %v124
    %v126 = vpop.f32.mrb[0].mxu0
    %v127 = vpop.f32.mrb[0].mxu0
    %v128 = vpop.f32.mrb[0].mxu0
    %129 = vdwg.mxu0
    %v130 = vld [vmem:[%s0] sm:$0x3]
    %v131 = vld [vmem:[%s3] sm:$0x1]
    %v133 = vlaneseq
    %v134 = vshrl.u32 %v133, 7
    %v135 = vsub.s32 0, %v134
    %v136 = vrot.slane %v131, %v135
    %vm138 = vcmask 64512
    %v140 = vsel %vm138, %v130, 0
    %142 = vmatprep.subr.mxu0 0.0
    %143 = vmatpush1.msra.mxu0 %v125
    %144 = vmatprep.subr.mxu0 0.0
    %145 = vmatpush1.msra.mxu0 0.0
    %146 = vmatprep.subr.mxu0 0.0
    %147 = vmatpush1.msra.mxu0 0.0
    %148 = vmatprep.subr.mxu0 0.0
    %149 = vmatpush1.msra.mxu0 0.0
    %150 = vmatprep.subr.mxu0 0.0
    %151 = vmatpush1.msra.mxu0 0.0
    %152 = vmatprep.subr.mxu0 0.0
    %153 = vmatpush1.msra.mxu0 0.0
    %154 = vmatprep.subr.mxu0 0.0
    %155 = vmatpush1.msra.mxu0 0.0
    %156 = vmatprep.subr.mxu0 0.0
    %157 = vmatpush1.msra.mxu0 0.0
    %158 = vmatprep.subr.mxu0 0.0
    %159 = vmatpush1.msra.mxu0 0.0
    %160 = vmatprep.subr.mxu0 0.0
    %161 = vmatpush1.msra.mxu0 0.0
    %162 = vmatprep.subr.mxu0 0.0
    %163 = vmatpush1.msra.mxu0 0.0
    %164 = vmatprep.subr.mxu0 0.0
    %165 = vmatpush1.msra.mxu0 0.0
    %166 = vmatprep.subr.mxu0 0.0
    %167 = vmatpush1.msra.mxu0 0.0
    %168 = vmatprep.subr.mxu0 0.0
    %169 = vmatpush1.msra.mxu0 0.0
    %170 = vmatprep.subr.mxu0 0.0
    %171 = vmatpush1.msra.mxu0 0.0
    %172 = vmatprep.subr.mxu0 0.0
    %173 = vmatpush1.msra.mxu0 0.0
    %174 = vmatprep.subr.mxu0 0.0
    %175 = vmatpush1.msra.mxu0 0.0
    %176 = vmatprep.subr.mxu0 0.0
    %177 = vmatpush1.msra.mxu0 0.0
    %178 = vmatprep.subr.mxu0 0.0
    %179 = vmatpush1.msra.mxu0 0.0
    %180 = vmatprep.subr.mxu0 0.0
    %181 = vmatpush1.msra.mxu0 0.0
    %182 = vmatprep.subr.mxu0 0.0
    %183 = vmatpush1.msra.mxu0 0.0
    %184 = vmatprep.subr.mxu0 0.0
    %185 = vmatpush1.msra.mxu0 0.0
    %186 = vmatprep.subr.mxu0 0.0
    %187 = vmatpush1.msra.mxu0 0.0
    %188 = vmatprep.subr.mxu0 0.0
    %189 = vmatpush1.msra.mxu0 0.0
    %190 = vmatprep.subr.mxu0 0.0
    %191 = vmatpush1.msra.mxu0 0.0
    %192 = vmatprep.subr.mxu0 0.0
    %193 = vmatpush1.msra.mxu0 0.0
    %194 = vmatprep.subr.mxu0 0.0
    %195 = vmatpush1.msra.mxu0 0.0
    %196 = vmatprep.subr.mxu0 0.0
    %197 = vmatpush1.msra.mxu0 0.0
    %198 = vmatprep.subr.mxu0 0.0
    %199 = vmatpush1.msra.mxu0 0.0
    %200 = vmatprep.subr.mxu0 0.0
    %201 = vmatpush1.msra.mxu0 0.0
    %202 = vmatprep.subr.mxu0 0.0
    %203 = vmatpush1.msra.mxu0 0.0
    %204 = vmatprep.subr.mxu0 0.0
    %205 = vmatpush1.msra.mxu0 0.0
    %206 = vmatprep.mubr.f32.mxu0 0.0
    %207 = vmatmul.mubr.f32.gmra.mrb[0].mxu0 %v140
    %v208 = vpop.f32.mrb[0].mxu0
    %v209 = vadd.f32 %v136, %v208
    %v210 = vpop.f32.mrb[0].mxu0
    %211 = vdwg.mxu0
    %v212 = vld [vmem:[%s4] sm:$0x1]
    %v214 = vlaneseq
    %v215 = vshrl.u32 %v214, 7
    %v216 = vsub.s32 0, %v215
    %v217 = vrot.slane %v212, %v216
    %v219 = vmul.f32 %v209, %v217
    %v220 = vld [vmem:[%s5] sm:$0x1]
    %v222 = vlaneseq
    %v223 = vshrl.u32 %v222, 7
    %v224 = vsub.s32 0, %v223
    %v225 = vrot.slane %v220, %v224
    %v227 = vadd.f32 %v219, %v225
    %228 = vst [vmem:[#allocation2] sm:$0x3] %v227
    // Predicated region
    $region26: #{resnet_gcn_forward.17} parent=1 // pred_check
      _
    $region27: #{resnet_gcn_forward.17} parent=1 // pred_check_branch
      %230 = sbr.rel (0) target = $region29
    $region28: #{resnet_gcn_forward.17} parent=1 // pred_region
      %s232 = ssub.s32 32, 32
      %233 = vsyncadd [#allocation3], %s232
      %s235 = sshll.u32 [#allocation2], 4
      %s236 = int_to_ptr.vmem [resolvable:$true] %s235
      %238 = dma.vmem_to_hbm [thread:$0]  %s236, 32, %s6, [#allocation3]
    $region29: #{resnet_gcn_forward.17} parent=1 // pred_fallthru
      _
    // Predicated region
    $region30: #{resnet_gcn_forward.17} parent=1 // pred_check
      _
    $region31: #{resnet_gcn_forward.17} parent=1 // pred_check_branch
      %240 = sbr.rel (0) target = $region33
    $region32: #{resnet_gcn_forward.17} parent=1 // pred_region
      %241 = dma.done [#allocation3], 32
    $region33: #{resnet_gcn_forward.17} parent=1 // pred_fallthru
      _
    %242 = vsyncpa [#allocation3], 1

</llo_original>
